<compile_context>
chip_gen: v6e
topology: v6e:2x2x1
jax: 0.10.0
libtpu: 0.0.40
codegen_flags: <defaults>
</compile_context>

<pallas_src>
import functools
import math

import jax
import jax.numpy as jnp
import numpy as np
from jax.experimental import pallas as pl
from jax.experimental.pallas import tpu as pltpu


HEAD_W = 128   # lane-dense width for fused output head slabs


# ----------------------------------------------------------------------------
# in-kernel helpers (bf16 MXU operands, f32 accumulation)
# ----------------------------------------------------------------------------

def _dot(a, b):
    return jnp.dot(a.astype(jnp.bfloat16), b.astype(jnp.bfloat16),
                   preferred_element_type=jnp.float32)


def _dot_nt(a, b):
    """a @ b.T without an explicit transpose (contract last dims)."""
    return jax.lax.dot_general(a.astype(jnp.bfloat16), b.astype(jnp.bfloat16),
                               (((1,), (1,)), ((), ())),
                               preferred_element_type=jnp.float32)


def _softmax_rows(s):
    s = s - jnp.max(s, axis=-1, keepdims=True)
    e = jnp.exp(s)
    return e * pl.reciprocal(jnp.sum(e, axis=-1, keepdims=True), approx=True)


# ----------------------------------------------------------------------------
# Kernel A: embeddings -> text encoder / speaker / spk_emo_proj / audio seq2seq
#           / fused logit+emotion head / merge net / decoder key projection
# ----------------------------------------------------------------------------

def _front_kernel(q_emb_ref, mel_ref, emo_ref, mlen_ref,
                  te_w_ref, te_b_ref,
                  spk_w_ref, spk_b_ref,
                  w1e_ref, w1s_ref, b1_ref, w2_ref, b2_ref,
                  qw_ref, qb_ref, kw_ref, kb_ref,
                  owq_ref, owc_ref, ob_ref,
                  hw_ref, hb_ref,
                  mg_w_ref, mg_b_ref,
                  dkh_ref, dkc_ref, dkb_ref,
                  text_hid_ref, full_ref, head_ref, align_ref, deck_ref,
                  *, input_text):
    f32 = jnp.float32

    q_emb = q_emb_ref[...]                    # (Tq, E) = [sos_emb; text_emb]
    mel = mel_ref[...]                        # (Tm, n_mel), feature-last
    emo = emo_ref[...]                        # (1, Ee)
    mlen = mlen_ref[...]                      # (1, 1) int32
    Tm = mel.shape[0]

    # --- TODO(synk): TextEncoder (conv stack + BLSTM) stand-in: per-step linear.
    text_emb = q_emb[1:, :]                                   # (T, E)
    text_hidden = jnp.tanh(_dot(text_emb, te_w_ref[...]) + te_b_ref[...])
    text_hid_ref[...] = text_hidden

    # --- TODO(synk): SpeakerEncoder (LSTM) stand-in: masked time-mean + linear.
    frame_mask = (jax.lax.broadcasted_iota(jnp.int32, (Tm, 1), 0)
                  < mlen).astype(f32)                          # (Tm, 1)
    mel_mean = (jnp.sum(mel * frame_mask, axis=0, keepdims=True)
                / mlen.astype(f32))                            # (1, n_mel)
    spk = jnp.tanh(_dot(mel_mean, spk_w_ref[...]) + spk_b_ref[...])   # (1, Ee)

    # --- spk_emo_proj: Linear->Tanh->Linear->Tanh, first layer split (no concat)
    h1 = jnp.tanh(_dot(emo, w1e_ref[...]) + _dot(spk, w1s_ref[...]) + b1_ref[...])
    combined = jnp.tanh(_dot(h1, w2_ref[...]) + b2_ref[...])          # (1, Ee)

    # --- TODO(synk): AudioSeq2seq stand-in: projections + masked dot attention.
    q_h = jnp.tanh(_dot(q_emb, qw_ref[...]) + qb_ref[...])            # (Tq, H)
    k_h = jnp.tanh(_dot(mel, kw_ref[...]) + kb_ref[...])              # (Tm, H)
    H = q_h.shape[-1]
    s = _dot_nt(q_h, k_h) * (1.0 / math.sqrt(H))                      # (Tq, Tm)
    key_mask = jax.lax.broadcasted_iota(jnp.int32, (1, Tm), 1) < mlen
    s = jnp.where(key_mask, s, -1e30)
    a = _softmax_rows(s)
    align_ref[...] = a
    ctx = _dot(a, k_h)                                                # (Tq, H)
    full = jnp.tanh(_dot(q_h, owq_ref[...]) + _dot(ctx, owc_ref[...]) + ob_ref[...])
    full_ref[...] = full

    # --- fused symbol-logit + emotion-classifier head: one 128-wide slab.
    head_ref[...] = _dot(full, hw_ref[...]) + hb_ref[...]

    # --- TODO(synk): MergeNet stand-in: per-step linear.
    merge_in = text_hidden if input_text else full[:-1, :]
    hidden = jnp.tanh(_dot(merge_in, mg_w_ref[...]) + mg_b_ref[...])  # (T, H)

    # --- decoder key projection; concat([hidden, combined]) @ W folded as
    #     hidden @ W_h + combined @ W_c (per-batch bias), no broadcast+concat.
    deck_ref[...] = jnp.tanh(_dot(hidden, dkh_ref[...])
                             + _dot(combined, dkc_ref[...]) + dkb_ref[...])


# ----------------------------------------------------------------------------
# Kernel B: decoder stand-in (attention + fused mel/stop heads) + postnet.
# Output is a single lane-dense slab: cols [0:Nm]=mel, [Nm:2Nm]=post, [2Nm]=stop.
# ----------------------------------------------------------------------------

def _decoder_kernel(mel_ref, deck_ref, tlen_ref,
                    dqw_ref, dqb_ref,
                    hq_ref, hc_ref, hb_ref,
                    pn_w1_ref, pn_b1_ref, pn_w2_ref, pn_b2_ref,
                    slab_ref, align_ref, *, n_mel):
    mel = mel_ref[...]                        # (Tm, n_mel)
    dec_k = deck_ref[...]                     # (T, H)
    tlen = tlen_ref[...]                      # (1, 1) int32
    T = dec_k.shape[0]

    # --- TODO(synk): Decoder (autoregressive attention decoder) stand-in.
    dec_q = jnp.tanh(_dot(mel, dqw_ref[...]) + dqb_ref[...])          # (Tm, H)
    H = dec_q.shape[-1]
    s = _dot_nt(dec_q, dec_k) * (1.0 / math.sqrt(H))                  # (Tm, T)
    key_mask = jax.lax.broadcasted_iota(jnp.int32, (1, T), 1) < tlen
    s = jnp.where(key_mask, s, -1e30)
    a = _softmax_rows(s)
    align_ref[...] = a
    ctx = _dot(a, dec_k)                                              # (Tm, H)

    # fused mel + stop heads; concat([dec_q, ctx]) @ W folded as two dots.
    heads = _dot(dec_q, hq_ref[...]) + _dot(ctx, hc_ref[...]) + hb_ref[...]  # (Tm,128)
    pred_mel = heads[:, :n_mel]                                       # (Tm, Nm)

    # --- TODO(synk): PostNet (5x Conv1d k=5 + BN) stand-in: residual frame MLP.
    pn = jnp.tanh(_dot(pred_mel, pn_w1_ref[...]) + pn_b1_ref[...])
    pn = _dot(pn, pn_w2_ref[...]) + pn_b2_ref[...]
    post = pred_mel + pn

    # assemble one lane-dense 128-wide slab and store unmasked.
    slab_ref[...] = jnp.concatenate([pred_mel, post, heads[:, 2 * n_mel:]], axis=-1)


# ----------------------------------------------------------------------------
# BlockSpec helpers
# ----------------------------------------------------------------------------

def _batch_block(shape):
    nd = len(shape)
    return pl.BlockSpec((None,) + tuple(shape[1:]),
                        lambda b, _n=nd: (b,) + (0,) * (_n - 1))


def _full_block(shape):
    nd = len(shape)
    return pl.BlockSpec(tuple(shape), lambda b, _n=nd: (0,) * _n)


# ----------------------------------------------------------------------------
# Parameters (deterministic synthetic init; shapes follow the module __init__)
# ----------------------------------------------------------------------------

class HParams:
    n_symbols = 40
    symbols_embedding_dim = 32
    emotion_embedding_dim = 16
    n_emotions = 4                 # len(hparams.emo_list)
    hidden_dim = 32                # encoder / merge / seq2seq hidden
    n_mel_channels = 16
    spemb_input = False
    emo_inference_weight = 1.0


def init_params(hp, key):
    ks = iter(jax.random.split(key, 40))
    p = {}

    def w(shape, scale=0.1):
        return jax.random.normal(next(ks), shape, jnp.float32) * scale

    V = hp.n_symbols + 1
    E = hp.symbols_embedding_dim
    Ee = hp.emotion_embedding_dim
    H = hp.hidden_dim
    Nm = hp.n_mel_channels

    std = math.sqrt(2.0 / (hp.n_symbols + E))
    val = math.sqrt(3.0) * std
    p["embedding"] = jax.random.uniform(next(ks), (V, E), jnp.float32, -val, val)

    # TODO(synk): emo_embedding is loaded from per-emotion .npy means in torch;
    # initialized randomly here (no checkpoint / file loads).
    p["emo_embedding"] = w((hp.n_emotions, Ee))

    p["sep_w1"], p["sep_b1"] = w((2 * Ee, Ee)), jnp.zeros((Ee,), jnp.float32)
    p["sep_w2"], p["sep_b2"] = w((Ee, Ee)), jnp.zeros((Ee,), jnp.float32)

    p["te_w"], p["te_b"] = w((E, H)), jnp.zeros((H,), jnp.float32)
    p["spk_w"], p["spk_b"] = w((Nm, Ee)), jnp.zeros((Ee,), jnp.float32)
    p["as_kw"], p["as_kb"] = w((Nm, H)), jnp.zeros((H,), jnp.float32)
    p["as_qw"], p["as_qb"] = w((E, H)), jnp.zeros((H,), jnp.float32)
    p["as_ow"], p["as_ob"] = w((2 * H, H)), jnp.zeros((H,), jnp.float32)
    p["as_lw"], p["as_lb"] = w((H, V)), jnp.zeros((V,), jnp.float32)
    p["ec_w"], p["ec_b"] = w((H, hp.n_emotions)), jnp.zeros((hp.n_emotions,), jnp.float32)
    p["mg_w"], p["mg_b"] = w((H, H)), jnp.zeros((H,), jnp.float32)
    p["dec_qw"], p["dec_qb"] = w((Nm, H)), jnp.zeros((H,), jnp.float32)
    p["dec_kw"], p["dec_kb"] = w((H + Ee, H)), jnp.zeros((H,), jnp.float32)
    p["dec_mw"], p["dec_mb"] = w((2 * H, Nm)), jnp.zeros((Nm,), jnp.float32)
    p["dec_sw"], p["dec_sb"] = w((2 * H, 1)), jnp.zeros((1,), jnp.float32)
    p["pn_w1"], p["pn_b1"] = w((Nm, Nm)), jnp.zeros((Nm,), jnp.float32)
    p["pn_w2"], p["pn_b2"] = w((Nm, Nm)), jnp.zeros((Nm,), jnp.float32)
    return p


def prepare_params(p, hp):
    """Split concat weights, pack fused lane-dense heads, cast MXU weights to bf16."""
    bf = jnp.bfloat16
    V = hp.n_symbols + 1
    Ee = hp.emotion_embedding_dim
    H = hp.hidden_dim
    Nm = hp.n_mel_channels

    def b_row(b):
        return jnp.asarray(b, jnp.float32).reshape(1, -1)

    f = {}
    f["embedding"] = p["embedding"]
    f["emo_embedding"] = p["emo_embedding"]

    f["te_w"], f["te_b"] = p["te_w"].astype(bf), b_row(p["te_b"])
    f["spk_w"], f["spk_b"] = p["spk_w"].astype(bf), b_row(p["spk_b"])

    f["sep_w1_emo"] = p["sep_w1"][:Ee].astype(bf)
    f["sep_w1_spk"] = p["sep_w1"][Ee:].astype(bf)
    f["sep_b1"] = b_row(p["sep_b1"])
    f["sep_w2"], f["sep_b2"] = p["sep_w2"].astype(bf), b_row(p["sep_b2"])

    f["as_qw"], f["as_qb"] = p["as_qw"].astype(bf), b_row(p["as_qb"])
    f["as_kw"], f["as_kb"] = p["as_kw"].astype(bf), b_row(p["as_kb"])
    f["as_ow_q"] = p["as_ow"][:H].astype(bf)
    f["as_ow_c"] = p["as_ow"][H:].astype(bf)
    f["as_ob"] = b_row(p["as_ob"])

    # fused logit (V) + emotion-classifier (n_emotions) head, padded to 128 lanes
    head_w = jnp.zeros((H, HEAD_W), jnp.float32)
    head_w = head_w.at[:, :V].set(p["as_lw"])
    head_w = head_w.at[:, V:V + hp.n_emotions].set(p["ec_w"])
    head_b = jnp.zeros((1, HEAD_W), jnp.float32)
    head_b = head_b.at[0, :V].set(p["as_lb"])
    head_b = head_b.at[0, V:V + hp.n_emotions].set(p["ec_b"])
    f["head_w"], f["head_b"] = head_w.astype(bf), head_b

    f["mg_w"], f["mg_b"] = p["mg_w"].astype(bf), b_row(p["mg_b"])
    f["dec_kw_h"] = p["dec_kw"][:H].astype(bf)
    f["dec_kw_c"] = p["dec_kw"][H:].astype(bf)
    f["dec_kb"] = b_row(p["dec_kb"])

    f["dec_qw"], f["dec_qb"] = p["dec_qw"].astype(bf), b_row(p["dec_qb"])

    # fused mel (Nm) + stop (1) head; split into dec_q part and ctx part; pad to 128
    dec_hq = jnp.zeros((H, HEAD_W), jnp.float32)
    dec_hc = jnp.zeros((H, HEAD_W), jnp.float32)
    dec_hq = dec_hq.at[:, :Nm].set(p["dec_mw"][:H])
    dec_hc = dec_hc.at[:, :Nm].set(p["dec_mw"][H:])
    dec_hq = dec_hq.at[:, 2 * Nm:2 * Nm + 1].set(p["dec_sw"][:H])
    dec_hc = dec_hc.at[:, 2 * Nm:2 * Nm + 1].set(p["dec_sw"][H:])
    dec_hb = jnp.zeros((1, HEAD_W), jnp.float32)
    dec_hb = dec_hb.at[0, :Nm].set(p["dec_mb"])
    dec_hb = dec_hb.at[0, 2 * Nm].set(p["dec_sb"][0])
    f["dec_head_q"], f["dec_head_c"], f["dec_head_b"] = (
        dec_hq.astype(bf), dec_hc.astype(bf), dec_hb)

    f["pn_w1"], f["pn_b1"] = p["pn_w1"].astype(bf), b_row(p["pn_b1"])
    f["pn_w2"], f["pn_b2"] = p["pn_w2"].astype(bf), b_row(p["pn_b2"])
    return f


# ----------------------------------------------------------------------------
# Parrot.forward
# ----------------------------------------------------------------------------

def parrot_forward(params, hp, inputs, input_text=True):
    text_input_padded, mel_padded, text_lengths, mel_lengths, emotion_id = inputs
    B, T_text = text_input_padded.shape
    _, n_mel, T_mel = mel_padded.shape
    V = hp.n_symbols + 1
    E = hp.symbols_embedding_dim
    Ee = hp.emotion_embedding_dim
    H = hp.hidden_dim
    sos = hp.n_symbols
    Tq = T_text + 1

    # --- embedding lookups: tiny gathers, done in XLA (frees the MXU) ---------
    emb = params["embedding"]
    text_emb = jnp.take(emb, text_input_padded, axis=0)                 # (B,T,E)
    start_emb = jnp.broadcast_to(emb[sos][None, None, :], (B, 1, E))    # (B,1,E)
    queries = jnp.concatenate([start_emb, text_emb], axis=1)            # (B,Tq,E)
    emotion_embedding = jnp.take(params["emo_embedding"], emotion_id, axis=0)

    # feature-last mel once; all kernels stay feature-last until final outputs
    mel_t = jnp.transpose(mel_padded, (0, 2, 1))                        # (B,Tm,n_mel)
    emo3 = emotion_embedding.reshape(B, 1, Ee).astype(jnp.float32)
    mlen3 = mel_lengths.reshape(B, 1, 1).astype(jnp.int32)
    tlen3 = text_lengths.reshape(B, 1, 1).astype(jnp.int32)

    # NOTE: spemb_input=False path -> audio_input is mel_padded (handled in-kernel).

    # --- Kernel A: encoder + seq2seq + heads + merge + decoder keys -----------
    weights_a = [
        params["te_w"], params["te_b"],
        params["spk_w"], params["spk_b"],
        params["sep_w1_emo"], params["sep_w1_spk"], params["sep_b1"],
        params["sep_w2"], params["sep_b2"],
        params["as_qw"], params["as_qb"], params["as_kw"], params["as_kb"],
        params["as_ow_q"], params["as_ow_c"], params["as_ob"],
        params["head_w"], params["head_b"],
        params["mg_w"], params["mg_b"],
        params["dec_kw_h"], params["dec_kw_c"], params["dec_kb"],
    ]
    out_shapes_a = (
        jax.ShapeDtypeStruct((B, T_text, H), jnp.float32),      # text_hidden
        jax.ShapeDtypeStruct((B, Tq, H), jnp.float32),          # seq2seq full
        jax.ShapeDtypeStruct((B, Tq, HEAD_W), jnp.float32),     # logits+emo slab
        jax.ShapeDtypeStruct((B, Tq, T_mel), jnp.float32),      # s2s alignments
        jax.ShapeDtypeStruct((B, T_text, H), jnp.float32),      # dec_k
    )
    text_hidden, s2s_full, head_slab, audio_seq2seq_alignments, dec_k = pl.pallas_call(
        functools.partial(_front_kernel, input_text=input_text),
        out_shape=out_shapes_a,
        grid=(B,),
        in_specs=([_batch_block(queries.shape), _batch_block(mel_t.shape),
                   _batch_block(emo3.shape), _batch_block(mlen3.shape)]
                  + [_full_block(w.shape) for w in weights_a]),
        out_specs=tuple(_batch_block(s.shape) for s in out_shapes_a),
        compiler_params=pltpu.CompilerParams(dimension_semantics=("parallel",)),
    )(queries, mel_t, emo3, mlen3, *weights_a)

    audio_seq2seq_hidden = s2s_full[:, :-1, :]                           # (B,T,H)
    audio_seq2seq_logit = head_slab[:, :, :V]                            # (B,Tq,V)
    emotion_logit_from_mel_hidden = head_slab[:, :-1, V:V + hp.n_emotions]

    # --- Kernel B: decoder + postnet ------------------------------------------
    weights_b = [
        params["dec_qw"], params["dec_qb"],
        params["dec_head_q"], params["dec_head_c"], params["dec_head_b"],
        params["pn_w1"], params["pn_b1"], params["pn_w2"], params["pn_b2"],
    ]
    out_shapes_b = (
        jax.ShapeDtypeStruct((B, T_mel, HEAD_W), jnp.float32),  # mel|post|stop slab
        jax.ShapeDtypeStruct((B, T_mel, T_text), jnp.float32),  # alignments
    )
    slab, alignments = pl.pallas_call(
        functools.partial(_decoder_kernel, n_mel=n_mel),
        out_shape=out_shapes_b,
        grid=(B,),
        in_specs=([_batch_block(mel_t.shape), _batch_block(dec_k.shape),
                   _batch_block(tlen3.shape)]
                  + [_full_block(w.shape) for w in weights_b]),
        out_specs=tuple(_batch_block(s.shape) for s in out_shapes_b),
        compiler_params=pltpu.CompilerParams(dimension_semantics=("parallel",)),
    )(mel_t, dec_k, tlen3, *weights_b)

    predicted_mel = jnp.transpose(slab[..., :n_mel], (0, 2, 1))          # (B,n_mel,Tm)
    post_output = jnp.transpose(slab[..., n_mel:2 * n_mel], (0, 2, 1))   # (B,n_mel,Tm)
    predicted_stop = slab[..., 2 * n_mel]                                # (B,Tm)

    return [predicted_mel, post_output, predicted_stop, alignments,
            text_hidden, audio_seq2seq_hidden, audio_seq2seq_logit,
            audio_seq2seq_alignments, emotion_logit_from_mel_hidden,
            text_lengths, mel_lengths]


# ----------------------------------------------------------------------------

if __name__ == "__main__":
    hp = HParams()
    key = jax.random.PRNGKey(0)
    k_txt, k_mel, k_emo, k_par = jax.random.split(key, 4)

    B, T_text, T_mel = 2, 8, 16
    text_input_padded = jax.random.randint(k_txt, (B, T_text), 0, hp.n_symbols,
                                           dtype=jnp.int32)
    mel_padded = jax.random.normal(k_mel, (B, hp.n_mel_channels, T_mel), jnp.float32)
    text_lengths = jnp.full((B,), T_text, dtype=jnp.int32)
    mel_lengths = jnp.full((B,), T_mel, dtype=jnp.int32)
    emotion_id = jax.random.randint(k_emo, (B,), 0, hp.n_emotions, dtype=jnp.int32)

    raw_params = init_params(hp, k_par)
    params = prepare_params(raw_params, hp)
    inputs = (text_input_padded, mel_padded, text_lengths, mel_lengths, emotion_id)

    outputs = parrot_forward(params, hp, inputs, input_text=True)
    outputs = jax.block_until_ready(outputs)

    # sanity on the shape contract
    assert outputs[0].shape == (B, hp.n_mel_channels, T_mel)          # predicted_mel
    assert outputs[1].shape == (B, hp.n_mel_channels, T_mel)          # post_output
    assert outputs[2].shape == (B, T_mel)                             # predicted_stop
    assert outputs[3].shape == (B, T_mel, T_text)                     # alignments
    assert outputs[4].shape == (B, T_text, hp.hidden_dim)             # text_hidden
    assert outputs[5].shape == (B, T_text, hp.hidden_dim)             # seq2seq hidden
    assert outputs[6].shape == (B, T_text + 1, hp.n_symbols + 1)      # seq2seq logit
    assert outputs[7].shape == (B, T_text + 1, T_mel)                 # seq2seq align
    assert outputs[8].shape == (B, T_text, hp.n_emotions)             # emotion logit
    assert all(jnp.all(jnp.isfinite(o)).item() for o in outputs[:9])

    print("KERNEL_OK")
</pallas_src>

<mosaic_0001>
module attributes {stable_mosaic.version = 11 : i64} {
  func.func @_front_kernel(%arg0: i32, %arg1: memref<1x9x32xf32, #tpu.memory_space<vmem>>, %arg2: memref<1x16x16xf32, #tpu.memory_space<vmem>>, %arg3: memref<1x1x16xf32, #tpu.memory_space<vmem>>, %arg4: memref<1x1x1xi32, #tpu.memory_space<vmem>>, %arg5: memref<32x32xbf16, #tpu.memory_space<vmem>>, %arg6: memref<1x32xf32, #tpu.memory_space<vmem>>, %arg7: memref<16x16xbf16, #tpu.memory_space<vmem>>, %arg8: memref<1x16xf32, #tpu.memory_space<vmem>>, %arg9: memref<16x16xbf16, #tpu.memory_space<vmem>>, %arg10: memref<16x16xbf16, #tpu.memory_space<vmem>>, %arg11: memref<1x16xf32, #tpu.memory_space<vmem>>, %arg12: memref<16x16xbf16, #tpu.memory_space<vmem>>, %arg13: memref<1x16xf32, #tpu.memory_space<vmem>>, %arg14: memref<32x32xbf16, #tpu.memory_space<vmem>>, %arg15: memref<1x32xf32, #tpu.memory_space<vmem>>, %arg16: memref<16x32xbf16, #tpu.memory_space<vmem>>, %arg17: memref<1x32xf32, #tpu.memory_space<vmem>>, %arg18: memref<32x32xbf16, #tpu.memory_space<vmem>>, %arg19: memref<32x32xbf16, #tpu.memory_space<vmem>>, %arg20: memref<1x32xf32, #tpu.memory_space<vmem>>, %arg21: memref<32x128xbf16, #tpu.memory_space<vmem>>, %arg22: memref<1x128xf32, #tpu.memory_space<vmem>>, %arg23: memref<32x32xbf16, #tpu.memory_space<vmem>>, %arg24: memref<1x32xf32, #tpu.memory_space<vmem>>, %arg25: memref<32x32xbf16, #tpu.memory_space<vmem>>, %arg26: memref<16x32xbf16, #tpu.memory_space<vmem>>, %arg27: memref<1x32xf32, #tpu.memory_space<vmem>>, %arg28: memref<1x8x32xf32, #tpu.memory_space<vmem>>, %arg29: memref<1x9x32xf32, #tpu.memory_space<vmem>>, %arg30: memref<1x9x128xf32, #tpu.memory_space<vmem>>, %arg31: memref<1x9x16xf32, #tpu.memory_space<vmem>>, %arg32: memref<1x8x32xf32, #tpu.memory_space<vmem>>) attributes {dimension_semantics = [#tpu.dimension_semantics<parallel>], iteration_bounds = array<i64: 2>, scalar_prefetch = 0 : i64, scratch_operands = 0 : i64, tpu.core_type = #tpu.core_type<tc>, window_params = [{transform_indices = @transform_0, window_bounds = array<i64: 1, 9, 32>}, {transform_indices = @transform_1, window_bounds = array<i64: 1, 16, 16>}, {transform_indices = @transform_2, window_bounds = array<i64: 1, 1, 16>}, {transform_indices = @transform_3, window_bounds = array<i64: 1, 1, 1>}, {pipeline_mode = #tpu.pipeline_mode<synchronous>, transform_indices = @transform_4, window_bounds = array<i64: 32, 32>}, {pipeline_mode = #tpu.pipeline_mode<synchronous>, transform_indices = @transform_5, window_bounds = array<i64: 1, 32>}, {pipeline_mode = #tpu.pipeline_mode<synchronous>, transform_indices = @transform_6, window_bounds = array<i64: 16, 16>}, {pipeline_mode = #tpu.pipeline_mode<synchronous>, transform_indices = @transform_7, window_bounds = array<i64: 1, 16>}, {pipeline_mode = #tpu.pipeline_mode<synchronous>, transform_indices = @transform_8, window_bounds = array<i64: 16, 16>}, {pipeline_mode = #tpu.pipeline_mode<synchronous>, transform_indices = @transform_9, window_bounds = array<i64: 16, 16>}, {pipeline_mode = #tpu.pipeline_mode<synchronous>, transform_indices = @transform_10, window_bounds = array<i64: 1, 16>}, {pipeline_mode = #tpu.pipeline_mode<synchronous>, transform_indices = @transform_11, window_bounds = array<i64: 16, 16>}, {pipeline_mode = #tpu.pipeline_mode<synchronous>, transform_indices = @transform_12, window_bounds = array<i64: 1, 16>}, {pipeline_mode = #tpu.pipeline_mode<synchronous>, transform_indices = @transform_13, window_bounds = array<i64: 32, 32>}, {pipeline_mode = #tpu.pipeline_mode<synchronous>, transform_indices = @transform_14, window_bounds = array<i64: 1, 32>}, {pipeline_mode = #tpu.pipeline_mode<synchronous>, transform_indices = @transform_15, window_bounds = array<i64: 16, 32>}, {pipeline_mode = #tpu.pipeline_mode<synchronous>, transform_indices = @transform_16, window_bounds = array<i64: 1, 32>}, {pipeline_mode = #tpu.pipeline_mode<synchronous>, transform_indices = @transform_17, window_bounds = array<i64: 32, 32>}, {pipeline_mode = #tpu.pipeline_mode<synchronous>, transform_indices = @transform_18, window_bounds = array<i64: 32, 32>}, {pipeline_mode = #tpu.pipeline_mode<synchronous>, transform_indices = @transform_19, window_bounds = array<i64: 1, 32>}, {pipeline_mode = #tpu.pipeline_mode<synchronous>, transform_indices = @transform_20, window_bounds = array<i64: 32, 128>}, {pipeline_mode = #tpu.pipeline_mode<synchronous>, transform_indices = @transform_21, window_bounds = array<i64: 1, 128>}, {pipeline_mode = #tpu.pipeline_mode<synchronous>, transform_indices = @transform_22, window_bounds = array<i64: 32, 32>}, {pipeline_mode = #tpu.pipeline_mode<synchronous>, transform_indices = @transform_23, window_bounds = array<i64: 1, 32>}, {pipeline_mode = #tpu.pipeline_mode<synchronous>, transform_indices = @transform_24, window_bounds = array<i64: 32, 32>}, {pipeline_mode = #tpu.pipeline_mode<synchronous>, transform_indices = @transform_25, window_bounds = array<i64: 16, 32>}, {pipeline_mode = #tpu.pipeline_mode<synchronous>, transform_indices = @transform_26, window_bounds = array<i64: 1, 32>}, {transform_indices = @transform_27, window_bounds = array<i64: 1, 8, 32>}, {transform_indices = @transform_28, window_bounds = array<i64: 1, 9, 32>}, {transform_indices = @transform_29, window_bounds = array<i64: 1, 9, 128>}, {transform_indices = @transform_30, window_bounds = array<i64: 1, 9, 16>}, {transform_indices = @transform_31, window_bounds = array<i64: 1, 8, 32>}]} {
    %c0 = arith.constant 0 : index
    %c0_0 = arith.constant 0 : index
    %c0_1 = arith.constant 0 : index
    %0 = vector.load %arg1[%c0, %c0_0, %c0_1] : memref<1x9x32xf32, #tpu.memory_space<vmem>>, vector<1x9x32xf32>
    %1 = vector.shape_cast %0 : vector<1x9x32xf32> to vector<9x32xf32>
    %c0_2 = arith.constant 0 : index
    %c0_3 = arith.constant 0 : index
    %c0_4 = arith.constant 0 : index
    %2 = vector.load %arg2[%c0_2, %c0_3, %c0_4] : memref<1x16x16xf32, #tpu.memory_space<vmem>>, vector<1x16x16xf32>
    %3 = vector.shape_cast %2 : vector<1x16x16xf32> to vector<16x16xf32>
    %c0_5 = arith.constant 0 : index
    %c0_6 = arith.constant 0 : index
    %c0_7 = arith.constant 0 : index
    %4 = vector.load %arg3[%c0_5, %c0_6, %c0_7] : memref<1x1x16xf32, #tpu.memory_space<vmem>>, vector<1x1x16xf32>
    %5 = vector.shape_cast %4 : vector<1x1x16xf32> to vector<1x16xf32>
    %c0_8 = arith.constant 0 : index
    %c0_9 = arith.constant 0 : index
    %c0_10 = arith.constant 0 : index
    %6 = vector.load %arg4[%c0_8, %c0_9, %c0_10] : memref<1x1x1xi32, #tpu.memory_space<vmem>>, vector<1x1x1xi32>
    %7 = vector.shape_cast %6 : vector<1x1x1xi32> to vector<1x1xi32>
    %8 = vector.extract_strided_slice %1 {offsets = [1, 0], sizes = [8, 32], strides = [1, 1]} : vector<9x32xf32> to vector<8x32xf32>
    %c0_11 = arith.constant 0 : index
    %c0_12 = arith.constant 0 : index
    %9 = vector.load %arg5[%c0_11, %c0_12] : memref<32x32xbf16, #tpu.memory_space<vmem>>, vector<32x32xbf16>
    %10 = arith.truncf %8 : vector<8x32xf32> to vector<8x32xbf16>
    %cst = arith.constant dense<0.000000e+00> : vector<8x32xf32>
    %11 = tpu.matmul %10, %9, %cst {dimension_numbers = #tpu.dot_dimension_numbers<[1], [0], [0], [1], [0, 0, 1, 1], [], []>} : vector<8x32xbf16>, vector<32x32xbf16>, vector<8x32xf32> -> vector<8x32xf32>
    %c0_13 = arith.constant 0 : index
    %c0_14 = arith.constant 0 : index
    %12 = vector.load %arg6[%c0_13, %c0_14] : memref<1x32xf32, #tpu.memory_space<vmem>>, vector<1x32xf32>
    %13 = vector.broadcast %12 : vector<1x32xf32> to vector<8x32xf32>
    %14 = arith.addf %11, %13 : vector<8x32xf32>
    %15 = math.tanh %14 : vector<8x32xf32>
    %c0_15 = arith.constant 0 : index
    %c0_16 = arith.constant 0 : index
    %c0_17 = arith.constant 0 : index
    %16 = vector.load %arg28[%c0_15, %c0_16, %c0_17] : memref<1x8x32xf32, #tpu.memory_space<vmem>>, vector<1x8x32xf32>
    %17 = vector.shape_cast %16 : vector<1x8x32xf32> to vector<8x32xf32>
    %18 = vector.shape_cast %15 : vector<8x32xf32> to vector<1x8x32xf32>
    tpu.vector_store %arg28[%c0_15, %c0_16, %c0_17], %18 {strides = array<i32>} : memref<1x8x32xf32, #tpu.memory_space<vmem>>, vector<1x8x32xf32>,
    %19 = tpu.iota {dimensions = array<i32: 0>} : vector<16x1xi32>
    %20 = vector.broadcast %7 : vector<1x1xi32> to vector<16x1xi32>
    %21 = arith.cmpi slt, %19, %20 : vector<16x1xi32>
    %22 = arith.extui %21 : vector<16x1xi1> to vector<16x1xi32>
    %23 = arith.sitofp %22 : vector<16x1xi32> to vector<16x1xf32>
    %24 = vector.broadcast %23 : vector<16x1xf32> to vector<16x16xf32>
    %25 = arith.mulf %3, %24 : vector<16x16xf32>
    %cst_18 = arith.constant dense<0.000000e+00> : vector<16xf32>
    %26 = vector.multi_reduction <add>, %25, %cst_18 [0] : vector<16x16xf32> to vector<16xf32>
    %27 = vector.shape_cast %26 : vector<16xf32> to vector<1x16xf32>
    %28 = arith.sitofp %7 : vector<1x1xi32> to vector<1x1xf32>
    %29 = vector.broadcast %28 : vector<1x1xf32> to vector<1x16xf32>
    %30 = arith.divf %27, %29 : vector<1x16xf32>
    %c0_19 = arith.constant 0 : index
    %c0_20 = arith.constant 0 : index
    %31 = vector.load %arg7[%c0_19, %c0_20] : memref<16x16xbf16, #tpu.memory_space<vmem>>, vector<16x16xbf16>
    %32 = arith.truncf %30 : vector<1x16xf32> to vector<1x16xbf16>
    %cst_21 = arith.constant dense<0.000000e+00> : vector<1x16xf32>
    %33 = tpu.matmul %32, %31, %cst_21 {dimension_numbers = #tpu.dot_dimension_numbers<[1], [0], [0], [1], [0, 0, 1, 1], [], []>} : vector<1x16xbf16>, vector<16x16xbf16>, vector<1x16xf32> -> vector<1x16xf32>
    %c0_22 = arith.constant 0 : index
    %c0_23 = arith.constant 0 : index
    %34 = vector.load %arg8[%c0_22, %c0_23] : memref<1x16xf32, #tpu.memory_space<vmem>>, vector<1x16xf32>
    %35 = arith.addf %33, %34 : vector<1x16xf32>
    %36 = math.tanh %35 : vector<1x16xf32>
    %c0_24 = arith.constant 0 : index
    %c0_25 = arith.constant 0 : index
    %37 = vector.load %arg9[%c0_24, %c0_25] : memref<16x16xbf16, #tpu.memory_space<vmem>>, vector<16x16xbf16>
    %38 = arith.truncf %5 : vector<1x16xf32> to vector<1x16xbf16>
    %cst_26 = arith.constant dense<0.000000e+00> : vector<1x16xf32>
    %39 = tpu.matmul %38, %37, %cst_26 {dimension_numbers = #tpu.dot_dimension_numbers<[1], [0], [0], [1], [0, 0, 1, 1], [], []>} : vector<1x16xbf16>, vector<16x16xbf16>, vector<1x16xf32> -> vector<1x16xf32>
    %c0_27 = arith.constant 0 : index
    %c0_28 = arith.constant 0 : index
    %40 = vector.load %arg10[%c0_27, %c0_28] : memref<16x16xbf16, #tpu.memory_space<vmem>>, vector<16x16xbf16>
    %41 = arith.truncf %36 : vector<1x16xf32> to vector<1x16xbf16>
    %cst_29 = arith.constant dense<0.000000e+00> : vector<1x16xf32>
    %42 = tpu.matmul %41, %40, %cst_29 {dimension_numbers = #tpu.dot_dimension_numbers<[1], [0], [0], [1], [0, 0, 1, 1], [], []>} : vector<1x16xbf16>, vector<16x16xbf16>, vector<1x16xf32> -> vector<1x16xf32>
    %43 = arith.addf %39, %42 : vector<1x16xf32>
    %c0_30 = arith.constant 0 : index
    %c0_31 = arith.constant 0 : index
    %44 = vector.load %arg11[%c0_30, %c0_31] : memref<1x16xf32, #tpu.memory_space<vmem>>, vector<1x16xf32>
    %45 = arith.addf %43, %44 : vector<1x16xf32>
    %46 = math.tanh %45 : vector<1x16xf32>
    %c0_32 = arith.constant 0 : index
    %c0_33 = arith.constant 0 : index
    %47 = vector.load %arg12[%c0_32, %c0_33] : memref<16x16xbf16, #tpu.memory_space<vmem>>, vector<16x16xbf16>
    %48 = arith.truncf %46 : vector<1x16xf32> to vector<1x16xbf16>
    %cst_34 = arith.constant dense<0.000000e+00> : vector<1x16xf32>
    %49 = tpu.matmul %48, %47, %cst_34 {dimension_numbers = #tpu.dot_dimension_numbers<[1], [0], [0], [1], [0, 0, 1, 1], [], []>} : vector<1x16xbf16>, vector<16x16xbf16>, vector<1x16xf32> -> vector<1x16xf32>
    %c0_35 = arith.constant 0 : index
    %c0_36 = arith.constant 0 : index
    %50 = vector.load %arg13[%c0_35, %c0_36] : memref<1x16xf32, #tpu.memory_space<vmem>>, vector<1x16xf32>
    %51 = arith.addf %49, %50 : vector<1x16xf32>
    %52 = math.tanh %51 : vector<1x16xf32>
    %c0_37 = arith.constant 0 : index
    %c0_38 = arith.constant 0 : index
    %53 = vector.load %arg14[%c0_37, %c0_38] : memref<32x32xbf16, #tpu.memory_space<vmem>>, vector<32x32xbf16>
    %54 = arith.truncf %1 : vector<9x32xf32> to vector<9x32xbf16>
    %cst_39 = arith.constant dense<0.000000e+00> : vector<9x32xf32>
    %55 = tpu.matmul %54, %53, %cst_39 {dimension_numbers = #tpu.dot_dimension_numbers<[1], [0], [0], [1], [0, 0, 1, 1], [], []>} : vector<9x32xbf16>, vector<32x32xbf16>, vector<9x32xf32> -> vector<9x32xf32>
    %c0_40 = arith.constant 0 : index
    %c0_41 = arith.constant 0 : index
    %56 = vector.load %arg15[%c0_40, %c0_41] : memref<1x32xf32, #tpu.memory_space<vmem>>, vector<1x32xf32>
    %57 = vector.broadcast %56 : vector<1x32xf32> to vector<9x32xf32>
    %58 = arith.addf %55, %57 : vector<9x32xf32>
    %59 = math.tanh %58 : vector<9x32xf32>
    %c0_42 = arith.constant 0 : index
    %c0_43 = arith.constant 0 : index
    %60 = vector.load %arg16[%c0_42, %c0_43] : memref<16x32xbf16, #tpu.memory_space<vmem>>, vector<16x32xbf16>
    %61 = arith.truncf %3 : vector<16x16xf32> to vector<16x16xbf16>
    %cst_44 = arith.constant dense<0.000000e+00> : vector<16x32xf32>
    %62 = tpu.matmul %61, %60, %cst_44 {dimension_numbers = #tpu.dot_dimension_numbers<[1], [0], [0], [1], [0, 0, 1, 1], [], []>} : vector<16x16xbf16>, vector<16x32xbf16>, vector<16x32xf32> -> vector<16x32xf32>
    %c0_45 = arith.constant 0 : index
    %c0_46 = arith.constant 0 : index
    %63 = vector.load %arg17[%c0_45, %c0_46] : memref<1x32xf32, #tpu.memory_space<vmem>>, vector<1x32xf32>
    %64 = vector.broadcast %63 : vector<1x32xf32> to vector<16x32xf32>
    %65 = arith.addf %62, %64 : vector<16x32xf32>
    %66 = math.tanh %65 : vector<16x32xf32>
    %67 = arith.truncf %59 : vector<9x32xf32> to vector<9x32xbf16>
    %68 = arith.truncf %66 : vector<16x32xf32> to vector<16x32xbf16>
    %cst_47 = arith.constant dense<0.000000e+00> : vector<9x16xf32>
    %69 = tpu.matmul %67, %68, %cst_47 {dimension_numbers = #tpu.dot_dimension_numbers<[1], [1], [0], [0], [0, 0, 1, 0], [], []>} : vector<9x32xbf16>, vector<16x32xbf16>, vector<9x16xf32> -> vector<9x16xf32>
    %cst_48 = arith.constant 0.176776692 : f32
    %70 = vector.broadcast %cst_48 : f32 to vector<9x16xf32>
    %71 = arith.mulf %69, %70 : vector<9x16xf32>
    %72 = tpu.iota {dimensions = array<i32: 1>} : vector<1x16xi32>
    %73 = vector.broadcast %7 : vector<1x1xi32> to vector<1x16xi32>
    %74 = arith.cmpi slt, %72, %73 : vector<1x16xi32>
    %cst_49 = arith.constant -1.000000e+30 : f32
    %75 = vector.shape_cast %74 : vector<1x16xi1> to vector<1x16xi1>
    %76 = vector.broadcast %75 : vector<1x16xi1> to vector<9x16xi1>
    %77 = vector.broadcast %cst_49 : f32 to vector<9x16xf32>
    %78 = arith.select %76, %71, %77 : vector<9x16xi1>, vector<9x16xf32>
    %cst_50 = arith.constant dense<0xFF800000> : vector<9xf32>
    %79 = vector.multi_reduction <maximumf>, %78, %cst_50 [1] : vector<9x16xf32> to vector<9xf32>
    %80 = vector.shape_cast %79 : vector<9xf32> to vector<9x1xf32>
    %81 = vector.broadcast %80 : vector<9x1xf32> to vector<9x16xf32>
    %82 = arith.subf %78, %81 : vector<9x16xf32>
    %83 = math.exp %82 : vector<9x16xf32>
    %cst_51 = arith.constant dense<0.000000e+00> : vector<9xf32>
    %84 = vector.multi_reduction <add>, %83, %cst_51 [1] : vector<9x16xf32> to vector<9xf32>
    %85 = vector.shape_cast %84 : vector<9xf32> to vector<9x1xf32>
    %86 = tpu.reciprocal %85 {approx = true} : vector<9x1xf32> -> vector<9x1xf32>
    %87 = vector.broadcast %86 : vector<9x1xf32> to vector<9x16xf32>
    %88 = arith.mulf %83, %87 : vector<9x16xf32>
    %c0_52 = arith.constant 0 : index
    %c0_53 = arith.constant 0 : index
    %c0_54 = arith.constant 0 : index
    %89 = vector.load %arg31[%c0_52, %c0_53, %c0_54] : memref<1x9x16xf32, #tpu.memory_space<vmem>>, vector<1x9x16xf32>
    %90 = vector.shape_cast %89 : vector<1x9x16xf32> to vector<9x16xf32>
    %91 = vector.shape_cast %88 : vector<9x16xf32> to vector<1x9x16xf32>
    tpu.vector_store %arg31[%c0_52, %c0_53, %c0_54], %91 {strides = array<i32>} : memref<1x9x16xf32, #tpu.memory_space<vmem>>, vector<1x9x16xf32>,
    %92 = arith.truncf %88 : vector<9x16xf32> to vector<9x16xbf16>
    %93 = arith.truncf %66 : vector<16x32xf32> to vector<16x32xbf16>
    %cst_55 = arith.constant dense<0.000000e+00> : vector<9x32xf32>
    %94 = tpu.matmul %92, %93, %cst_55 {dimension_numbers = #tpu.dot_dimension_numbers<[1], [0], [0], [1], [0, 0, 1, 1], [], []>} : vector<9x16xbf16>, vector<16x32xbf16>, vector<9x32xf32> -> vector<9x32xf32>
    %c0_56 = arith.constant 0 : index
    %c0_57 = arith.constant 0 : index
    %95 = vector.load %arg18[%c0_56, %c0_57] : memref<32x32xbf16, #tpu.memory_space<vmem>>, vector<32x32xbf16>
    %96 = arith.truncf %59 : vector<9x32xf32> to vector<9x32xbf16>
    %cst_58 = arith.constant dense<0.000000e+00> : vector<9x32xf32>
    %97 = tpu.matmul %96, %95, %cst_58 {dimension_numbers = #tpu.dot_dimension_numbers<[1], [0], [0], [1], [0, 0, 1, 1], [], []>} : vector<9x32xbf16>, vector<32x32xbf16>, vector<9x32xf32> -> vector<9x32xf32>
    %c0_59 = arith.constant 0 : index
    %c0_60 = arith.constant 0 : index
    %98 = vector.load %arg19[%c0_59, %c0_60] : memref<32x32xbf16, #tpu.memory_space<vmem>>, vector<32x32xbf16>
    %99 = arith.truncf %94 : vector<9x32xf32> to vector<9x32xbf16>
    %cst_61 = arith.constant dense<0.000000e+00> : vector<9x32xf32>
    %100 = tpu.matmul %99, %98, %cst_61 {dimension_numbers = #tpu.dot_dimension_numbers<[1], [0], [0], [1], [0, 0, 1, 1], [], []>} : vector<9x32xbf16>, vector<32x32xbf16>, vector<9x32xf32> -> vector<9x32xf32>
    %101 = arith.addf %97, %100 : vector<9x32xf32>
    %c0_62 = arith.constant 0 : index
    %c0_63 = arith.constant 0 : index
    %102 = vector.load %arg20[%c0_62, %c0_63] : memref<1x32xf32, #tpu.memory_space<vmem>>, vector<1x32xf32>
    %103 = vector.broadcast %102 : vector<1x32xf32> to vector<9x32xf32>
    %104 = arith.addf %101, %103 : vector<9x32xf32>
    %105 = math.tanh %104 : vector<9x32xf32>
    %c0_64 = arith.constant 0 : index
    %c0_65 = arith.constant 0 : index
    %c0_66 = arith.constant 0 : index
    %106 = vector.load %arg29[%c0_64, %c0_65, %c0_66] : memref<1x9x32xf32, #tpu.memory_space<vmem>>, vector<1x9x32xf32>
    %107 = vector.shape_cast %106 : vector<1x9x32xf32> to vector<9x32xf32>
    %108 = vector.shape_cast %105 : vector<9x32xf32> to vector<1x9x32xf32>
    tpu.vector_store %arg29[%c0_64, %c0_65, %c0_66], %108 {strides = array<i32>} : memref<1x9x32xf32, #tpu.memory_space<vmem>>, vector<1x9x32xf32>,
    %c0_67 = arith.constant 0 : index
    %c0_68 = arith.constant 0 : index
    %109 = vector.load %arg21[%c0_67, %c0_68] : memref<32x128xbf16, #tpu.memory_space<vmem>>, vector<32x128xbf16>
    %110 = arith.truncf %105 : vector<9x32xf32> to vector<9x32xbf16>
    %cst_69 = arith.constant dense<0.000000e+00> : vector<9x128xf32>
    %111 = tpu.matmul %110, %109, %cst_69 {dimension_numbers = #tpu.dot_dimension_numbers<[1], [0], [0], [1], [0, 0, 1, 1], [], []>} : vector<9x32xbf16>, vector<32x128xbf16>, vector<9x128xf32> -> vector<9x128xf32>
    %c0_70 = arith.constant 0 : index
    %c0_71 = arith.constant 0 : index
    %112 = vector.load %arg22[%c0_70, %c0_71] : memref<1x128xf32, #tpu.memory_space<vmem>>, vector<1x128xf32>
    %113 = vector.broadcast %112 : vector<1x128xf32> to vector<9x128xf32>
    %114 = arith.addf %111, %113 : vector<9x128xf32>
    %c0_72 = arith.constant 0 : index
    %c0_73 = arith.constant 0 : index
    %c0_74 = arith.constant 0 : index
    %115 = vector.load %arg30[%c0_72, %c0_73, %c0_74] : memref<1x9x128xf32, #tpu.memory_space<vmem>>, vector<1x9x128xf32>
    %116 = vector.shape_cast %115 : vector<1x9x128xf32> to vector<9x128xf32>
    %117 = vector.shape_cast %114 : vector<9x128xf32> to vector<1x9x128xf32>
    tpu.vector_store %arg30[%c0_72, %c0_73, %c0_74], %117 {strides = array<i32>} : memref<1x9x128xf32, #tpu.memory_space<vmem>>, vector<1x9x128xf32>,
    %c0_75 = arith.constant 0 : index
    %c0_76 = arith.constant 0 : index
    %118 = vector.load %arg23[%c0_75, %c0_76] : memref<32x32xbf16, #tpu.memory_space<vmem>>, vector<32x32xbf16>
    %119 = arith.truncf %15 : vector<8x32xf32> to vector<8x32xbf16>
    %cst_77 = arith.constant dense<0.000000e+00> : vector<8x32xf32>
    %120 = tpu.matmul %119, %118, %cst_77 {dimension_numbers = #tpu.dot_dimension_numbers<[1], [0], [0], [1], [0, 0, 1, 1], [], []>} : vector<8x32xbf16>, vector<32x32xbf16>, vector<8x32xf32> -> vector<8x32xf32>
    %c0_78 = arith.constant 0 : index
    %c0_79 = arith.constant 0 : index
    %121 = vector.load %arg24[%c0_78, %c0_79] : memref<1x32xf32, #tpu.memory_space<vmem>>, vector<1x32xf32>
    %122 = vector.broadcast %121 : vector<1x32xf32> to vector<8x32xf32>
    %123 = arith.addf %120, %122 : vector<8x32xf32>
    %124 = math.tanh %123 : vector<8x32xf32>
    %c0_80 = arith.constant 0 : index
    %c0_81 = arith.constant 0 : index
    %125 = vector.load %arg25[%c0_80, %c0_81] : memref<32x32xbf16, #tpu.memory_space<vmem>>, vector<32x32xbf16>
    %126 = arith.truncf %124 : vector<8x32xf32> to vector<8x32xbf16>
    %cst_82 = arith.constant dense<0.000000e+00> : vector<8x32xf32>
    %127 = tpu.matmul %126, %125, %cst_82 {dimension_numbers = #tpu.dot_dimension_numbers<[1], [0], [0], [1], [0, 0, 1, 1], [], []>} : vector<8x32xbf16>, vector<32x32xbf16>, vector<8x32xf32> -> vector<8x32xf32>
    %c0_83 = arith.constant 0 : index
    %c0_84 = arith.constant 0 : index
    %128 = vector.load %arg26[%c0_83, %c0_84] : memref<16x32xbf16, #tpu.memory_space<vmem>>, vector<16x32xbf16>
    %129 = arith.truncf %52 : vector<1x16xf32> to vector<1x16xbf16>
    %cst_85 = arith.constant dense<0.000000e+00> : vector<1x32xf32>
    %130 = tpu.matmul %129, %128, %cst_85 {dimension_numbers = #tpu.dot_dimension_numbers<[1], [0], [0], [1], [0, 0, 1, 1], [], []>} : vector<1x16xbf16>, vector<16x32xbf16>, vector<1x32xf32> -> vector<1x32xf32>
    %131 = vector.broadcast %130 : vector<1x32xf32> to vector<8x32xf32>
    %132 = arith.addf %127, %131 : vector<8x32xf32>
    %c0_86 = arith.constant 0 : index
    %c0_87 = arith.constant 0 : index
    %133 = vector.load %arg27[%c0_86, %c0_87] : memref<1x32xf32, #tpu.memory_space<vmem>>, vector<1x32xf32>
    %134 = vector.broadcast %133 : vector<1x32xf32> to vector<8x32xf32>
    %135 = arith.addf %132, %134 : vector<8x32xf32>
    %136 = math.tanh %135 : vector<8x32xf32>
    %c0_88 = arith.constant 0 : index
    %c0_89 = arith.constant 0 : index
    %c0_90 = arith.constant 0 : index
    %137 = vector.load %arg32[%c0_88, %c0_89, %c0_90] : memref<1x8x32xf32, #tpu.memory_space<vmem>>, vector<1x8x32xf32>
    %138 = vector.shape_cast %137 : vector<1x8x32xf32> to vector<8x32xf32>
    %139 = vector.shape_cast %136 : vector<8x32xf32> to vector<1x8x32xf32>
    tpu.vector_store %arg32[%c0_88, %c0_89, %c0_90], %139 {strides = array<i32>} : memref<1x8x32xf32, #tpu.memory_space<vmem>>, vector<1x8x32xf32>,
    return
  }
  func.func @transform_0(%arg0: i32) -> (i32, i32, i32) {
    %c0_i32 = arith.constant 0 : i32
    %c0_i32_0 = arith.constant 0 : i32
    %c0_i32_1 = arith.constant 0 : i32
    return %arg0, %c0_i32, %c0_i32_0 : i32, i32, i32
  }
  func.func @transform_1(%arg0: i32) -> (i32, i32, i32) {
    %c0_i32 = arith.constant 0 : i32
    %c0_i32_0 = arith.constant 0 : i32
    %c0_i32_1 = arith.constant 0 : i32
    return %arg0, %c0_i32, %c0_i32_0 : i32, i32, i32
  }
  func.func @transform_2(%arg0: i32) -> (i32, i32, i32) {
    %c0_i32 = arith.constant 0 : i32
    %c0_i32_0 = arith.constant 0 : i32
    %c0_i32_1 = arith.constant 0 : i32
    return %arg0, %c0_i32, %c0_i32_0 : i32, i32, i32
  }
  func.func @transform_3(%arg0: i32) -> (i32, i32, i32) {
    %c0_i32 = arith.constant 0 : i32
    %c0_i32_0 = arith.constant 0 : i32
    %c0_i32_1 = arith.constant 0 : i32
    return %arg0, %c0_i32, %c0_i32_0 : i32, i32, i32
  }
  func.func @transform_4(%arg0: i32) -> (i32, i32) {
    %c0_i32 = arith.constant 0 : i32
    %c0_i32_0 = arith.constant 0 : i32
    %c0_i32_1 = arith.constant 0 : i32
    return %c0_i32, %c0_i32_0 : i32, i32
  }
  func.func @transform_5(%arg0: i32) -> (i32, i32) {
    %c0_i32 = arith.constant 0 : i32
    %c0_i32_0 = arith.constant 0 : i32
    %c0_i32_1 = arith.constant 0 : i32
    return %c0_i32, %c0_i32_0 : i32, i32
  }
  func.func @transform_6(%arg0: i32) -> (i32, i32) {
    %c0_i32 = arith.constant 0 : i32
    %c0_i32_0 = arith.constant 0 : i32
    %c0_i32_1 = arith.constant 0 : i32
    return %c0_i32, %c0_i32_0 : i32, i32
  }
  func.func @transform_7(%arg0: i32) -> (i32, i32) {
    %c0_i32 = arith.constant 0 : i32
    %c0_i32_0 = arith.constant 0 : i32
    %c0_i32_1 = arith.constant 0 : i32
    return %c0_i32, %c0_i32_0 : i32, i32
  }
  func.func @transform_8(%arg0: i32) -> (i32, i32) {
    %c0_i32 = arith.constant 0 : i32
    %c0_i32_0 = arith.constant 0 : i32
    %c0_i32_1 = arith.constant 0 : i32
    return %c0_i32, %c0_i32_0 : i32, i32
  }
  func.func @transform_9(%arg0: i32) -> (i32, i32) {
    %c0_i32 = arith.constant 0 : i32
    %c0_i32_0 = arith.constant 0 : i32
    %c0_i32_1 = arith.constant 0 : i32
    return %c0_i32, %c0_i32_0 : i32, i32
  }
  func.func @transform_10(%arg0: i32) -> (i32, i32) {
    %c0_i32 = arith.constant 0 : i32
    %c0_i32_0 = arith.constant 0 : i32
    %c0_i32_1 = arith.constant 0 : i32
    return %c0_i32, %c0_i32_0 : i32, i32
  }
  func.func @transform_11(%arg0: i32) -> (i32, i32) {
    %c0_i32 = arith.constant 0 : i32
    %c0_i32_0 = arith.constant 0 : i32
    %c0_i32_1 = arith.constant 0 : i32
    return %c0_i32, %c0_i32_0 : i32, i32
  }
  func.func @transform_12(%arg0: i32) -> (i32, i32) {
    %c0_i32 = arith.constant 0 : i32
    %c0_i32_0 = arith.constant 0 : i32
    %c0_i32_1 = arith.constant 0 : i32
    return %c0_i32, %c0_i32_0 : i32, i32
  }
  func.func @transform_13(%arg0: i32) -> (i32, i32) {
    %c0_i32 = arith.constant 0 : i32
    %c0_i32_0 = arith.constant 0 : i32
    %c0_i32_1 = arith.constant 0 : i32
    return %c0_i32, %c0_i32_0 : i32, i32
  }
  func.func @transform_14(%arg0: i32) -> (i32, i32) {
    %c0_i32 = arith.constant 0 : i32
    %c0_i32_0 = arith.constant 0 : i32
    %c0_i32_1 = arith.constant 0 : i32
    return %c0_i32, %c0_i32_0 : i32, i32
  }
  func.func @transform_15(%arg0: i32) -> (i32, i32) {
    %c0_i32 = arith.constant 0 : i32
    %c0_i32_0 = arith.constant 0 : i32
    %c0_i32_1 = arith.constant 0 : i32
    return %c0_i32, %c0_i32_0 : i32, i32
  }
  func.func @transform_16(%arg0: i32) -> (i32, i32) {
    %c0_i32 = arith.constant 0 : i32
    %c0_i32_0 = arith.constant 0 : i32
    %c0_i32_1 = arith.constant 0 : i32
    return %c0_i32, %c0_i32_0 : i32, i32
  }
  func.func @transform_17(%arg0: i32) -> (i32, i32) {
    %c0_i32 = arith.constant 0 : i32
    %c0_i32_0 = arith.constant 0 : i32
    %c0_i32_1 = arith.constant 0 : i32
    return %c0_i32, %c0_i32_0 : i32, i32
  }
  func.func @transform_18(%arg0: i32) -> (i32, i32) {
    %c0_i32 = arith.constant 0 : i32
    %c0_i32_0 = arith.constant 0 : i32
    %c0_i32_1 = arith.constant 0 : i32
    return %c0_i32, %c0_i32_0 : i32, i32
  }
  func.func @transform_19(%arg0: i32) -> (i32, i32) {
    %c0_i32 = arith.constant 0 : i32
    %c0_i32_0 = arith.constant 0 : i32
    %c0_i32_1 = arith.constant 0 : i32
    return %c0_i32, %c0_i32_0 : i32, i32
  }
  func.func @transform_20(%arg0: i32) -> (i32, i32) {
    %c0_i32 = arith.constant 0 : i32
    %c0_i32_0 = arith.constant 0 : i32
    %c0_i32_1 = arith.constant 0 : i32
    return %c0_i32, %c0_i32_0 : i32, i32
  }
  func.func @transform_21(%arg0: i32) -> (i32, i32) {
    %c0_i32 = arith.constant 0 : i32
    %c0_i32_0 = arith.constant 0 : i32
    %c0_i32_1 = arith.constant 0 : i32
    return %c0_i32, %c0_i32_0 : i32, i32
  }
  func.func @transform_22(%arg0: i32) -> (i32, i32) {
    %c0_i32 = arith.constant 0 : i32
    %c0_i32_0 = arith.constant 0 : i32
    %c0_i32_1 = arith.constant 0 : i32
    return %c0_i32, %c0_i32_0 : i32, i32
  }
  func.func @transform_23(%arg0: i32) -> (i32, i32) {
    %c0_i32 = arith.constant 0 : i32
    %c0_i32_0 = arith.constant 0 : i32
    %c0_i32_1 = arith.constant 0 : i32
    return %c0_i32, %c0_i32_0 : i32, i32
  }
  func.func @transform_24(%arg0: i32) -> (i32, i32) {
    %c0_i32 = arith.constant 0 : i32
    %c0_i32_0 = arith.constant 0 : i32
    %c0_i32_1 = arith.constant 0 : i32
    return %c0_i32, %c0_i32_0 : i32, i32
  }
  func.func @transform_25(%arg0: i32) -> (i32, i32) {
    %c0_i32 = arith.constant 0 : i32
    %c0_i32_0 = arith.constant 0 : i32
    %c0_i32_1 = arith.constant 0 : i32
    return %c0_i32, %c0_i32_0 : i32, i32
  }
  func.func @transform_26(%arg0: i32) -> (i32, i32) {
    %c0_i32 = arith.constant 0 : i32
    %c0_i32_0 = arith.constant 0 : i32
    %c0_i32_1 = arith.constant 0 : i32
    return %c0_i32, %c0_i32_0 : i32, i32
  }
  func.func @transform_27(%arg0: i32) -> (i32, i32, i32) {
    %c0_i32 = arith.constant 0 : i32
    %c0_i32_0 = arith.constant 0 : i32
    %c0_i32_1 = arith.constant 0 : i32
    return %arg0, %c0_i32, %c0_i32_0 : i32, i32, i32
  }
  func.func @transform_28(%arg0: i32) -> (i32, i32, i32) {
    %c0_i32 = arith.constant 0 : i32
    %c0_i32_0 = arith.constant 0 : i32
    %c0_i32_1 = arith.constant 0 : i32
    return %arg0, %c0_i32, %c0_i32_0 : i32, i32, i32
  }
  func.func @transform_29(%arg0: i32) -> (i32, i32, i32) {
    %c0_i32 = arith.constant 0 : i32
    %c0_i32_0 = arith.constant 0 : i32
    %c0_i32_1 = arith.constant 0 : i32
    return %arg0, %c0_i32, %c0_i32_0 : i32, i32, i32
  }
  func.func @transform_30(%arg0: i32) -> (i32, i32, i32) {
    %c0_i32 = arith.constant 0 : i32
    %c0_i32_0 = arith.constant 0 : i32
    %c0_i32_1 = arith.constant 0 : i32
    return %arg0, %c0_i32, %c0_i32_0 : i32, i32, i32
  }
  func.func @transform_31(%arg0: i32) -> (i32, i32, i32) {
    %c0_i32 = arith.constant 0 : i32
    %c0_i32_0 = arith.constant 0 : i32
    %c0_i32_1 = arith.constant 0 : i32
    return %arg0, %c0_i32, %c0_i32_0 : i32, i32, i32
  }
}

</mosaic_0001>

<llo_original>
// kernel: tpu_custom_call.1
$region0: #{tpu_custom_call.1}
  #allocation0 [shape = 'u32[]', space=smem, size = 0x4, offset = 0x4, fixed_abs, tag = 'smem constant byte address 0x4 - core index']
  #allocation1 [shape = 'u32[144,128]{1,0:T(1,128)}', space=vmem, size = 0x12000, scoped, tag = 'internal scratch']
  %s0 = inlined_call_operand.smem [shape: u32[32], index: -1, kind: input, shape index: {}]
  %s1 = sld [smem:[%s0]]
  %s2 = scalar_lea.smem %s0, 1
  %s3 = sld [smem:[%s2]]
  %s4 = scalar_lea.smem %s0, 2
  %s5 = sld [smem:[%s4]]
  %s6 = scalar_lea.smem %s0, 3
  %s7 = sld [smem:[%s6]]
  %s8 = scalar_lea.smem %s0, 4
  %s9 = sld [smem:[%s8]]
  %s10 = scalar_lea.smem %s0, 5
  %s11 = sld [smem:[%s10]]
  %s12 = scalar_lea.smem %s0, 6
  %s13 = sld [smem:[%s12]]
  %s14 = scalar_lea.smem %s0, 7
  %s15 = sld [smem:[%s14]]
  %s16 = scalar_lea.smem %s0, 8
  %s17 = sld [smem:[%s16]]
  %s18 = scalar_lea.smem %s0, 9
  %s19 = sld [smem:[%s18]]
  %s20 = scalar_lea.smem %s0, 10
  %s21 = sld [smem:[%s20]]
  %s22 = scalar_lea.smem %s0, 11
  %s23 = sld [smem:[%s22]]
  %s24 = scalar_lea.smem %s0, 12
  %s25 = sld [smem:[%s24]]
  %s26 = scalar_lea.smem %s0, 13
  %s27 = sld [smem:[%s26]]
  %s28 = scalar_lea.smem %s0, 14
  %s29 = sld [smem:[%s28]]
  %s30 = scalar_lea.smem %s0, 15
  %s31 = sld [smem:[%s30]]
  %s32 = scalar_lea.smem %s0, 16
  %s33 = sld [smem:[%s32]]
  %s34 = scalar_lea.smem %s0, 17
  %s35 = sld [smem:[%s34]]
  %s36 = scalar_lea.smem %s0, 18
  %s37 = sld [smem:[%s36]]
  %s38 = scalar_lea.smem %s0, 19
  %s39 = sld [smem:[%s38]]
  %s40 = scalar_lea.smem %s0, 20
  %s41 = sld [smem:[%s40]]
  %s42 = scalar_lea.smem %s0, 21
  %s43 = sld [smem:[%s42]]
  %s44 = scalar_lea.smem %s0, 22
  %s45 = sld [smem:[%s44]]
  %s46 = scalar_lea.smem %s0, 23
  %s47 = sld [smem:[%s46]]
  %s48 = scalar_lea.smem %s0, 24
  %s49 = sld [smem:[%s48]]
  %s50 = scalar_lea.smem %s0, 25
  %s51 = sld [smem:[%s50]]
  %s52 = scalar_lea.smem %s0, 26
  %s53 = sld [smem:[%s52]]
  %s54 = scalar_lea.smem %s0, 27
  %s55 = sld [smem:[%s54]]
  %s56 = scalar_lea.smem %s0, 28
  %s57 = sld [smem:[%s56]]
  %s58 = scalar_lea.smem %s0, 29
  %s59 = sld [smem:[%s58]]
  %s60 = scalar_lea.smem %s0, 30
  %s61 = sld [smem:[%s60]]
  %s62 = scalar_lea.smem %s0, 31
  %s63 = sld [smem:[%s62]]
  %64 = xla_tuple %s55, %s57, %s59, %s61, %s63
  %s65 = sld [smem:[#allocation0]]
  $region249: #{tpu_custom_call.1} parent=0
    _
  %s67 = ssub.s32 1, %s65
  %s68 = scalar_select 0, %s67, %s65
  $region1: #{tpu_custom_call.1} parent=0
    #allocation2 [shape = 'u8[1024]{0}', space=vmem, size = 0x400, scoped, tag = 'input window, operand 2']
    #allocation3 [shape = 's32[2]{0}', space=sflag, size = 0x8, scoped, tag = 'scoped memory for tpu_custom_call.1']
    #allocation4 [shape = 's32[2]{0}', space=sflag, size = 0x8, scoped, tag = 'scoped memory for tpu_custom_call.1']
    #allocation5 [shape = 'u8[512]{0}', space=vmem, size = 0x400, scoped, tag = 'input window, operand 5, single buffered']
    #allocation6 [shape = 's32[1]{0}', space=sflag, size = 0x4, scoped, tag = 'scoped memory for tpu_custom_call.1']
    #allocation7 [shape = 'u8[4096]{0}', space=vmem, size = 0x1000, scoped, tag = 'input window, operand 6, single buffered']
    #allocation8 [shape = 'u8[512]{0}', space=vmem, size = 0x400, scoped, tag = 'input window, operand 7, single buffered']
    #allocation9 [shape = 's32[1]{0}', space=sflag, size = 0x4, scoped, tag = 'scoped memory for tpu_custom_call.1']
    #allocation10 [shape = 'u8[4096]{0}', space=vmem, size = 0x1000, scoped, tag = 'input window, operand 8, single buffered']
    #allocation11 [shape = 'u8[4096]{0}', space=vmem, size = 0x1000, scoped, tag = 'input window, operand 9, single buffered']
    #allocation12 [shape = 's32[1]{0}', space=sflag, size = 0x4, scoped, tag = 'scoped memory for tpu_custom_call.1']
    #allocation13 [shape = 'u8[512]{0}', space=vmem, size = 0x400, scoped, tag = 'input window, operand 10, single buffered']
    #allocation14 [shape = 'u8[4096]{0}', space=vmem, size = 0x1000, scoped, tag = 'input window, operand 11, single buffered']
    #allocation15 [shape = 's32[1]{0}', space=sflag, size = 0x4, scoped, tag = 'scoped memory for tpu_custom_call.1']
    #allocation16 [shape = 'u8[512]{0}', space=vmem, size = 0x400, scoped, tag = 'input window, operand 12, single buffered']
    #allocation17 [shape = 'u8[512]{0}', space=vmem, size = 0x400, scoped, tag = 'input window, operand 14, single buffered']
    #allocation18 [shape = 's32[1]{0}', space=sflag, size = 0x4, scoped, tag = 'scoped memory for tpu_custom_call.1']
    #allocation19 [shape = 'u8[4096]{0}', space=vmem, size = 0x1000, scoped, tag = 'input window, operand 15, single buffered']
    #allocation20 [shape = 'u8[512]{0}', space=vmem, size = 0x400, scoped, tag = 'input window, operand 16, single buffered']
    #allocation21 [shape = 's32[1]{0}', space=sflag, size = 0x4, scoped, tag = 'scoped memory for tpu_custom_call.1']
    #allocation22 [shape = 'u8[8192]{0}', space=vmem, size = 0x2000, scoped, tag = 'input window, operand 18, single buffered']
    #allocation23 [shape = 'u8[512]{0}', space=vmem, size = 0x400, scoped, tag = 'input window, operand 19, single buffered']
    #allocation24 [shape = 's32[1]{0}', space=sflag, size = 0x4, scoped, tag = 'scoped memory for tpu_custom_call.1']
    #allocation25 [shape = 'u8[8192]{0}', space=vmem, size = 0x2000, scoped, tag = 'input window, operand 20, single buffered']
    #allocation26 [shape = 'u8[512]{0}', space=vmem, size = 0x400, scoped, tag = 'input window, operand 21, single buffered']
    #allocation27 [shape = 's32[1]{0}', space=sflag, size = 0x4, scoped, tag = 'scoped memory for tpu_custom_call.1']
    #allocation28 [shape = 'u8[8192]{0}', space=vmem, size = 0x2000, scoped, tag = 'input window, operand 22, single buffered']
    #allocation29 [shape = 'u8[512]{0}', space=vmem, size = 0x400, scoped, tag = 'input window, operand 23, single buffered']
    #allocation30 [shape = 's32[1]{0}', space=sflag, size = 0x4, scoped, tag = 'scoped memory for tpu_custom_call.1']
    #allocation31 [shape = 'u8[4096]{0}', space=vmem, size = 0x1000, scoped, tag = 'input window, operand 25, single buffered']
    #allocation32 [shape = 'u8[8192]{0}', space=vmem, size = 0x2000, scoped, tag = 'output window, operand 0']
    #allocation33 [shape = 'u8[8192]{0}', space=vmem, size = 0x2000, scoped, tag = 'output window, operand 4']
    #allocation34 [shape = 's32[2]{0}', space=sflag, size = 0x8, scoped, tag = 'scoped memory for tpu_custom_call.1']
    %69 = vsyncpa [#allocation3], 0
    %s70 = scalar_lea.sflag [#allocation3], 1
    %71 = vsyncpa %s70, 0
    %72 = vsyncpa [#allocation6], 0
    %73 = vsyncpa [#allocation9], 0
    %74 = vsyncpa [#allocation12], 0
    %75 = vsyncpa [#allocation15], 0
    %76 = vsyncpa [#allocation18], 0
    %77 = vsyncpa [#allocation21], 0
    %78 = vsyncpa [#allocation24], 0
    %79 = vsyncpa [#allocation27], 0
    %80 = vsyncpa [#allocation30], 0
    %81 = vsyncpa [#allocation4], 0
    %s82 = scalar_lea.sflag [#allocation4], 1
    %83 = vsyncpa %s82, 0
    %84 = vsyncpa [#allocation34], 0
    %s85 = scalar_lea.sflag [#allocation34], 1
    %86 = vsyncpa %s85, 0
    loop: start=0, step=1, limit=4
    $region2: #{tpu_custom_call.1} parent=1 // loop_pre_header
      _
    $region3: #{tpu_custom_call.1} parent=1 // loop_header
      %s88 = sphi 0, %s92
      %p89 = scmp.ge.s32.totalorder %s88, 4
      %s98 = sphi 0, %s100
      %s101 = sphi 0, %s98
      %s102 = sphi 0, %s101
      %s118 = sphi 0, %s102
      %s124 = sphi 0, %s126
      %s127 = sphi 0, %s124
      %s128 = sphi 0, %s127
      %s144 = sphi 0, %s128
      %s150 = sphi 0, %s152
      %s153 = sphi 0, %s150
      %s154 = sphi 0, %s153
      %s170 = sphi 0, %s154
      %s176 = sphi 0, %s178
      %s179 = sphi 0, %s176
      %s180 = sphi 0, %s179
      %s196 = sphi 0, %s180
      %s200 = sphi 0, %s200
      %s202 = sphi 0, %s200
      %s203 = sphi 0, %s202
      %s217 = sphi 0, %s203
      %s221 = sphi 0, %s221
      %s223 = sphi 0, %s221
      %s224 = sphi 0, %s223
      %s238 = sphi 0, %s224
      %s242 = sphi 0, %s242
      %s244 = sphi 0, %s242
      %s245 = sphi 0, %s244
      %s259 = sphi 0, %s245
      %s263 = sphi 0, %s263
      %s265 = sphi 0, %s263
      %s266 = sphi 0, %s265
      %s280 = sphi 0, %s266
      %s284 = sphi 0, %s284
      %s286 = sphi 0, %s284
      %s287 = sphi 0, %s286
      %s301 = sphi 0, %s287
      %s305 = sphi 0, %s305
      %s307 = sphi 0, %s305
      %s308 = sphi 0, %s307
      %s322 = sphi 0, %s308
      %s326 = sphi 0, %s326
      %s328 = sphi 0, %s326
      %s329 = sphi 0, %s328
      %s343 = sphi 0, %s329
      %s347 = sphi 0, %s347
      %s349 = sphi 0, %s347
      %s350 = sphi 0, %s349
      %s364 = sphi 0, %s350
      %s368 = sphi 0, %s368
      %s370 = sphi 0, %s368
      %s371 = sphi 0, %s370
      %s385 = sphi 0, %s371
      %s389 = sphi 0, %s389
      %s391 = sphi 0, %s389
      %s392 = sphi 0, %s391
      %s406 = sphi 0, %s392
      %s410 = sphi 0, %s410
      %s412 = sphi 0, %s410
      %s413 = sphi 0, %s412
      %s427 = sphi 0, %s413
      %s431 = sphi 0, %s431
      %s433 = sphi 0, %s431
      %s434 = sphi 0, %s433
      %s448 = sphi 0, %s434
      %s452 = sphi 0, %s452
      %s454 = sphi 0, %s452
      %s455 = sphi 0, %s454
      %s469 = sphi 0, %s455
      %s473 = sphi 0, %s473
      %s475 = sphi 0, %s473
      %s476 = sphi 0, %s475
      %s490 = sphi 0, %s476
      %s494 = sphi 0, %s494
      %s496 = sphi 0, %s494
      %s497 = sphi 0, %s496
      %s511 = sphi 0, %s497
      %s515 = sphi 0, %s515
      %s517 = sphi 0, %s515
      %s518 = sphi 0, %s517
      %s532 = sphi 0, %s518
      %s536 = sphi 0, %s536
      %s538 = sphi 0, %s536
      %s539 = sphi 0, %s538
      %s553 = sphi 0, %s539
      %s557 = sphi 0, %s557
      %s559 = sphi 0, %s557
      %s560 = sphi 0, %s559
      %s574 = sphi 0, %s560
      %s578 = sphi 0, %s578
      %s580 = sphi 0, %s578
      %s581 = sphi 0, %s580
      %s595 = sphi 0, %s581
      %s599 = sphi 0, %s599
      %s601 = sphi 0, %s599
      %s602 = sphi 0, %s601
      %s616 = sphi 0, %s602
      %s620 = sphi 0, %s620
      %s622 = sphi 0, %s620
      %s623 = sphi 0, %s622
      %s637 = sphi 0, %s623
      %s641 = sphi 0, %s641
      %s643 = sphi 0, %s641
      %s644 = sphi 0, %s643
      %s658 = sphi 0, %s644
      %s662 = sphi 0, %s662
      %s664 = sphi 0, %s662
      %s665 = sphi 0, %s664
      %s679 = sphi 0, %s665
      %s685 = sphi 0, %s687
      %s688 = sphi 0, %s685
      %s689 = sphi 0, %s688
      %s705 = sphi 0, %s689
      %s711 = sphi 0, %s713
      %s714 = sphi 0, %s711
      %s715 = sphi 0, %s714
      %s731 = sphi 0, %s715
      %s737 = sphi 0, %s739
      %s740 = sphi 0, %s737
      %s741 = sphi 0, %s740
      %s757 = sphi 0, %s741
      %s763 = sphi 0, %s765
      %s766 = sphi 0, %s763
      %s767 = sphi 0, %s766
      %s783 = sphi 0, %s767
      %s789 = sphi 0, %s791
      %s792 = sphi 0, %s789
      %s793 = sphi 0, %s792
      %s809 = sphi 0, %s793
    $region4: #{tpu_custom_call.1} parent=1 // loop_header_branch
      %91 = sbr.rel (%p89) target = $region8
    $region5: #{tpu_custom_call.1} parent=1 // loop_body
      %s93 = ssub.s32 %s88, 1
      %s94 = ssub.s32 %s88, 2
      %s95 = sadd.s32 %s88, 1
      %s96 = ssub.s32 %s88, %s95
      %p97 = scmp.eq.s32.totalorder %s96, 0
      %s99 = sadd.s32 %s98, 1
      %s100 = scalar_select %p97, %s98, %s99
      %p103 = pneg %p97
      %p104 = scmp.eq.s32.totalorder %s88, 1
      %p105 = por %p103, %p104
      %p106 = scmp.ne.s32.totalorder %s98, %s101
      %p107 = scmp.eq.s32.totalorder %s88, 0
      %p108 = por %p106, %p107
      %p109 = scmp.ne.s32.totalorder %s98, %s101
      %p110 = scmp.eq.s32.totalorder %s93, 1
      %p111 = por %p109, %p110
      %p112 = scmp.ne.s32.totalorder %s101, %s102
      %p113 = scmp.eq.s32.totalorder %s93, 0
      %p114 = por %p112, %p113
      %p115 = scmp.ne.s32.totalorder %s101, %s102
      %p116 = scmp.eq.s32.totalorder %s94, 1
      %p117 = por %p115, %p116
      %p119 = scmp.ne.s32.totalorder %s102, %s118
      %p120 = scmp.eq.s32.totalorder %s94, 0
      %p121 = por %p119, %p120
      %s122 = ssub.s32 %s88, %s95
      %p123 = scmp.eq.s32.totalorder %s122, 0
      %s125 = sadd.s32 %s124, 1
      %s126 = scalar_select %p123, %s124, %s125
      %p129 = pneg %p123
      %p130 = scmp.eq.s32.totalorder %s88, 1
      %p131 = por %p129, %p130
      %p132 = scmp.ne.s32.totalorder %s124, %s127
      %p133 = scmp.eq.s32.totalorder %s88, 0
      %p134 = por %p132, %p133
      %p135 = scmp.ne.s32.totalorder %s124, %s127
      %p136 = scmp.eq.s32.totalorder %s93, 1
      %p137 = por %p135, %p136
      %p138 = scmp.ne.s32.totalorder %s127, %s128
      %p139 = scmp.eq.s32.totalorder %s93, 0
      %p140 = por %p138, %p139
      %p141 = scmp.ne.s32.totalorder %s127, %s128
      %p142 = scmp.eq.s32.totalorder %s94, 1
      %p143 = por %p141, %p142
      %p145 = scmp.ne.s32.totalorder %s128, %s144
      %p146 = scmp.eq.s32.totalorder %s94, 0
      %p147 = por %p145, %p146
      %s148 = ssub.s32 %s88, %s95
      %p149 = scmp.eq.s32.totalorder %s148, 0
      %s151 = sadd.s32 %s150, 1
      %s152 = scalar_select %p149, %s150, %s151
      %p155 = pneg %p149
      %p156 = scmp.eq.s32.totalorder %s88, 1
      %p157 = por %p155, %p156
      %p158 = scmp.ne.s32.totalorder %s150, %s153
      %p159 = scmp.eq.s32.totalorder %s88, 0
      %p160 = por %p158, %p159
      %p161 = scmp.ne.s32.totalorder %s150, %s153
      %p162 = scmp.eq.s32.totalorder %s93, 1
      %p163 = por %p161, %p162
      %p164 = scmp.ne.s32.totalorder %s153, %s154
      %p165 = scmp.eq.s32.totalorder %s93, 0
      %p166 = por %p164, %p165
      %p167 = scmp.ne.s32.totalorder %s153, %s154
      %p168 = scmp.eq.s32.totalorder %s94, 1
      %p169 = por %p167, %p168
      %p171 = scmp.ne.s32.totalorder %s154, %s170
      %p172 = scmp.eq.s32.totalorder %s94, 0
      %p173 = por %p171, %p172
      %s174 = ssub.s32 %s88, %s95
      %p175 = scmp.eq.s32.totalorder %s174, 0
      %s177 = sadd.s32 %s176, 1
      %s178 = scalar_select %p175, %s176, %s177
      %p181 = pneg %p175
      %p182 = scmp.eq.s32.totalorder %s88, 1
      %p183 = por %p181, %p182
      %p184 = scmp.ne.s32.totalorder %s176, %s179
      %p185 = scmp.eq.s32.totalorder %s88, 0
      %p186 = por %p184, %p185
      %p187 = scmp.ne.s32.totalorder %s176, %s179
      %p188 = scmp.eq.s32.totalorder %s93, 1
      %p189 = por %p187, %p188
      %p190 = scmp.ne.s32.totalorder %s179, %s180
      %p191 = scmp.eq.s32.totalorder %s93, 0
      %p192 = por %p190, %p191
      %p193 = scmp.ne.s32.totalorder %s179, %s180
      %p194 = scmp.eq.s32.totalorder %s94, 1
      %p195 = por %p193, %p194
      %p197 = scmp.ne.s32.totalorder %s180, %s196
      %p198 = scmp.eq.s32.totalorder %s94, 0
      %p199 = por %p197, %p198
      %s201 = sadd.s32 %s200, 1
      %p204 = scmp.eq.s32.totalorder %s88, 1
      %p205 = scmp.ne.s32.totalorder %s200, %s202
      %p206 = scmp.eq.s32.totalorder %s88, 0
      %p207 = por %p205, %p206
      %p208 = scmp.ne.s32.totalorder %s200, %s202
      %p209 = scmp.eq.s32.totalorder %s93, 1
      %p210 = por %p208, %p209
      %p211 = scmp.ne.s32.totalorder %s202, %s203
      %p212 = scmp.eq.s32.totalorder %s93, 0
      %p213 = por %p211, %p212
      %p214 = scmp.ne.s32.totalorder %s202, %s203
      %p215 = scmp.eq.s32.totalorder %s94, 1
      %p216 = por %p214, %p215
      %p218 = scmp.ne.s32.totalorder %s203, %s217
      %p219 = scmp.eq.s32.totalorder %s94, 0
      %p220 = por %p218, %p219
      %s222 = sadd.s32 %s221, 1
      %p225 = scmp.eq.s32.totalorder %s88, 1
      %p226 = scmp.ne.s32.totalorder %s221, %s223
      %p227 = scmp.eq.s32.totalorder %s88, 0
      %p228 = por %p226, %p227
      %p229 = scmp.ne.s32.totalorder %s221, %s223
      %p230 = scmp.eq.s32.totalorder %s93, 1
      %p231 = por %p229, %p230
      %p232 = scmp.ne.s32.totalorder %s223, %s224
      %p233 = scmp.eq.s32.totalorder %s93, 0
      %p234 = por %p232, %p233
      %p235 = scmp.ne.s32.totalorder %s223, %s224
      %p236 = scmp.eq.s32.totalorder %s94, 1
      %p237 = por %p235, %p236
      %p239 = scmp.ne.s32.totalorder %s224, %s238
      %p240 = scmp.eq.s32.totalorder %s94, 0
      %p241 = por %p239, %p240
      %s243 = sadd.s32 %s242, 1
      %p246 = scmp.eq.s32.totalorder %s88, 1
      %p247 = scmp.ne.s32.totalorder %s242, %s244
      %p248 = scmp.eq.s32.totalorder %s88, 0
      %p249 = por %p247, %p248
      %p250 = scmp.ne.s32.totalorder %s242, %s244
      %p251 = scmp.eq.s32.totalorder %s93, 1
      %p252 = por %p250, %p251
      %p253 = scmp.ne.s32.totalorder %s244, %s245
      %p254 = scmp.eq.s32.totalorder %s93, 0
      %p255 = por %p253, %p254
      %p256 = scmp.ne.s32.totalorder %s244, %s245
      %p257 = scmp.eq.s32.totalorder %s94, 1
      %p258 = por %p256, %p257
      %p260 = scmp.ne.s32.totalorder %s245, %s259
      %p261 = scmp.eq.s32.totalorder %s94, 0
      %p262 = por %p260, %p261
      %s264 = sadd.s32 %s263, 1
      %p267 = scmp.eq.s32.totalorder %s88, 1
      %p268 = scmp.ne.s32.totalorder %s263, %s265
      %p269 = scmp.eq.s32.totalorder %s88, 0
      %p270 = por %p268, %p269
      %p271 = scmp.ne.s32.totalorder %s263, %s265
      %p272 = scmp.eq.s32.totalorder %s93, 1
      %p273 = por %p271, %p272
      %p274 = scmp.ne.s32.totalorder %s265, %s266
      %p275 = scmp.eq.s32.totalorder %s93, 0
      %p276 = por %p274, %p275
      %p277 = scmp.ne.s32.totalorder %s265, %s266
      %p278 = scmp.eq.s32.totalorder %s94, 1
      %p279 = por %p277, %p278
      %p281 = scmp.ne.s32.totalorder %s266, %s280
      %p282 = scmp.eq.s32.totalorder %s94, 0
      %p283 = por %p281, %p282
      %s285 = sadd.s32 %s284, 1
      %p288 = scmp.eq.s32.totalorder %s88, 1
      %p289 = scmp.ne.s32.totalorder %s284, %s286
      %p290 = scmp.eq.s32.totalorder %s88, 0
      %p291 = por %p289, %p290
      %p292 = scmp.ne.s32.totalorder %s284, %s286
      %p293 = scmp.eq.s32.totalorder %s93, 1
      %p294 = por %p292, %p293
      %p295 = scmp.ne.s32.totalorder %s286, %s287
      %p296 = scmp.eq.s32.totalorder %s93, 0
      %p297 = por %p295, %p296
      %p298 = scmp.ne.s32.totalorder %s286, %s287
      %p299 = scmp.eq.s32.totalorder %s94, 1
      %p300 = por %p298, %p299
      %p302 = scmp.ne.s32.totalorder %s287, %s301
      %p303 = scmp.eq.s32.totalorder %s94, 0
      %p304 = por %p302, %p303
      %s306 = sadd.s32 %s305, 1
      %p309 = scmp.eq.s32.totalorder %s88, 1
      %p310 = scmp.ne.s32.totalorder %s305, %s307
      %p311 = scmp.eq.s32.totalorder %s88, 0
      %p312 = por %p310, %p311
      %p313 = scmp.ne.s32.totalorder %s305, %s307
      %p314 = scmp.eq.s32.totalorder %s93, 1
      %p315 = por %p313, %p314
      %p316 = scmp.ne.s32.totalorder %s307, %s308
      %p317 = scmp.eq.s32.totalorder %s93, 0
      %p318 = por %p316, %p317
      %p319 = scmp.ne.s32.totalorder %s307, %s308
      %p320 = scmp.eq.s32.totalorder %s94, 1
      %p321 = por %p319, %p320
      %p323 = scmp.ne.s32.totalorder %s308, %s322
      %p324 = scmp.eq.s32.totalorder %s94, 0
      %p325 = por %p323, %p324
      %s327 = sadd.s32 %s326, 1
      %p330 = scmp.eq.s32.totalorder %s88, 1
      %p331 = scmp.ne.s32.totalorder %s326, %s328
      %p332 = scmp.eq.s32.totalorder %s88, 0
      %p333 = por %p331, %p332
      %p334 = scmp.ne.s32.totalorder %s326, %s328
      %p335 = scmp.eq.s32.totalorder %s93, 1
      %p336 = por %p334, %p335
      %p337 = scmp.ne.s32.totalorder %s328, %s329
      %p338 = scmp.eq.s32.totalorder %s93, 0
      %p339 = por %p337, %p338
      %p340 = scmp.ne.s32.totalorder %s328, %s329
      %p341 = scmp.eq.s32.totalorder %s94, 1
      %p342 = por %p340, %p341
      %p344 = scmp.ne.s32.totalorder %s329, %s343
      %p345 = scmp.eq.s32.totalorder %s94, 0
      %p346 = por %p344, %p345
      %s348 = sadd.s32 %s347, 1
      %p351 = scmp.eq.s32.totalorder %s88, 1
      %p352 = scmp.ne.s32.totalorder %s347, %s349
      %p353 = scmp.eq.s32.totalorder %s88, 0
      %p354 = por %p352, %p353
      %p355 = scmp.ne.s32.totalorder %s347, %s349
      %p356 = scmp.eq.s32.totalorder %s93, 1
      %p357 = por %p355, %p356
      %p358 = scmp.ne.s32.totalorder %s349, %s350
      %p359 = scmp.eq.s32.totalorder %s93, 0
      %p360 = por %p358, %p359
      %p361 = scmp.ne.s32.totalorder %s349, %s350
      %p362 = scmp.eq.s32.totalorder %s94, 1
      %p363 = por %p361, %p362
      %p365 = scmp.ne.s32.totalorder %s350, %s364
      %p366 = scmp.eq.s32.totalorder %s94, 0
      %p367 = por %p365, %p366
      %s369 = sadd.s32 %s368, 1
      %p372 = scmp.eq.s32.totalorder %s88, 1
      %p373 = scmp.ne.s32.totalorder %s368, %s370
      %p374 = scmp.eq.s32.totalorder %s88, 0
      %p375 = por %p373, %p374
      %p376 = scmp.ne.s32.totalorder %s368, %s370
      %p377 = scmp.eq.s32.totalorder %s93, 1
      %p378 = por %p376, %p377
      %p379 = scmp.ne.s32.totalorder %s370, %s371
      %p380 = scmp.eq.s32.totalorder %s93, 0
      %p381 = por %p379, %p380
      %p382 = scmp.ne.s32.totalorder %s370, %s371
      %p383 = scmp.eq.s32.totalorder %s94, 1
      %p384 = por %p382, %p383
      %p386 = scmp.ne.s32.totalorder %s371, %s385
      %p387 = scmp.eq.s32.totalorder %s94, 0
      %p388 = por %p386, %p387
      %s390 = sadd.s32 %s389, 1
      %p393 = scmp.eq.s32.totalorder %s88, 1
      %p394 = scmp.ne.s32.totalorder %s389, %s391
      %p395 = scmp.eq.s32.totalorder %s88, 0
      %p396 = por %p394, %p395
      %p397 = scmp.ne.s32.totalorder %s389, %s391
      %p398 = scmp.eq.s32.totalorder %s93, 1
      %p399 = por %p397, %p398
      %p400 = scmp.ne.s32.totalorder %s391, %s392
      %p401 = scmp.eq.s32.totalorder %s93, 0
      %p402 = por %p400, %p401
      %p403 = scmp.ne.s32.totalorder %s391, %s392
      %p404 = scmp.eq.s32.totalorder %s94, 1
      %p405 = por %p403, %p404
      %p407 = scmp.ne.s32.totalorder %s392, %s406
      %p408 = scmp.eq.s32.totalorder %s94, 0
      %p409 = por %p407, %p408
      %s411 = sadd.s32 %s410, 1
      %p414 = scmp.eq.s32.totalorder %s88, 1
      %p415 = scmp.ne.s32.totalorder %s410, %s412
      %p416 = scmp.eq.s32.totalorder %s88, 0
      %p417 = por %p415, %p416
      %p418 = scmp.ne.s32.totalorder %s410, %s412
      %p419 = scmp.eq.s32.totalorder %s93, 1
      %p420 = por %p418, %p419
      %p421 = scmp.ne.s32.totalorder %s412, %s413
      %p422 = scmp.eq.s32.totalorder %s93, 0
      %p423 = por %p421, %p422
      %p424 = scmp.ne.s32.totalorder %s412, %s413
      %p425 = scmp.eq.s32.totalorder %s94, 1
      %p426 = por %p424, %p425
      %p428 = scmp.ne.s32.totalorder %s413, %s427
      %p429 = scmp.eq.s32.totalorder %s94, 0
      %p430 = por %p428, %p429
      %s432 = sadd.s32 %s431, 1
      %p435 = scmp.eq.s32.totalorder %s88, 1
      %p436 = scmp.ne.s32.totalorder %s431, %s433
      %p437 = scmp.eq.s32.totalorder %s88, 0
      %p438 = por %p436, %p437
      %p439 = scmp.ne.s32.totalorder %s431, %s433
      %p440 = scmp.eq.s32.totalorder %s93, 1
      %p441 = por %p439, %p440
      %p442 = scmp.ne.s32.totalorder %s433, %s434
      %p443 = scmp.eq.s32.totalorder %s93, 0
      %p444 = por %p442, %p443
      %p445 = scmp.ne.s32.totalorder %s433, %s434
      %p446 = scmp.eq.s32.totalorder %s94, 1
      %p447 = por %p445, %p446
      %p449 = scmp.ne.s32.totalorder %s434, %s448
      %p450 = scmp.eq.s32.totalorder %s94, 0
      %p451 = por %p449, %p450
      %s453 = sadd.s32 %s452, 1
      %p456 = scmp.eq.s32.totalorder %s88, 1
      %p457 = scmp.ne.s32.totalorder %s452, %s454
      %p458 = scmp.eq.s32.totalorder %s88, 0
      %p459 = por %p457, %p458
      %p460 = scmp.ne.s32.totalorder %s452, %s454
      %p461 = scmp.eq.s32.totalorder %s93, 1
      %p462 = por %p460, %p461
      %p463 = scmp.ne.s32.totalorder %s454, %s455
      %p464 = scmp.eq.s32.totalorder %s93, 0
      %p465 = por %p463, %p464
      %p466 = scmp.ne.s32.totalorder %s454, %s455
      %p467 = scmp.eq.s32.totalorder %s94, 1
      %p468 = por %p466, %p467
      %p470 = scmp.ne.s32.totalorder %s455, %s469
      %p471 = scmp.eq.s32.totalorder %s94, 0
      %p472 = por %p470, %p471
      %s474 = sadd.s32 %s473, 1
      %p477 = scmp.eq.s32.totalorder %s88, 1
      %p478 = scmp.ne.s32.totalorder %s473, %s475
      %p479 = scmp.eq.s32.totalorder %s88, 0
      %p480 = por %p478, %p479
      %p481 = scmp.ne.s32.totalorder %s473, %s475
      %p482 = scmp.eq.s32.totalorder %s93, 1
      %p483 = por %p481, %p482
      %p484 = scmp.ne.s32.totalorder %s475, %s476
      %p485 = scmp.eq.s32.totalorder %s93, 0
      %p486 = por %p484, %p485
      %p487 = scmp.ne.s32.totalorder %s475, %s476
      %p488 = scmp.eq.s32.totalorder %s94, 1
      %p489 = por %p487, %p488
      %p491 = scmp.ne.s32.totalorder %s476, %s490
      %p492 = scmp.eq.s32.totalorder %s94, 0
      %p493 = por %p491, %p492
      %s495 = sadd.s32 %s494, 1
      %p498 = scmp.eq.s32.totalorder %s88, 1
      %p499 = scmp.ne.s32.totalorder %s494, %s496
      %p500 = scmp.eq.s32.totalorder %s88, 0
      %p501 = por %p499, %p500
      %p502 = scmp.ne.s32.totalorder %s494, %s496
      %p503 = scmp.eq.s32.totalorder %s93, 1
      %p504 = por %p502, %p503
      %p505 = scmp.ne.s32.totalorder %s496, %s497
      %p506 = scmp.eq.s32.totalorder %s93, 0
      %p507 = por %p505, %p506
      %p508 = scmp.ne.s32.totalorder %s496, %s497
      %p509 = scmp.eq.s32.totalorder %s94, 1
      %p510 = por %p508, %p509
      %p512 = scmp.ne.s32.totalorder %s497, %s511
      %p513 = scmp.eq.s32.totalorder %s94, 0
      %p514 = por %p512, %p513
      %s516 = sadd.s32 %s515, 1
      %p519 = scmp.eq.s32.totalorder %s88, 1
      %p520 = scmp.ne.s32.totalorder %s515, %s517
      %p521 = scmp.eq.s32.totalorder %s88, 0
      %p522 = por %p520, %p521
      %p523 = scmp.ne.s32.totalorder %s515, %s517
      %p524 = scmp.eq.s32.totalorder %s93, 1
      %p525 = por %p523, %p524
      %p526 = scmp.ne.s32.totalorder %s517, %s518
      %p527 = scmp.eq.s32.totalorder %s93, 0
      %p528 = por %p526, %p527
      %p529 = scmp.ne.s32.totalorder %s517, %s518
      %p530 = scmp.eq.s32.totalorder %s94, 1
      %p531 = por %p529, %p530
      %p533 = scmp.ne.s32.totalorder %s518, %s532
      %p534 = scmp.eq.s32.totalorder %s94, 0
      %p535 = por %p533, %p534
      %s537 = sadd.s32 %s536, 1
      %p540 = scmp.eq.s32.totalorder %s88, 1
      %p541 = scmp.ne.s32.totalorder %s536, %s538
      %p542 = scmp.eq.s32.totalorder %s88, 0
      %p543 = por %p541, %p542
      %p544 = scmp.ne.s32.totalorder %s536, %s538
      %p545 = scmp.eq.s32.totalorder %s93, 1
      %p546 = por %p544, %p545
      %p547 = scmp.ne.s32.totalorder %s538, %s539
      %p548 = scmp.eq.s32.totalorder %s93, 0
      %p549 = por %p547, %p548
      %p550 = scmp.ne.s32.totalorder %s538, %s539
      %p551 = scmp.eq.s32.totalorder %s94, 1
      %p552 = por %p550, %p551
      %p554 = scmp.ne.s32.totalorder %s539, %s553
      %p555 = scmp.eq.s32.totalorder %s94, 0
      %p556 = por %p554, %p555
      %s558 = sadd.s32 %s557, 1
      %p561 = scmp.eq.s32.totalorder %s88, 1
      %p562 = scmp.ne.s32.totalorder %s557, %s559
      %p563 = scmp.eq.s32.totalorder %s88, 0
      %p564 = por %p562, %p563
      %p565 = scmp.ne.s32.totalorder %s557, %s559
      %p566 = scmp.eq.s32.totalorder %s93, 1
      %p567 = por %p565, %p566
      %p568 = scmp.ne.s32.totalorder %s559, %s560
      %p569 = scmp.eq.s32.totalorder %s93, 0
      %p570 = por %p568, %p569
      %p571 = scmp.ne.s32.totalorder %s559, %s560
      %p572 = scmp.eq.s32.totalorder %s94, 1
      %p573 = por %p571, %p572
      %p575 = scmp.ne.s32.totalorder %s560, %s574
      %p576 = scmp.eq.s32.totalorder %s94, 0
      %p577 = por %p575, %p576
      %s579 = sadd.s32 %s578, 1
      %p582 = scmp.eq.s32.totalorder %s88, 1
      %p583 = scmp.ne.s32.totalorder %s578, %s580
      %p584 = scmp.eq.s32.totalorder %s88, 0
      %p585 = por %p583, %p584
      %p586 = scmp.ne.s32.totalorder %s578, %s580
      %p587 = scmp.eq.s32.totalorder %s93, 1
      %p588 = por %p586, %p587
      %p589 = scmp.ne.s32.totalorder %s580, %s581
      %p590 = scmp.eq.s32.totalorder %s93, 0
      %p591 = por %p589, %p590
      %p592 = scmp.ne.s32.totalorder %s580, %s581
      %p593 = scmp.eq.s32.totalorder %s94, 1
      %p594 = por %p592, %p593
      %p596 = scmp.ne.s32.totalorder %s581, %s595
      %p597 = scmp.eq.s32.totalorder %s94, 0
      %p598 = por %p596, %p597
      %s600 = sadd.s32 %s599, 1
      %p603 = scmp.eq.s32.totalorder %s88, 1
      %p604 = scmp.ne.s32.totalorder %s599, %s601
      %p605 = scmp.eq.s32.totalorder %s88, 0
      %p606 = por %p604, %p605
      %p607 = scmp.ne.s32.totalorder %s599, %s601
      %p608 = scmp.eq.s32.totalorder %s93, 1
      %p609 = por %p607, %p608
      %p610 = scmp.ne.s32.totalorder %s601, %s602
      %p611 = scmp.eq.s32.totalorder %s93, 0
      %p612 = por %p610, %p611
      %p613 = scmp.ne.s32.totalorder %s601, %s602
      %p614 = scmp.eq.s32.totalorder %s94, 1
      %p615 = por %p613, %p614
      %p617 = scmp.ne.s32.totalorder %s602, %s616
      %p618 = scmp.eq.s32.totalorder %s94, 0
      %p619 = por %p617, %p618
      %s621 = sadd.s32 %s620, 1
      %p624 = scmp.eq.s32.totalorder %s88, 1
      %p625 = scmp.ne.s32.totalorder %s620, %s622
      %p626 = scmp.eq.s32.totalorder %s88, 0
      %p627 = por %p625, %p626
      %p628 = scmp.ne.s32.totalorder %s620, %s622
      %p629 = scmp.eq.s32.totalorder %s93, 1
      %p630 = por %p628, %p629
      %p631 = scmp.ne.s32.totalorder %s622, %s623
      %p632 = scmp.eq.s32.totalorder %s93, 0
      %p633 = por %p631, %p632
      %p634 = scmp.ne.s32.totalorder %s622, %s623
      %p635 = scmp.eq.s32.totalorder %s94, 1
      %p636 = por %p634, %p635
      %p638 = scmp.ne.s32.totalorder %s623, %s637
      %p639 = scmp.eq.s32.totalorder %s94, 0
      %p640 = por %p638, %p639
      %s642 = sadd.s32 %s641, 1
      %p645 = scmp.eq.s32.totalorder %s88, 1
      %p646 = scmp.ne.s32.totalorder %s641, %s643
      %p647 = scmp.eq.s32.totalorder %s88, 0
      %p648 = por %p646, %p647
      %p649 = scmp.ne.s32.totalorder %s641, %s643
      %p650 = scmp.eq.s32.totalorder %s93, 1
      %p651 = por %p649, %p650
      %p652 = scmp.ne.s32.totalorder %s643, %s644
      %p653 = scmp.eq.s32.totalorder %s93, 0
      %p654 = por %p652, %p653
      %p655 = scmp.ne.s32.totalorder %s643, %s644
      %p656 = scmp.eq.s32.totalorder %s94, 1
      %p657 = por %p655, %p656
      %p659 = scmp.ne.s32.totalorder %s644, %s658
      %p660 = scmp.eq.s32.totalorder %s94, 0
      %p661 = por %p659, %p660
      %s663 = sadd.s32 %s662, 1
      %p666 = scmp.eq.s32.totalorder %s88, 1
      %p667 = scmp.ne.s32.totalorder %s662, %s664
      %p668 = scmp.eq.s32.totalorder %s88, 0
      %p669 = por %p667, %p668
      %p670 = scmp.ne.s32.totalorder %s662, %s664
      %p671 = scmp.eq.s32.totalorder %s93, 1
      %p672 = por %p670, %p671
      %p673 = scmp.ne.s32.totalorder %s664, %s665
      %p674 = scmp.eq.s32.totalorder %s93, 0
      %p675 = por %p673, %p674
      %p676 = scmp.ne.s32.totalorder %s664, %s665
      %p677 = scmp.eq.s32.totalorder %s94, 1
      %p678 = por %p676, %p677
      %p680 = scmp.ne.s32.totalorder %s665, %s679
      %p681 = scmp.eq.s32.totalorder %s94, 0
      %p682 = por %p680, %p681
      %s683 = ssub.s32 %s88, %s95
      %p684 = scmp.eq.s32.totalorder %s683, 0
      %s686 = sadd.s32 %s685, 1
      %s687 = scalar_select %p684, %s685, %s686
      %p690 = pneg %p684
      %p691 = scmp.eq.s32.totalorder %s88, 1
      %p692 = por %p690, %p691
      %p693 = scmp.ne.s32.totalorder %s685, %s688
      %p694 = scmp.eq.s32.totalorder %s88, 0
      %p695 = por %p693, %p694
      %p696 = scmp.ne.s32.totalorder %s685, %s688
      %p697 = scmp.eq.s32.totalorder %s93, 1
      %p698 = por %p696, %p697
      %p699 = scmp.ne.s32.totalorder %s688, %s689
      %p700 = scmp.eq.s32.totalorder %s93, 0
      %p701 = por %p699, %p700
      %p702 = scmp.ne.s32.totalorder %s688, %s689
      %p703 = scmp.eq.s32.totalorder %s94, 1
      %p704 = por %p702, %p703
      %p706 = scmp.ne.s32.totalorder %s689, %s705
      %p707 = scmp.eq.s32.totalorder %s94, 0
      %p708 = por %p706, %p707
      %s709 = ssub.s32 %s88, %s95
      %p710 = scmp.eq.s32.totalorder %s709, 0
      %s712 = sadd.s32 %s711, 1
      %s713 = scalar_select %p710, %s711, %s712
      %p716 = pneg %p710
      %p717 = scmp.eq.s32.totalorder %s88, 1
      %p718 = por %p716, %p717
      %p719 = scmp.ne.s32.totalorder %s711, %s714
      %p720 = scmp.eq.s32.totalorder %s88, 0
      %p721 = por %p719, %p720
      %p722 = scmp.ne.s32.totalorder %s711, %s714
      %p723 = scmp.eq.s32.totalorder %s93, 1
      %p724 = por %p722, %p723
      %p725 = scmp.ne.s32.totalorder %s714, %s715
      %p726 = scmp.eq.s32.totalorder %s93, 0
      %p727 = por %p725, %p726
      %p728 = scmp.ne.s32.totalorder %s714, %s715
      %p729 = scmp.eq.s32.totalorder %s94, 1
      %p730 = por %p728, %p729
      %p732 = scmp.ne.s32.totalorder %s715, %s731
      %p733 = scmp.eq.s32.totalorder %s94, 0
      %p734 = por %p732, %p733
      %s735 = ssub.s32 %s88, %s95
      %p736 = scmp.eq.s32.totalorder %s735, 0
      %s738 = sadd.s32 %s737, 1
      %s739 = scalar_select %p736, %s737, %s738
      %p742 = pneg %p736
      %p743 = scmp.eq.s32.totalorder %s88, 1
      %p744 = por %p742, %p743
      %p745 = scmp.ne.s32.totalorder %s737, %s740
      %p746 = scmp.eq.s32.totalorder %s88, 0
      %p747 = por %p745, %p746
      %p748 = scmp.ne.s32.totalorder %s737, %s740
      %p749 = scmp.eq.s32.totalorder %s93, 1
      %p750 = por %p748, %p749
      %p751 = scmp.ne.s32.totalorder %s740, %s741
      %p752 = scmp.eq.s32.totalorder %s93, 0
      %p753 = por %p751, %p752
      %p754 = scmp.ne.s32.totalorder %s740, %s741
      %p755 = scmp.eq.s32.totalorder %s94, 1
      %p756 = por %p754, %p755
      %p758 = scmp.ne.s32.totalorder %s741, %s757
      %p759 = scmp.eq.s32.totalorder %s94, 0
      %p760 = por %p758, %p759
      %s761 = ssub.s32 %s88, %s95
      %p762 = scmp.eq.s32.totalorder %s761, 0
      %s764 = sadd.s32 %s763, 1
      %s765 = scalar_select %p762, %s763, %s764
      %p768 = pneg %p762
      %p769 = scmp.eq.s32.totalorder %s88, 1
      %p770 = por %p768, %p769
      %p771 = scmp.ne.s32.totalorder %s763, %s766
      %p772 = scmp.eq.s32.totalorder %s88, 0
      %p773 = por %p771, %p772
      %p774 = scmp.ne.s32.totalorder %s763, %s766
      %p775 = scmp.eq.s32.totalorder %s93, 1
      %p776 = por %p774, %p775
      %p777 = scmp.ne.s32.totalorder %s766, %s767
      %p778 = scmp.eq.s32.totalorder %s93, 0
      %p779 = por %p777, %p778
      %p780 = scmp.ne.s32.totalorder %s766, %s767
      %p781 = scmp.eq.s32.totalorder %s94, 1
      %p782 = por %p780, %p781
      %p784 = scmp.ne.s32.totalorder %s767, %s783
      %p785 = scmp.eq.s32.totalorder %s94, 0
      %p786 = por %p784, %p785
      %s787 = ssub.s32 %s88, %s95
      %p788 = scmp.eq.s32.totalorder %s787, 0
      %s790 = sadd.s32 %s789, 1
      %s791 = scalar_select %p788, %s789, %s790
      %p794 = pneg %p788
      %p795 = scmp.eq.s32.totalorder %s88, 1
      %p796 = por %p794, %p795
      %p797 = scmp.ne.s32.totalorder %s789, %s792
      %p798 = scmp.eq.s32.totalorder %s88, 0
      %p799 = por %p797, %p798
      %p800 = scmp.ne.s32.totalorder %s789, %s792
      %p801 = scmp.eq.s32.totalorder %s93, 1
      %p802 = por %p800, %p801
      %p803 = scmp.ne.s32.totalorder %s792, %s793
      %p804 = scmp.eq.s32.totalorder %s93, 0
      %p805 = por %p803, %p804
      %p806 = scmp.ne.s32.totalorder %s792, %s793
      %p807 = scmp.eq.s32.totalorder %s94, 1
      %p808 = por %p806, %p807
      %p810 = scmp.ne.s32.totalorder %s793, %s809
      %p811 = scmp.eq.s32.totalorder %s94, 0
      %p812 = por %p810, %p811
      %p813 = scmp.le.s32.totalorder 1, %s88
      %p814 = scmp.lt.s32.totalorder %s88, 3
      %p815 = pnand %p813, %p814
      %p816 = pneg %p815
      // Predicated region
      $region9: #{tpu_custom_call.1} parent=5 // pred_check
        _
      $region10: #{tpu_custom_call.1} parent=5 // pred_check_branch
        %818 = sbr.rel (%p815) target = $region12
      $region11: #{tpu_custom_call.1} parent=5 // pred_region
        %s819 = ssub.s32 %s88, 1
        // Predicated region
        $region13: #{tpu_custom_call.1} parent=11 // pred_check
          %p820 = pneg %p213
        $region14: #{tpu_custom_call.1} parent=11 // pred_check_branch
          %822 = sbr.rel (%p820) target = $region16
        $region15: #{tpu_custom_call.1} parent=11 // pred_region
          _
        $region16: #{tpu_custom_call.1} parent=11 // pred_fallthru
          _
        // Predicated region
        $region17: #{tpu_custom_call.1} parent=11 // pred_check
          %p823 = pneg %p234
        $region18: #{tpu_custom_call.1} parent=11 // pred_check_branch
          %825 = sbr.rel (%p823) target = $region20
        $region19: #{tpu_custom_call.1} parent=11 // pred_region
          %s827 = ssub.s32 16, 16
          %828 = vsyncadd [#allocation6], %s827
          %s830 = sshll.u32 [#allocation5], 4
          %s831 = int_to_ptr.vmem [resolvable:$true] %s830
          %833 = dma.hbm_to_vmem [thread:$0]  %s11, 16, %s831, [#allocation6]
        $region20: #{tpu_custom_call.1} parent=11 // pred_fallthru
          _
        // Predicated region
        $region21: #{tpu_custom_call.1} parent=11 // pred_check
          %p834 = pneg %p255
        $region22: #{tpu_custom_call.1} parent=11 // pred_check_branch
          %836 = sbr.rel (%p834) target = $region24
        $region23: #{tpu_custom_call.1} parent=11 // pred_region
          %s838 = ssub.s32 128, 128
          %839 = vsyncadd [#allocation6], %s838
          %s840 = sshll.u32 [#allocation7], 4
          %s841 = int_to_ptr.vmem [resolvable:$true] %s840
          %846 = dma.hbm_to_vmem [thread:$0]  %s13, 128, %s841, [#allocation6], 64, 64, 4
        $region24: #{tpu_custom_call.1} parent=11 // pred_fallthru
          _
        // Predicated region
        $region25: #{tpu_custom_call.1} parent=11 // pred_check
          %p847 = pneg %p276
        $region26: #{tpu_custom_call.1} parent=11 // pred_check_branch
          %849 = sbr.rel (%p847) target = $region28
        $region27: #{tpu_custom_call.1} parent=11 // pred_region
          %s851 = ssub.s32 16, 16
          %852 = vsyncadd [#allocation9], %s851
          %s854 = sshll.u32 [#allocation8], 4
          %s855 = int_to_ptr.vmem [resolvable:$true] %s854
          %857 = dma.hbm_to_vmem [thread:$0]  %s15, 16, %s855, [#allocation9]
        $region28: #{tpu_custom_call.1} parent=11 // pred_fallthru
          _
        // Predicated region
        $region29: #{tpu_custom_call.1} parent=11 // pred_check
          %p858 = pneg %p297
        $region30: #{tpu_custom_call.1} parent=11 // pred_check_branch
          %860 = sbr.rel (%p858) target = $region32
        $region31: #{tpu_custom_call.1} parent=11 // pred_region
          %s862 = ssub.s32 128, 128
          %863 = vsyncadd [#allocation9], %s862
          %s864 = sshll.u32 [#allocation10], 4
          %s865 = int_to_ptr.vmem [resolvable:$true] %s864
          %870 = dma.hbm_to_vmem [thread:$0]  %s17, 128, %s865, [#allocation9], 64, 64, 4
        $region32: #{tpu_custom_call.1} parent=11 // pred_fallthru
          _
        // Predicated region
        $region33: #{tpu_custom_call.1} parent=11 // pred_check
          %p871 = pneg %p318
        $region34: #{tpu_custom_call.1} parent=11 // pred_check_branch
          %873 = sbr.rel (%p871) target = $region36
        $region35: #{tpu_custom_call.1} parent=11 // pred_region
          %s875 = ssub.s32 128, 128
          %876 = vsyncadd [#allocation12], %s875
          %s877 = sshll.u32 [#allocation11], 4
          %s878 = int_to_ptr.vmem [resolvable:$true] %s877
          %883 = dma.hbm_to_vmem [thread:$0]  %s19, 128, %s878, [#allocation12], 64, 64, 4
        $region36: #{tpu_custom_call.1} parent=11 // pred_fallthru
          _
        // Predicated region
        $region37: #{tpu_custom_call.1} parent=11 // pred_check
          %p884 = pneg %p339
        $region38: #{tpu_custom_call.1} parent=11 // pred_check_branch
          %886 = sbr.rel (%p884) target = $region40
        $region39: #{tpu_custom_call.1} parent=11 // pred_region
          %s888 = ssub.s32 16, 16
          %889 = vsyncadd [#allocation12], %s888
          %s891 = sshll.u32 [#allocation13], 4
          %s892 = int_to_ptr.vmem [resolvable:$true] %s891
          %894 = dma.hbm_to_vmem [thread:$0]  %s21, 16, %s892, [#allocation12]
        $region40: #{tpu_custom_call.1} parent=11 // pred_fallthru
          _
        // Predicated region
        $region41: #{tpu_custom_call.1} parent=11 // pred_check
          %p895 = pneg %p360
        $region42: #{tpu_custom_call.1} parent=11 // pred_check_branch
          %897 = sbr.rel (%p895) target = $region44
        $region43: #{tpu_custom_call.1} parent=11 // pred_region
          %s899 = ssub.s32 128, 128
          %900 = vsyncadd [#allocation15], %s899
          %s901 = sshll.u32 [#allocation14], 4
          %s902 = int_to_ptr.vmem [resolvable:$true] %s901
          %907 = dma.hbm_to_vmem [thread:$0]  %s23, 128, %s902, [#allocation15], 64, 64, 4
        $region44: #{tpu_custom_call.1} parent=11 // pred_fallthru
          _
        // Predicated region
        $region45: #{tpu_custom_call.1} parent=11 // pred_check
          %p908 = pneg %p381
        $region46: #{tpu_custom_call.1} parent=11 // pred_check_branch
          %910 = sbr.rel (%p908) target = $region48
        $region47: #{tpu_custom_call.1} parent=11 // pred_region
          %s912 = ssub.s32 16, 16
          %913 = vsyncadd [#allocation15], %s912
          %s915 = sshll.u32 [#allocation16], 4
          %s916 = int_to_ptr.vmem [resolvable:$true] %s915
          %918 = dma.hbm_to_vmem [thread:$0]  %s25, 16, %s916, [#allocation15]
        $region48: #{tpu_custom_call.1} parent=11 // pred_fallthru
          _
        // Predicated region
        $region49: #{tpu_custom_call.1} parent=11 // pred_check
          %p919 = pneg %p402
        $region50: #{tpu_custom_call.1} parent=11 // pred_check_branch
          %921 = sbr.rel (%p919) target = $region52
        $region51: #{tpu_custom_call.1} parent=11 // pred_region
          _
        $region52: #{tpu_custom_call.1} parent=11 // pred_fallthru
          _
        // Predicated region
        $region53: #{tpu_custom_call.1} parent=11 // pred_check
          %p922 = pneg %p423
        $region54: #{tpu_custom_call.1} parent=11 // pred_check_branch
          %924 = sbr.rel (%p922) target = $region56
        $region55: #{tpu_custom_call.1} parent=11 // pred_region
          %s926 = ssub.s32 16, 16
          %927 = vsyncadd [#allocation18], %s926
          %s929 = sshll.u32 [#allocation17], 4
          %s930 = int_to_ptr.vmem [resolvable:$true] %s929
          %932 = dma.hbm_to_vmem [thread:$0]  %s29, 16, %s930, [#allocation18]
        $region56: #{tpu_custom_call.1} parent=11 // pred_fallthru
          _
        // Predicated region
        $region57: #{tpu_custom_call.1} parent=11 // pred_check
          %p933 = pneg %p444
        $region58: #{tpu_custom_call.1} parent=11 // pred_check_branch
          %935 = sbr.rel (%p933) target = $region60
        $region59: #{tpu_custom_call.1} parent=11 // pred_region
          %s937 = ssub.s32 128, 128
          %938 = vsyncadd [#allocation18], %s937
          %s939 = sshll.u32 [#allocation19], 4
          %s940 = int_to_ptr.vmem [resolvable:$true] %s939
          %945 = dma.hbm_to_vmem [thread:$0]  %s31, 128, %s940, [#allocation18], 64, 64, 4
        $region60: #{tpu_custom_call.1} parent=11 // pred_fallthru
          _
        // Predicated region
        $region61: #{tpu_custom_call.1} parent=11 // pred_check
          %p946 = pneg %p465
        $region62: #{tpu_custom_call.1} parent=11 // pred_check_branch
          %948 = sbr.rel (%p946) target = $region64
        $region63: #{tpu_custom_call.1} parent=11 // pred_region
          %s950 = ssub.s32 16, 16
          %951 = vsyncadd [#allocation21], %s950
          %s953 = sshll.u32 [#allocation20], 4
          %s954 = int_to_ptr.vmem [resolvable:$true] %s953
          %956 = dma.hbm_to_vmem [thread:$0]  %s33, 16, %s954, [#allocation21]
        $region64: #{tpu_custom_call.1} parent=11 // pred_fallthru
          _
        // Predicated region
        $region65: #{tpu_custom_call.1} parent=11 // pred_check
          %p957 = pneg %p486
        $region66: #{tpu_custom_call.1} parent=11 // pred_check_branch
          %959 = sbr.rel (%p957) target = $region68
        $region67: #{tpu_custom_call.1} parent=11 // pred_region
          _
        $region68: #{tpu_custom_call.1} parent=11 // pred_fallthru
          _
        // Predicated region
        $region69: #{tpu_custom_call.1} parent=11 // pred_check
          %p960 = pneg %p507
        $region70: #{tpu_custom_call.1} parent=11 // pred_check_branch
          %962 = sbr.rel (%p960) target = $region72
        $region71: #{tpu_custom_call.1} parent=11 // pred_region
          %s964 = ssub.s32 256, 256
          %965 = vsyncadd [#allocation21], %s964
          %s966 = sshll.u32 [#allocation22], 4
          %s967 = int_to_ptr.vmem [resolvable:$true] %s966
          %972 = dma.hbm_to_vmem [thread:$0]  %s37, 256, %s967, [#allocation21], 64, 64, 4
        $region72: #{tpu_custom_call.1} parent=11 // pred_fallthru
          _
        // Predicated region
        $region73: #{tpu_custom_call.1} parent=11 // pred_check
          %p973 = pneg %p528
        $region74: #{tpu_custom_call.1} parent=11 // pred_check_branch
          %975 = sbr.rel (%p973) target = $region76
        $region75: #{tpu_custom_call.1} parent=11 // pred_region
          %s977 = ssub.s32 16, 16
          %978 = vsyncadd [#allocation24], %s977
          %s980 = sshll.u32 [#allocation23], 4
          %s981 = int_to_ptr.vmem [resolvable:$true] %s980
          %983 = dma.hbm_to_vmem [thread:$0]  %s39, 16, %s981, [#allocation24]
        $region76: #{tpu_custom_call.1} parent=11 // pred_fallthru
          _
        // Predicated region
        $region77: #{tpu_custom_call.1} parent=11 // pred_check
          %p984 = pneg %p549
        $region78: #{tpu_custom_call.1} parent=11 // pred_check_branch
          %986 = sbr.rel (%p984) target = $region80
        $region79: #{tpu_custom_call.1} parent=11 // pred_region
          %s988 = ssub.s32 256, 256
          %989 = vsyncadd [#allocation24], %s988
          %s990 = sshll.u32 [#allocation25], 4
          %s991 = int_to_ptr.vmem [resolvable:$true] %s990
          %996 = dma.hbm_to_vmem [thread:$0]  %s41, 256, %s991, [#allocation24], 64, 64, 4
        $region80: #{tpu_custom_call.1} parent=11 // pred_fallthru
          _
        // Predicated region
        $region81: #{tpu_custom_call.1} parent=11 // pred_check
          %p997 = pneg %p570
        $region82: #{tpu_custom_call.1} parent=11 // pred_check_branch
          %999 = sbr.rel (%p997) target = $region84
        $region83: #{tpu_custom_call.1} parent=11 // pred_region
          %s1001 = ssub.s32 16, 16
          %1002 = vsyncadd [#allocation27], %s1001
          %s1004 = sshll.u32 [#allocation26], 4
          %s1005 = int_to_ptr.vmem [resolvable:$true] %s1004
          %1007 = dma.hbm_to_vmem [thread:$0]  %s43, 16, %s1005, [#allocation27]
        $region84: #{tpu_custom_call.1} parent=11 // pred_fallthru
          _
        // Predicated region
        $region85: #{tpu_custom_call.1} parent=11 // pred_check
          %p1008 = pneg %p591
        $region86: #{tpu_custom_call.1} parent=11 // pred_check_branch
          %1010 = sbr.rel (%p1008) target = $region88
        $region87: #{tpu_custom_call.1} parent=11 // pred_region
          %s1012 = ssub.s32 256, 256
          %1013 = vsyncadd [#allocation27], %s1012
          %s1014 = sshll.u32 [#allocation28], 4
          %s1015 = int_to_ptr.vmem [resolvable:$true] %s1014
          %1020 = dma.hbm_to_vmem [thread:$0]  %s45, 256, %s1015, [#allocation27], 64, 64, 4
        $region88: #{tpu_custom_call.1} parent=11 // pred_fallthru
          _
        // Predicated region
        $region89: #{tpu_custom_call.1} parent=11 // pred_check
          %p1021 = pneg %p612
        $region90: #{tpu_custom_call.1} parent=11 // pred_check_branch
          %1023 = sbr.rel (%p1021) target = $region92
        $region91: #{tpu_custom_call.1} parent=11 // pred_region
          %s1025 = ssub.s32 16, 16
          %1026 = vsyncadd [#allocation30], %s1025
          %s1028 = sshll.u32 [#allocation29], 4
          %s1029 = int_to_ptr.vmem [resolvable:$true] %s1028
          %1031 = dma.hbm_to_vmem [thread:$0]  %s47, 16, %s1029, [#allocation30]
        $region92: #{tpu_custom_call.1} parent=11 // pred_fallthru
          _
        // Predicated region
        $region93: #{tpu_custom_call.1} parent=11 // pred_check
          %p1032 = pneg %p633
        $region94: #{tpu_custom_call.1} parent=11 // pred_check_branch
          %1034 = sbr.rel (%p1032) target = $region96
        $region95: #{tpu_custom_call.1} parent=11 // pred_region
          _
        $region96: #{tpu_custom_call.1} parent=11 // pred_fallthru
          _
        // Predicated region
        $region97: #{tpu_custom_call.1} parent=11 // pred_check
          %p1035 = pneg %p654
        $region98: #{tpu_custom_call.1} parent=11 // pred_check_branch
          %1037 = sbr.rel (%p1035) target = $region100
        $region99: #{tpu_custom_call.1} parent=11 // pred_region
          %s1039 = ssub.s32 128, 128
          %1040 = vsyncadd [#allocation30], %s1039
          %s1041 = sshll.u32 [#allocation31], 4
          %s1042 = int_to_ptr.vmem [resolvable:$true] %s1041
          %1047 = dma.hbm_to_vmem [thread:$0]  %s51, 128, %s1042, [#allocation30], 64, 64, 4
        $region100: #{tpu_custom_call.1} parent=11 // pred_fallthru
          _
        // Predicated region
        $region101: #{tpu_custom_call.1} parent=11 // pred_check
          %p1048 = pneg %p675
        $region102: #{tpu_custom_call.1} parent=11 // pred_check_branch
          %1050 = sbr.rel (%p1048) target = $region104
        $region103: #{tpu_custom_call.1} parent=11 // pred_region
          _
        $region104: #{tpu_custom_call.1} parent=11 // pred_fallthru
          _
      $region12: #{tpu_custom_call.1} parent=5 // pred_fallthru
        _
      %p1051 = scmp.lt.s32.totalorder %s88, 2
      // Predicated region
      $region105: #{tpu_custom_call.1} parent=5 // pred_check
        %p1052 = pneg %p1051
      $region106: #{tpu_custom_call.1} parent=5 // pred_check_branch
        %1054 = sbr.rel (%p1052) target = $region108
      $region107: #{tpu_custom_call.1} parent=5 // pred_region
        // Predicated region
        $region109: #{tpu_custom_call.1} parent=107 // pred_check
          %p1055 = pneg %p108
        $region110: #{tpu_custom_call.1} parent=107 // pred_check_branch
          %1057 = sbr.rel (%p1055) target = $region112
        $region111: #{tpu_custom_call.1} parent=107 // pred_region
          %p1058 = scmp.lt.s32.totalorder %s88, 1
          %s1059 = scalar_select %p1058, %s88, 1
          %s1060 = smul.addr %s1059, 2
          %s1061 = smul.addr %s1060, 8
          %s1062 = scalar_lea.vmem %s1, %s1061
        $region112: #{tpu_custom_call.1} parent=107 // pred_fallthru
          _
        // Predicated region
        $region113: #{tpu_custom_call.1} parent=107 // pred_check
          %p1063 = pneg %p134
        $region114: #{tpu_custom_call.1} parent=107 // pred_check_branch
          %1065 = sbr.rel (%p1063) target = $region116
        $region115: #{tpu_custom_call.1} parent=107 // pred_region
          %p1066 = scmp.lt.s32.totalorder %s88, 1
          %s1067 = scalar_select %p1066, %s88, 1
          %s1068 = smul.addr %s1067, 2
          %s1069 = smul.addr %s1068, 8
          %s1070 = scalar_lea.vmem %s3, %s1069
        $region116: #{tpu_custom_call.1} parent=107 // pred_fallthru
          _
        // Predicated region
        $region117: #{tpu_custom_call.1} parent=107 // pred_check
          %p1071 = pneg %p160
        $region118: #{tpu_custom_call.1} parent=107 // pred_check_branch
          %1073 = sbr.rel (%p1071) target = $region120
        $region119: #{tpu_custom_call.1} parent=107 // pred_region
          %s1074 = sand.u32 %s150, 1
          %s1075 = scalar_lea.sflag [#allocation3], %s1074
          %s1076 = sand.u32 %s150, 1
          %s1077 = scalar_lea.vmem [#allocation2], %s1076
          %s1079 = ssub.s32 16, 16
          %1080 = vsyncadd %s1075, %s1079
          %s1081 = smul.addr %s88, 16
          %s1082 = scalar_lea.hbm %s5, %s1081
          %s1084 = sshll.u32 %s1077, 4
          %s1085 = int_to_ptr.vmem [resolvable:$true] %s1084
          %1087 = dma.hbm_to_vmem [thread:$0]  %s1082, 16, %s1085, %s1075
        $region120: #{tpu_custom_call.1} parent=107 // pred_fallthru
          _
        // Predicated region
        $region121: #{tpu_custom_call.1} parent=107 // pred_check
          %p1088 = pneg %p186
        $region122: #{tpu_custom_call.1} parent=107 // pred_check_branch
          %1090 = sbr.rel (%p1088) target = $region124
        $region123: #{tpu_custom_call.1} parent=107 // pred_region
          %p1091 = scmp.lt.s32.totalorder %s88, 1
          %s1092 = scalar_select %p1091, %s88, 1
          %s1093 = scalar_lea.vmem %s7, %s1092
        $region124: #{tpu_custom_call.1} parent=107 // pred_fallthru
          _
      $region108: #{tpu_custom_call.1} parent=5 // pred_fallthru
        _
      %p1094 = scmp.le.s32.totalorder 1, %s88
      %p1095 = scmp.lt.s32.totalorder %s88, 3
      %p1096 = pnand %p1094, %p1095
      %p1097 = pneg %p1096
      // Predicated region
      $region125: #{tpu_custom_call.1} parent=5 // pred_check
        _
      $region126: #{tpu_custom_call.1} parent=5 // pred_check_branch
        %1099 = sbr.rel (%p1096) target = $region128
      $region127: #{tpu_custom_call.1} parent=5 // pred_region
        %s1100 = ssub.s32 %s88, 1
        %s1101 = sand.u32 %s153, 1
        %s1102 = scalar_lea.sflag [#allocation3], %s1101
        %s1103 = sand.u32 %s153, 1
        %s1104 = scalar_lea.vmem [#allocation2], %s1103
        // Predicated region
        $region129: #{tpu_custom_call.1} parent=127 // pred_check
          %p1105 = pneg %p166
        $region130: #{tpu_custom_call.1} parent=127 // pred_check_branch
          %1107 = sbr.rel (%p1105) target = $region132
        $region131: #{tpu_custom_call.1} parent=127 // pred_region
          %1108 = dma.done %s1102, 16
        $region132: #{tpu_custom_call.1} parent=127 // pred_fallthru
          _
        // Predicated region
        $region133: #{tpu_custom_call.1} parent=127 // pred_check
          %p1109 = pneg %p234
        $region134: #{tpu_custom_call.1} parent=127 // pred_check_branch
          %1111 = sbr.rel (%p1109) target = $region136
        $region135: #{tpu_custom_call.1} parent=127 // pred_region
          %1112 = dma.done [#allocation6], 16
        $region136: #{tpu_custom_call.1} parent=127 // pred_fallthru
          _
        // Predicated region
        $region137: #{tpu_custom_call.1} parent=127 // pred_check
          %p1113 = pneg %p255
        $region138: #{tpu_custom_call.1} parent=127 // pred_check_branch
          %1115 = sbr.rel (%p1113) target = $region140
        $region139: #{tpu_custom_call.1} parent=127 // pred_region
          %1116 = dma.done [#allocation6], 128
        $region140: #{tpu_custom_call.1} parent=127 // pred_fallthru
          _
        // Predicated region
        $region141: #{tpu_custom_call.1} parent=127 // pred_check
          %p1117 = pneg %p276
        $region142: #{tpu_custom_call.1} parent=127 // pred_check_branch
          %1119 = sbr.rel (%p1117) target = $region144
        $region143: #{tpu_custom_call.1} parent=127 // pred_region
          %1120 = dma.done [#allocation9], 16
        $region144: #{tpu_custom_call.1} parent=127 // pred_fallthru
          _
        // Predicated region
        $region145: #{tpu_custom_call.1} parent=127 // pred_check
          %p1121 = pneg %p297
        $region146: #{tpu_custom_call.1} parent=127 // pred_check_branch
          %1123 = sbr.rel (%p1121) target = $region148
        $region147: #{tpu_custom_call.1} parent=127 // pred_region
          %1124 = dma.done [#allocation9], 128
        $region148: #{tpu_custom_call.1} parent=127 // pred_fallthru
          _
        // Predicated region
        $region149: #{tpu_custom_call.1} parent=127 // pred_check
          %p1125 = pneg %p318
        $region150: #{tpu_custom_call.1} parent=127 // pred_check_branch
          %1127 = sbr.rel (%p1125) target = $region152
        $region151: #{tpu_custom_call.1} parent=127 // pred_region
          %1128 = dma.done [#allocation12], 128
        $region152: #{tpu_custom_call.1} parent=127 // pred_fallthru
          _
        // Predicated region
        $region153: #{tpu_custom_call.1} parent=127 // pred_check
          %p1129 = pneg %p339
        $region154: #{tpu_custom_call.1} parent=127 // pred_check_branch
          %1131 = sbr.rel (%p1129) target = $region156
        $region155: #{tpu_custom_call.1} parent=127 // pred_region
          %1132 = dma.done [#allocation12], 16
        $region156: #{tpu_custom_call.1} parent=127 // pred_fallthru
          _
        // Predicated region
        $region157: #{tpu_custom_call.1} parent=127 // pred_check
          %p1133 = pneg %p360
        $region158: #{tpu_custom_call.1} parent=127 // pred_check_branch
          %1135 = sbr.rel (%p1133) target = $region160
        $region159: #{tpu_custom_call.1} parent=127 // pred_region
          %1136 = dma.done [#allocation15], 128
        $region160: #{tpu_custom_call.1} parent=127 // pred_fallthru
          _
        // Predicated region
        $region161: #{tpu_custom_call.1} parent=127 // pred_check
          %p1137 = pneg %p381
        $region162: #{tpu_custom_call.1} parent=127 // pred_check_branch
          %1139 = sbr.rel (%p1137) target = $region164
        $region163: #{tpu_custom_call.1} parent=127 // pred_region
          %1140 = dma.done [#allocation15], 16
        $region164: #{tpu_custom_call.1} parent=127 // pred_fallthru
          _
        // Predicated region
        $region165: #{tpu_custom_call.1} parent=127 // pred_check
          %p1141 = pneg %p423
        $region166: #{tpu_custom_call.1} parent=127 // pred_check_branch
          %1143 = sbr.rel (%p1141) target = $region168
        $region167: #{tpu_custom_call.1} parent=127 // pred_region
          %1144 = dma.done [#allocation18], 16
        $region168: #{tpu_custom_call.1} parent=127 // pred_fallthru
          _
        // Predicated region
        $region169: #{tpu_custom_call.1} parent=127 // pred_check
          %p1145 = pneg %p444
        $region170: #{tpu_custom_call.1} parent=127 // pred_check_branch
          %1147 = sbr.rel (%p1145) target = $region172
        $region171: #{tpu_custom_call.1} parent=127 // pred_region
          %1148 = dma.done [#allocation18], 128
        $region172: #{tpu_custom_call.1} parent=127 // pred_fallthru
          _
        // Predicated region
        $region173: #{tpu_custom_call.1} parent=127 // pred_check
          %p1149 = pneg %p465
        $region174: #{tpu_custom_call.1} parent=127 // pred_check_branch
          %1151 = sbr.rel (%p1149) target = $region176
        $region175: #{tpu_custom_call.1} parent=127 // pred_region
          %1152 = dma.done [#allocation21], 16
        $region176: #{tpu_custom_call.1} parent=127 // pred_fallthru
          _
        // Predicated region
        $region177: #{tpu_custom_call.1} parent=127 // pred_check
          %p1153 = pneg %p507
        $region178: #{tpu_custom_call.1} parent=127 // pred_check_branch
          %1155 = sbr.rel (%p1153) target = $region180
        $region179: #{tpu_custom_call.1} parent=127 // pred_region
          %1156 = dma.done [#allocation21], 256
        $region180: #{tpu_custom_call.1} parent=127 // pred_fallthru
          _
        // Predicated region
        $region181: #{tpu_custom_call.1} parent=127 // pred_check
          %p1157 = pneg %p528
        $region182: #{tpu_custom_call.1} parent=127 // pred_check_branch
          %1159 = sbr.rel (%p1157) target = $region184
        $region183: #{tpu_custom_call.1} parent=127 // pred_region
          %1160 = dma.done [#allocation24], 16
        $region184: #{tpu_custom_call.1} parent=127 // pred_fallthru
          _
        // Predicated region
        $region185: #{tpu_custom_call.1} parent=127 // pred_check
          %p1161 = pneg %p549
        $region186: #{tpu_custom_call.1} parent=127 // pred_check_branch
          %1163 = sbr.rel (%p1161) target = $region188
        $region187: #{tpu_custom_call.1} parent=127 // pred_region
          %1164 = dma.done [#allocation24], 256
        $region188: #{tpu_custom_call.1} parent=127 // pred_fallthru
          _
        // Predicated region
        $region189: #{tpu_custom_call.1} parent=127 // pred_check
          %p1165 = pneg %p570
        $region190: #{tpu_custom_call.1} parent=127 // pred_check_branch
          %1167 = sbr.rel (%p1165) target = $region192
        $region191: #{tpu_custom_call.1} parent=127 // pred_region
          %1168 = dma.done [#allocation27], 16
        $region192: #{tpu_custom_call.1} parent=127 // pred_fallthru
          _
        // Predicated region
        $region193: #{tpu_custom_call.1} parent=127 // pred_check
          %p1169 = pneg %p591
        $region194: #{tpu_custom_call.1} parent=127 // pred_check_branch
          %1171 = sbr.rel (%p1169) target = $region196
        $region195: #{tpu_custom_call.1} parent=127 // pred_region
          %1172 = dma.done [#allocation27], 256
        $region196: #{tpu_custom_call.1} parent=127 // pred_fallthru
          _
        // Predicated region
        $region197: #{tpu_custom_call.1} parent=127 // pred_check
          %p1173 = pneg %p612
        $region198: #{tpu_custom_call.1} parent=127 // pred_check_branch
          %1175 = sbr.rel (%p1173) target = $region200
        $region199: #{tpu_custom_call.1} parent=127 // pred_region
          %1176 = dma.done [#allocation30], 16
        $region200: #{tpu_custom_call.1} parent=127 // pred_fallthru
          _
        // Predicated region
        $region201: #{tpu_custom_call.1} parent=127 // pred_check
          %p1177 = pneg %p654
        $region202: #{tpu_custom_call.1} parent=127 // pred_check_branch
          %1179 = sbr.rel (%p1177) target = $region204
        $region203: #{tpu_custom_call.1} parent=127 // pred_region
          %1180 = dma.done [#allocation30], 128
        $region204: #{tpu_custom_call.1} parent=127 // pred_fallthru
          _
        %p1181 = scmp.lt.s32.totalorder %s93, 1
        %s1182 = scalar_select %p1181, %s93, 1
        %s1183 = smul.addr %s1182, 2
        %s1184 = smul.addr %s1183, 8
        %s1185 = scalar_lea.vmem %s1, %s1184
        %p1186 = pneg %p114
        %p1187 = pneg %p111
        %p1188 = scmp.lt.s32.totalorder %s93, 1
        %s1189 = scalar_select %p1188, %s93, 1
        %s1190 = smul.addr %s1189, 2
        %s1191 = smul.addr %s1190, 8
        %s1192 = scalar_lea.vmem %s3, %s1191
        %p1193 = pneg %p140
        %p1194 = pneg %p137
        %s1195 = sand.u32 %s153, 1
        %s1196 = scalar_lea.sflag [#allocation3], %s1195
        %s1197 = sand.u32 %s153, 1
        %s1198 = scalar_lea.vmem [#allocation2], %s1197
        %p1199 = pneg %p166
        %p1200 = pneg %p163
        %p1201 = scmp.lt.s32.totalorder %s93, 1
        %s1202 = scalar_select %p1201, %s93, 1
        %s1203 = scalar_lea.vmem %s7, %s1202
        %p1204 = pneg %p192
        %p1205 = pneg %p189
        %p1206 = pneg %p213
        %p1207 = pneg %p210
        %p1208 = pneg %p234
        %p1209 = pneg %p231
        %p1210 = pneg %p255
        %p1211 = pneg %p252
        %p1212 = pneg %p276
        %p1213 = pneg %p273
        %p1214 = pneg %p297
        %p1215 = pneg %p294
        %p1216 = pneg %p318
        %p1217 = pneg %p315
        %p1218 = pneg %p339
        %p1219 = pneg %p336
        %p1220 = pneg %p360
        %p1221 = pneg %p357
        %p1222 = pneg %p381
        %p1223 = pneg %p378
        %p1224 = pneg %p402
        %p1225 = pneg %p399
        %p1226 = pneg %p423
        %p1227 = pneg %p420
        %p1228 = pneg %p444
        %p1229 = pneg %p441
        %p1230 = pneg %p465
        %p1231 = pneg %p462
        %p1232 = pneg %p486
        %p1233 = pneg %p483
        %p1234 = pneg %p507
        %p1235 = pneg %p504
        %p1236 = pneg %p528
        %p1237 = pneg %p525
        %p1238 = pneg %p549
        %p1239 = pneg %p546
        %p1240 = pneg %p570
        %p1241 = pneg %p567
        %p1242 = pneg %p591
        %p1243 = pneg %p588
        %p1244 = pneg %p612
        %p1245 = pneg %p609
        %p1246 = pneg %p633
        %p1247 = pneg %p630
        %p1248 = pneg %p654
        %p1249 = pneg %p651
        %p1250 = pneg %p675
        %p1251 = pneg %p672
        %p1252 = pneg %p701
        %p1253 = pneg %p698
        %s1254 = sand.u32 %s688, 1
        %s1255 = scalar_lea.sflag [#allocation4], %s1254
        %s1256 = sand.u32 %s688, 1
        %s1257 = smul.addr %s1256, 8
        %s1258 = scalar_lea.vmem [#allocation32], %s1257
        %p1259 = pneg %p727
        %p1260 = pneg %p724
        %p1261 = scmp.lt.s32.totalorder %s93, 1
        %s1262 = scalar_select %p1261, %s93, 1
        %s1263 = smul.addr %s1262, 2
        %s1264 = smul.addr %s1263, 8
        %s1265 = scalar_lea.vmem %s57, %s1264
        %p1266 = pneg %p753
        %p1267 = pneg %p750
        %p1268 = scmp.lt.s32.totalorder %s93, 1
        %s1269 = scalar_select %p1268, %s93, 1
        %s1270 = smul.addr %s1269, 2
        %s1271 = smul.addr %s1270, 8
        %s1272 = scalar_lea.vmem %s59, %s1271
        %p1273 = pneg %p779
        %p1274 = pneg %p776
        %p1275 = scmp.lt.s32.totalorder %s93, 1
        %s1276 = scalar_select %p1275, %s93, 1
        %s1277 = smul.addr %s1276, 2
        %s1278 = smul.addr %s1277, 8
        %s1279 = scalar_lea.vmem %s61, %s1278
        %p1280 = pneg %p805
        %p1281 = pneg %p802
        %s1282 = sand.u32 %s792, 1
        %s1283 = scalar_lea.sflag [#allocation34], %s1282
        %s1284 = sand.u32 %s792, 1
        %s1285 = smul.addr %s1284, 8
        %s1286 = scalar_lea.vmem [#allocation33], %s1285
        %p1287 = scmp.lt.s32.totalorder %s93, 1
        %s1288 = scalar_select %p1287, %s93, 1
        %s1289 = smul.addr %s1288, 2
        %s1290 = smul.addr %s1289, 8
        %s1291 = scalar_lea.vmem %s1, %s1290
        %p1292 = scmp.lt.s32.totalorder %s93, 1
        %s1293 = scalar_select %p1292, %s93, 1
        %s1294 = smul.addr %s1293, 2
        %s1295 = smul.addr %s1294, 8
        %s1296 = scalar_lea.vmem %s3, %s1295
        %p1297 = scmp.lt.s32.totalorder %s93, 1
        %s1298 = scalar_select %p1297, %s93, 1
        %s1299 = scalar_lea.vmem %s7, %s1298
        %p1300 = scmp.lt.s32.totalorder %s93, 1
        %s1301 = scalar_select %p1300, %s93, 1
        %s1302 = smul.addr %s1301, 2
        %s1303 = smul.addr %s1302, 8
        %s1304 = scalar_lea.vmem %s57, %s1303
        %p1305 = scmp.lt.s32.totalorder %s93, 1
        %s1306 = scalar_select %p1305, %s93, 1
        %s1307 = smul.addr %s1306, 2
        %s1308 = smul.addr %s1307, 8
        %s1309 = scalar_lea.vmem %s59, %s1308
        %p1310 = scmp.lt.s32.totalorder %s93, 1
        %s1311 = scalar_select %p1310, %s93, 1
        %s1312 = smul.addr %s1311, 2
        %s1313 = smul.addr %s1312, 8
        %s1314 = scalar_lea.vmem %s61, %s1313
        %v1316 = vld [vmem:[%s1291] sm:$0xff]
        %v1317 = vld [vmem:[%s1291 + $0x8] sm:$0x1]
        %v1318 = vld [vmem:[%s1296] sm:$0xff]
        %v1319 = vld [vmem:[%s1296 + $0x8] sm:$0xff]
        %v1320 = vld [vmem:[%s1104] sm:$0x1]
        %v1321 = vld [vmem:[%s1299] sm:$0x1]
        %v1322 = vld [vmem:[%s9] sm:$0xf]
        %v1323 = vld [vmem:[%s9 + $0x4] sm:$0xf]
        %v1324 = vld [vmem:[%s9 + $0x8] sm:$0xf]
        %v1325 = vld [vmem:[%s9 + $0xc] sm:$0xf]
        %v1326 = vpack.c.bf16 %v1317, %v1316
        %v1327 = vld [vmem:[#allocation5] sm:$0x1]
        %v1329 = vlaneseq
        %v1330 = vshrl.u32 %v1329, 7
        %v1331 = vsub.s32 0, %v1330
        %v1332 = vrot.slane %v1327, %v1331
        %v1335 = vshrl.u32 %v1326, 16
        %v1337 = vshll.u32 %v1326, 16
        %v1339 = vrot.slane %v1337, 1
        %v1340 = vor.u32 %v1335, %v1339
        %v1345 = vunpack.c.l.b16 %v1322
        %v1346 = vunpack.c.l.b16 %v1323
        %v1347 = vunpack.c.l.b16 %v1324
        %v1348 = vunpack.c.l.b16 %v1325
        %v1349 = vpack.c.b16 %v1346, %v1345
        %v1350 = vpack.c.b16 %v1348, %v1347
        %vm1353 = vcmask 261120
        %v1355 = vsel %vm1353, %v1340, 0
        %1357 = vmatprep.subr.bf16.mxu0 0
        %1358 = vmatpush1.bf16.msra.mxu0 0
        %1359 = vmatprep.subr.bf16.mxu0 0
        %1360 = vmatpush1.bf16.msra.mxu0 0
        %1361 = vmatprep.subr.bf16.mxu0 0
        %1362 = vmatpush1.bf16.msra.mxu0 0
        %1363 = vmatprep.subr.bf16.mxu0 0
        %1364 = vmatpush1.bf16.msra.mxu0 0
        %1365 = vmatprep.subr.bf16.mxu0 0
        %1366 = vmatpush1.bf16.msra.mxu0 0
        %1367 = vmatprep.subr.bf16.mxu0 0
        %1368 = vmatpush1.bf16.msra.mxu0 0
        %1369 = vmatprep.subr.bf16.mxu0 0
        %1370 = vmatpush1.bf16.msra.mxu0 %v1350
        %1371 = vmatprep.subr.bf16.mxu0 0
        %1372 = vmatpush1.bf16.msra.mxu0 %v1349
        %1373 = vmatprep.subr.bf16.mxu0 0
        %1374 = vmatpush2.bf16.msra.mxu0 0
        %1375 = vmatprep.subr.bf16.mxu0 0
        %1376 = vmatpush2.bf16.msra.mxu0 0
        %1377 = vmatprep.subr.bf16.mxu0 0
        %1378 = vmatpush2.bf16.msra.mxu0 0
        %1379 = vmatprep.subr.bf16.mxu0 0
        %1380 = vmatpush2.bf16.msra.mxu0 0
        %1381 = vmatprep.subr.bf16.mxu0 0
        %1382 = vmatpush2.bf16.msra.mxu0 0
        %1383 = vmatprep.subr.bf16.mxu0 0
        %1384 = vmatpush2.bf16.msra.mxu0 0
        %1385 = vmatprep.subr.bf16.mxu0 0
        %1386 = vmatpush2.bf16.msra.mxu0 0
        %1387 = vmatprep.subr.bf16.mxu0 0
        %1388 = vmatpush2.bf16.msra.mxu0 0
        %1389 = vmatprep.mubr.bf16.mxu0 0
        %1390 = vmatmul.mubr.bf16.gmra.mxu0 %v1355
        %v1391 = vpop.f32.mrf.mxu0
        %v1392 = vadd.f32 %v1332, %v1391
        %v1393 = vpop.f32.mrf.mxu0
        %v1394 = vpop.f32.mrf.mxu0
        %v1395 = vpop.f32.mrf.mxu0
        %1396 = vdwg.mxu0
        %v1397 = vtanh.pop %v1392
        %1398 = vst.msk [vmem:[%s1258] sm:$0xff] %vm1353, %v1397
        %v1399 = vlaneseq
        %v1400 = vshrl.u32 %v1399, 7
        %v1401 = vadd.s32 %v1400, 8
        %v1402 = vlaneseq
        %v1403 = vshrl.u32 %v1402, 7
        %v1404 = vsub.s32 0, %v1403
        %v1405 = vrot.slane %v1321, %v1404
        %vm1406 = vcmp.lt.s32.totalorder %v1400, %v1405
        %vm1407 = vcmp.lt.s32.totalorder %v1401, %v1405
        %v1408 = vsel %vm1406, 1, 0
        %v1409 = vsel %vm1407, 1, 0
        %v1410 = vcvt.s32.f32 %v1408
        %v1411 = vcvt.s32.f32 %v1409
        %1413 = vset.pattern.permute.xlu0 0
        %1414 = vperm.xlu0 %1413, %v1410
        %v1415 = vpop.permute.xlu0 %1414
        %1418 = vset.pattern.permute.xlu0 0
        %1419 = vperm.xlu0 %1418, %v1411
        %v1420 = vpop.permute.xlu0 %1419
        %v1422 = vmul.f32 %v1318, %v1415
        %v1423 = vmul.f32 %v1319, %v1420
        %vm1424 = vcmask 130048
        %v1425 = vsel %vm1424, %v1422, 0.0
        %v1426 = vsel %vm1424, %v1423, 0.0
        %v1427 = vadd.f32 %v1425, %v1426
        %v1428 = vrot.slane %v1427, 4
        %v1429 = vadd.f32 %v1427, %v1428
        %v1430 = vrot.slane %v1429, 2
        %v1431 = vadd.f32 %v1429, %v1430
        %v1432 = vrot.slane %v1431, 1
        %v1433 = vadd.f32 %v1431, %v1432
        %v1434 = vcvt.s32.f32 %v1321
        %1436 = vset.pattern.permute.xlu0 0
        %1437 = vperm.xlu0 %1436, %v1434
        %v1438 = vpop.permute.xlu0 %1437
        %v1440 = vlaneseq
        %v1441 = vshrl.u32 %v1440, 7
        %v1442 = vsub.s32 0, %v1441
        %v1443 = vrot.slane %v1438, %v1442
        %v1444 = vrcp.pop %v1443
        %v1445 = vmul.f32 %v1433, %v1444
        %v1446 = vld [vmem:[#allocation7] sm:$0xf]
        %v1447 = vld [vmem:[#allocation7 + $0x4] sm:$0xf]
        %v1448 = vpack.c.bf16 %v1445, %v1445
        %v1449 = vld [vmem:[#allocation8] sm:$0x1]
        %v1452 = vunpack.c.l.b16 %v1446
        %v1453 = vunpack.c.l.b16 %v1447
        %v1454 = vpack.c.b16 %v1453, %v1452
        %v1457 = vsel %vm1424, %v1448, 0
        %1459 = vmatprep.subr.bf16.mxu0 0
        %1460 = vmatpush1.bf16.msra.mxu0 0
        %1461 = vmatprep.subr.bf16.mxu0 0
        %1462 = vmatpush1.bf16.msra.mxu0 0
        %1463 = vmatprep.subr.bf16.mxu0 0
        %1464 = vmatpush1.bf16.msra.mxu0 0
        %1465 = vmatprep.subr.bf16.mxu0 0
        %1466 = vmatpush1.bf16.msra.mxu0 0
        %1467 = vmatprep.subr.bf16.mxu0 0
        %1468 = vmatpush1.bf16.msra.mxu0 0
        %1469 = vmatprep.subr.bf16.mxu0 0
        %1470 = vmatpush1.bf16.msra.mxu0 0
        %1471 = vmatprep.subr.bf16.mxu0 0
        %1472 = vmatpush1.bf16.msra.mxu0 0
        %1473 = vmatprep.subr.bf16.mxu0 0
        %1474 = vmatpush1.bf16.msra.mxu0 %v1454
        %1475 = vmatprep.subr.bf16.mxu0 0
        %1476 = vmatpush2.bf16.msra.mxu0 0
        %1477 = vmatprep.subr.bf16.mxu0 0
        %1478 = vmatpush2.bf16.msra.mxu0 0
        %1479 = vmatprep.subr.bf16.mxu0 0
        %1480 = vmatpush2.bf16.msra.mxu0 0
        %1481 = vmatprep.subr.bf16.mxu0 0
        %1482 = vmatpush2.bf16.msra.mxu0 0
        %1483 = vmatprep.subr.bf16.mxu0 0
        %1484 = vmatpush2.bf16.msra.mxu0 0
        %1485 = vmatprep.subr.bf16.mxu0 0
        %1486 = vmatpush2.bf16.msra.mxu0 0
        %1487 = vmatprep.subr.bf16.mxu0 0
        %1488 = vmatpush2.bf16.msra.mxu0 0
        %1489 = vmatprep.subr.bf16.mxu0 0
        %1490 = vmatpush2.bf16.msra.mxu0 0
        %1491 = vmatprep.mubr.bf16.mxu0 0
        %1492 = vmatmul.mubr.bf16.gmra.mxu0 %v1457
        %v1493 = vpop.f32.mrf.mxu0
        %v1494 = vadd.f32 %v1449, %v1493
        %v1495 = vpop.f32.mrf.mxu0
        %v1496 = vpop.f32.mrf.mxu0
        %v1497 = vpop.f32.mrf.mxu0
        %1498 = vdwg.mxu0
        %v1499 = vtanh.pop %v1494
        %v1500 = vld [vmem:[#allocation10] sm:$0xf]
        %v1501 = vld [vmem:[#allocation10 + $0x4] sm:$0xf]
        %v1502 = vpack.c.bf16 %v1320, %v1320
        %v1503 = vld [vmem:[#allocation11] sm:$0xf]
        %v1504 = vld [vmem:[#allocation11 + $0x4] sm:$0xf]
        %v1505 = vpack.c.bf16 %v1499, %v1499
        %v1508 = vunpack.c.l.b16 %v1503
        %v1509 = vunpack.c.l.b16 %v1504
        %v1510 = vpack.c.b16 %v1509, %v1508
        %v1513 = vsel %vm1424, %v1505, 0
        %1515 = vmatprep.subr.bf16.mxu0 0
        %1516 = vmatpush1.bf16.msra.mxu0 0
        %1517 = vmatprep.subr.bf16.mxu0 0
        %1518 = vmatpush1.bf16.msra.mxu0 0
        %1519 = vmatprep.subr.bf16.mxu0 0
        %1520 = vmatpush1.bf16.msra.mxu0 0
        %1521 = vmatprep.subr.bf16.mxu0 0
        %1522 = vmatpush1.bf16.msra.mxu0 0
        %1523 = vmatprep.subr.bf16.mxu0 0
        %1524 = vmatpush1.bf16.msra.mxu0 0
        %1525 = vmatprep.subr.bf16.mxu0 0
        %1526 = vmatpush1.bf16.msra.mxu0 0
        %1527 = vmatprep.subr.bf16.mxu0 0
        %1528 = vmatpush1.bf16.msra.mxu0 0
        %1529 = vmatprep.subr.bf16.mxu0 0
        %1530 = vmatpush1.bf16.msra.mxu0 %v1510
        %1531 = vmatprep.subr.bf16.mxu0 0
        %1532 = vmatpush2.bf16.msra.mxu0 0
        %1533 = vmatprep.subr.bf16.mxu0 0
        %1534 = vmatpush2.bf16.msra.mxu0 0
        %1535 = vmatprep.subr.bf16.mxu0 0
        %1536 = vmatpush2.bf16.msra.mxu0 0
        %1537 = vmatprep.subr.bf16.mxu0 0
        %1538 = vmatpush2.bf16.msra.mxu0 0
        %1539 = vmatprep.subr.bf16.mxu0 0
        %1540 = vmatpush2.bf16.msra.mxu0 0
        %1541 = vmatprep.subr.bf16.mxu0 0
        %1542 = vmatpush2.bf16.msra.mxu0 0
        %1543 = vmatprep.subr.bf16.mxu0 0
        %1544 = vmatpush2.bf16.msra.mxu0 0
        %1545 = vmatprep.subr.bf16.mxu0 0
        %1546 = vmatpush2.bf16.msra.mxu0 0
        %1547 = vmatprep.mubr.bf16.mxu0 0
        %1548 = vmatmul.mubr.bf16.gmra.mxu0 %v1513
        %v1549 = vpop.f32.mrf.mxu0
        %v1550 = vadd.f32 0.0, %v1549
        %v1551 = vpop.f32.mrf.mxu0
        %v1552 = vpop.f32.mrf.mxu0
        %v1553 = vpop.f32.mrf.mxu0
        %1554 = vdwg.mxu0
        %v1557 = vunpack.c.l.b16 %v1500
        %v1558 = vunpack.c.l.b16 %v1501
        %v1559 = vpack.c.b16 %v1558, %v1557
        %v1562 = vsel %vm1424, %v1502, 0
        %1564 = vmatprep.subr.bf16.mxu0 0
        %1565 = vmatpush1.bf16.msra.mxu0 0
        %1566 = vmatprep.subr.bf16.mxu0 0
        %1567 = vmatpush1.bf16.msra.mxu0 0
        %1568 = vmatprep.subr.bf16.mxu0 0
        %1569 = vmatpush1.bf16.msra.mxu0 0
        %1570 = vmatprep.subr.bf16.mxu0 0
        %1571 = vmatpush1.bf16.msra.mxu0 0
        %1572 = vmatprep.subr.bf16.mxu0 0
        %1573 = vmatpush1.bf16.msra.mxu0 0
        %1574 = vmatprep.subr.bf16.mxu0 0
        %1575 = vmatpush1.bf16.msra.mxu0 0
        %1576 = vmatprep.subr.bf16.mxu0 0
        %1577 = vmatpush1.bf16.msra.mxu0 0
        %1578 = vmatprep.subr.bf16.mxu0 0
        %1579 = vmatpush1.bf16.msra.mxu0 %v1559
        %1580 = vmatprep.subr.bf16.mxu0 0
        %1581 = vmatpush2.bf16.msra.mxu0 0
        %1582 = vmatprep.subr.bf16.mxu0 0
        %1583 = vmatpush2.bf16.msra.mxu0 0
        %1584 = vmatprep.subr.bf16.mxu0 0
        %1585 = vmatpush2.bf16.msra.mxu0 0
        %1586 = vmatprep.subr.bf16.mxu0 0
        %1587 = vmatpush2.bf16.msra.mxu0 0
        %1588 = vmatprep.subr.bf16.mxu0 0
        %1589 = vmatpush2.bf16.msra.mxu0 0
        %1590 = vmatprep.subr.bf16.mxu0 0
        %1591 = vmatpush2.bf16.msra.mxu0 0
        %1592 = vmatprep.subr.bf16.mxu0 0
        %1593 = vmatpush2.bf16.msra.mxu0 0
        %1594 = vmatprep.subr.bf16.mxu0 0
        %1595 = vmatpush2.bf16.msra.mxu0 0
        %1596 = vmatprep.mubr.bf16.mxu0 0
        %1597 = vmatmul.mubr.bf16.gmra.mxu0 %v1562
        %v1598 = vpop.f32.mrf.mxu0
        %v1599 = vadd.f32 %v1550, %v1598
        %v1600 = vpop.f32.mrf.mxu0
        %v1601 = vpop.f32.mrf.mxu0
        %v1602 = vpop.f32.mrf.mxu0
        %1603 = vdwg.mxu0
        %v1604 = vld [vmem:[#allocation13] sm:$0x1]
        %v1605 = vadd.f32 %v1599, %v1604
        %v1606 = vtanh.pop %v1605
        %v1607 = vld [vmem:[#allocation14] sm:$0xf]
        %v1608 = vld [vmem:[#allocation14 + $0x4] sm:$0xf]
        %v1609 = vpack.c.bf16 %v1606, %v1606
        %v1610 = vld [vmem:[#allocation16] sm:$0x1]
        %v1613 = vunpack.c.l.b16 %v1607
        %v1614 = vunpack.c.l.b16 %v1608
        %v1615 = vpack.c.b16 %v1614, %v1613
        %v1618 = vsel %vm1424, %v1609, 0
        %1620 = vmatprep.subr.bf16.mxu0 0
        %1621 = vmatpush1.bf16.msra.mxu0 0
        %1622 = vmatprep.subr.bf16.mxu0 0
        %1623 = vmatpush1.bf16.msra.mxu0 0
        %1624 = vmatprep.subr.bf16.mxu0 0
        %1625 = vmatpush1.bf16.msra.mxu0 0
        %1626 = vmatprep.subr.bf16.mxu0 0
        %1627 = vmatpush1.bf16.msra.mxu0 0
        %1628 = vmatprep.subr.bf16.mxu0 0
        %1629 = vmatpush1.bf16.msra.mxu0 0
        %1630 = vmatprep.subr.bf16.mxu0 0
        %1631 = vmatpush1.bf16.msra.mxu0 0
        %1632 = vmatprep.subr.bf16.mxu0 0
        %1633 = vmatpush1.bf16.msra.mxu0 0
        %1634 = vmatprep.subr.bf16.mxu0 0
        %1635 = vmatpush1.bf16.msra.mxu0 %v1615
        %1636 = vmatprep.subr.bf16.mxu0 0
        %1637 = vmatpush2.bf16.msra.mxu0 0
        %1638 = vmatprep.subr.bf16.mxu0 0
        %1639 = vmatpush2.bf16.msra.mxu0 0
        %1640 = vmatprep.subr.bf16.mxu0 0
        %1641 = vmatpush2.bf16.msra.mxu0 0
        %1642 = vmatprep.subr.bf16.mxu0 0
        %1643 = vmatpush2.bf16.msra.mxu0 0
        %1644 = vmatprep.subr.bf16.mxu0 0
        %1645 = vmatpush2.bf16.msra.mxu0 0
        %1646 = vmatprep.subr.bf16.mxu0 0
        %1647 = vmatpush2.bf16.msra.mxu0 0
        %1648 = vmatprep.subr.bf16.mxu0 0
        %1649 = vmatpush2.bf16.msra.mxu0 0
        %1650 = vmatprep.subr.bf16.mxu0 0
        %1651 = vmatpush2.bf16.msra.mxu0 0
        %1652 = vmatprep.mubr.bf16.mxu0 0
        %1653 = vmatmul.mubr.bf16.gmra.mxu0 %v1618
        %v1654 = vpop.f32.mrf.mxu0
        %v1655 = vadd.f32 %v1610, %v1654
        %v1656 = vpop.f32.mrf.mxu0
        %v1657 = vpop.f32.mrf.mxu0
        %v1658 = vpop.f32.mrf.mxu0
        %1659 = vdwg.mxu0
        %v1660 = vtanh.pop %v1655
        %v1661 = vld [vmem:[%s27] sm:$0xf]
        %v1662 = vld [vmem:[%s27 + $0x4] sm:$0xf]
        %v1663 = vld [vmem:[%s27 + $0x8] sm:$0xf]
        %v1664 = vld [vmem:[%s27 + $0xc] sm:$0xf]
        %v1665 = vld [vmem:[#allocation17] sm:$0x1]
        %v1667 = vlaneseq
        %v1668 = vshrl.u32 %v1667, 7
        %v1669 = vsub.s32 0, %v1668
        %v1670 = vrot.slane %v1665, %v1669
        %v1676 = vunpack.c.l.b16 %v1661
        %v1677 = vunpack.c.l.b16 %v1662
        %v1678 = vunpack.c.l.b16 %v1663
        %v1679 = vunpack.c.l.b16 %v1664
        %v1680 = vpack.c.b16 %v1677, %v1676
        %v1681 = vpack.c.b16 %v1679, %v1678
        %v1684 = vsel %vm1353, %v1326, 0
        %1686 = vmatprep.subr.bf16.mxu0 0
        %1687 = vmatpush1.bf16.msra.mxu0 0
        %1688 = vmatprep.subr.bf16.mxu0 0
        %1689 = vmatpush1.bf16.msra.mxu0 0
        %1690 = vmatprep.subr.bf16.mxu0 0
        %1691 = vmatpush1.bf16.msra.mxu0 0
        %1692 = vmatprep.subr.bf16.mxu0 0
        %1693 = vmatpush1.bf16.msra.mxu0 0
        %1694 = vmatprep.subr.bf16.mxu0 0
        %1695 = vmatpush1.bf16.msra.mxu0 0
        %1696 = vmatprep.subr.bf16.mxu0 0
        %1697 = vmatpush1.bf16.msra.mxu0 0
        %1698 = vmatprep.subr.bf16.mxu0 0
        %1699 = vmatpush1.bf16.msra.mxu0 %v1681
        %1700 = vmatprep.subr.bf16.mxu0 0
        %1701 = vmatpush1.bf16.msra.mxu0 %v1680
        %1702 = vmatprep.subr.bf16.mxu0 0
        %1703 = vmatpush2.bf16.msra.mxu0 0
        %1704 = vmatprep.subr.bf16.mxu0 0
        %1705 = vmatpush2.bf16.msra.mxu0 0
        %1706 = vmatprep.subr.bf16.mxu0 0
        %1707 = vmatpush2.bf16.msra.mxu0 0
        %1708 = vmatprep.subr.bf16.mxu0 0
        %1709 = vmatpush2.bf16.msra.mxu0 0
        %1710 = vmatprep.subr.bf16.mxu0 0
        %1711 = vmatpush2.bf16.msra.mxu0 0
        %1712 = vmatprep.subr.bf16.mxu0 0
        %1713 = vmatpush2.bf16.msra.mxu0 0
        %1714 = vmatprep.subr.bf16.mxu0 0
        %1715 = vmatpush2.bf16.msra.mxu0 0
        %1716 = vmatprep.subr.bf16.mxu0 0
        %1717 = vmatpush2.bf16.msra.mxu0 0
        %1718 = vmatprep.mubr.bf16.mxu0 0
        %1719 = vmatmul.mubr.bf16.gmra.mxu0 %v1684
        %v1720 = vpop.f32.mrf.mxu0
        %v1721 = vadd.f32 %v1670, %v1720
        %v1722 = vpop.f32.mrf.mxu0
        %v1723 = vpop.f32.mrf.mxu0
        %v1724 = vadd.f32 %v1670, %v1723
        %v1725 = vpop.f32.mrf.mxu0
        %1726 = vdwg.mxu0
        %v1727 = vtanh.pop %v1721
        %v1728 = vtanh.pop %v1724
        %v1729 = vld [vmem:[#allocation19] sm:$0xf]
        %v1730 = vld [vmem:[#allocation19 + $0x4] sm:$0xf]
        %v1731 = vpack.c.bf16 %v1319, %v1318
        %v1732 = vld [vmem:[#allocation20] sm:$0x1]
        %v1734 = vlaneseq
        %v1735 = vshrl.u32 %v1734, 7
        %v1736 = vsub.s32 0, %v1735
        %v1737 = vrot.slane %v1732, %v1736
        %v1741 = vunpack.c.l.b16 %v1729
        %v1742 = vunpack.c.l.b16 %v1730
        %v1743 = vpack.c.b16 %v1742, %v1741
        %v1746 = vsel %vm1424, %v1731, 0
        %1748 = vmatprep.subr.bf16.mxu0 0
        %1749 = vmatpush1.bf16.msra.mxu0 0
        %1750 = vmatprep.subr.bf16.mxu0 0
        %1751 = vmatpush1.bf16.msra.mxu0 0
        %1752 = vmatprep.subr.bf16.mxu0 0
        %1753 = vmatpush1.bf16.msra.mxu0 0
        %1754 = vmatprep.subr.bf16.mxu0 0
        %1755 = vmatpush1.bf16.msra.mxu0 0
        %1756 = vmatprep.subr.bf16.mxu0 0
        %1757 = vmatpush1.bf16.msra.mxu0 0
        %1758 = vmatprep.subr.bf16.mxu0 0
        %1759 = vmatpush1.bf16.msra.mxu0 0
        %1760 = vmatprep.subr.bf16.mxu0 0
        %1761 = vmatpush1.bf16.msra.mxu0 0
        %1762 = vmatprep.subr.bf16.mxu0 0
        %1763 = vmatpush1.bf16.msra.mxu0 %v1743
        %1764 = vmatprep.subr.bf16.mxu0 0
        %1765 = vmatpush2.bf16.msra.mxu0 0
        %1766 = vmatprep.subr.bf16.mxu0 0
        %1767 = vmatpush2.bf16.msra.mxu0 0
        %1768 = vmatprep.subr.bf16.mxu0 0
        %1769 = vmatpush2.bf16.msra.mxu0 0
        %1770 = vmatprep.subr.bf16.mxu0 0
        %1771 = vmatpush2.bf16.msra.mxu0 0
        %1772 = vmatprep.subr.bf16.mxu0 0
        %1773 = vmatpush2.bf16.msra.mxu0 0
        %1774 = vmatprep.subr.bf16.mxu0 0
        %1775 = vmatpush2.bf16.msra.mxu0 0
        %1776 = vmatprep.subr.bf16.mxu0 0
        %1777 = vmatpush2.bf16.msra.mxu0 0
        %1778 = vmatprep.subr.bf16.mxu0 0
        %1779 = vmatpush2.bf16.msra.mxu0 0
        %1780 = vmatprep.mubr.bf16.mxu0 0
        %1781 = vmatmul.mubr.bf16.gmra.mxu0 %v1746
        %v1782 = vpop.f32.mrf.mxu0
        %v1783 = vadd.f32 %v1737, %v1782
        %v1784 = vpop.f32.mrf.mxu0
        %v1785 = vpop.f32.mrf.mxu0
        %v1786 = vadd.f32 %v1737, %v1785
        %v1787 = vpop.f32.mrf.mxu0
        %1788 = vdwg.mxu0
        %v1789 = vtanh.pop %v1783
        %v1790 = vtanh.pop %v1786
        %v1791 = vpack.c.bf16 %v1728, %v1727
        %v1792 = vpack.c.bf16 %v1790, %v1789
        %v1794 = vsel %vm1353, %v1791, 0
        %v1797 = vsel %vm1353, %v1792, 0
        %1799 = vmatprep.subr.bf16.mxu0 0
        %1800 = vmatpush1.bf16.xpose.msra.mxu0 0
        %1801 = vmatprep.subr.bf16.mxu0 0
        %1802 = vmatpush1.bf16.xpose.msra.mxu0 0
        %1803 = vmatprep.subr.bf16.mxu0 0
        %1804 = vmatpush1.bf16.xpose.msra.mxu0 0
        %1805 = vmatprep.subr.bf16.mxu0 0
        %1806 = vmatpush1.bf16.xpose.msra.mxu0 0
        %1807 = vmatprep.subr.bf16.mxu0 0
        %1808 = vmatpush1.bf16.xpose.msra.mxu0 0
        %1809 = vmatprep.subr.bf16.mxu0 0
        %1810 = vmatpush1.bf16.xpose.msra.mxu0 0
        %1811 = vmatprep.subr.bf16.mxu0 0
        %1812 = vmatpush1.bf16.xpose.msra.mxu0 0
        %1813 = vmatprep.subr.bf16.mxu0 0
        %1814 = vmatpush1.bf16.xpose.msra.mxu0 %v1797
        %1815 = vmatprep.subr.bf16.mxu0 0
        %1816 = vmatpush2.bf16.xpose.msra.mxu0 0
        %1817 = vmatprep.subr.bf16.mxu0 0
        %1818 = vmatpush2.bf16.xpose.msra.mxu0 0
        %1819 = vmatprep.subr.bf16.mxu0 0
        %1820 = vmatpush2.bf16.xpose.msra.mxu0 0
        %1821 = vmatprep.subr.bf16.mxu0 0
        %1822 = vmatpush2.bf16.xpose.msra.mxu0 0
        %1823 = vmatprep.subr.bf16.mxu0 0
        %1824 = vmatpush2.bf16.xpose.msra.mxu0 0
        %1825 = vmatprep.subr.bf16.mxu0 0
        %1826 = vmatpush2.bf16.xpose.msra.mxu0 0
        %1827 = vmatprep.subr.bf16.mxu0 0
        %1828 = vmatpush2.bf16.xpose.msra.mxu0 0
        %1829 = vmatprep.subr.bf16.mxu0 0
        %1830 = vmatpush2.bf16.xpose.msra.mxu0 0
        %1831 = vmatprep.mubr.bf16.mxu0 0
        %1832 = vmatmul.mubr.bf16.gmra.mxu0 %v1794
        %v1833 = vpop.f32.mrf.mxu0
        %v1834 = vadd.f32 0.0, %v1833
        %v1835 = vpop.f32.mrf.mxu0
        %v1836 = vpop.f32.mrf.mxu0
        %v1837 = vadd.f32 0.0, %v1836
        %v1838 = vpop.f32.mrf.mxu0
        %1839 = vdwg.mxu0
        %v1840 = vmul.f32 %v1834, 0.17677669
        %v1841 = vmul.f32 %v1837, 0.17677669
        %v1842 = vlaneseq
        %v1843 = vand.u32 %v1842, 127
        %1844 = vset.pattern.permute.xlu0 0
        %1845 = vperm.xlu0 %1844, %v1321
        %v1846 = vpop.permute.xlu0 %1845
        %v1847 = vlaneseq
        %v1848 = vshrl.u32 %v1847, 7
        %v1849 = vsub.s32 0, %v1848
        %v1850 = vrot.slane %v1846, %v1849
        %vm1851 = vcmp.lt.s32.totalorder %v1843, %v1850
        %v1852 = vsel %vm1851, 1, 0
        %vm1853 = vcmp.eq.s32.totalorder %v1852, 1
        %v1854 = vsel %vm1853, %v1840, -1e+30
        %v1855 = vsel %vm1853, %v1841, -1e+30
        %v1856 = vsel %vm1424, %v1854, -inf
        %1857 = vmax.xlane.f32.xlu0 %v1856
        %v1858 = vpop.xlane.xlu0 %1857
        %vm1859 = vcmask 122880
        %v1860 = vsel %vm1859, %v1855, -inf
        %1861 = vmax.xlane.f32.xlu0 %v1860
        %v1862 = vpop.xlane.xlu0 %1861
        %v1863 = vsub.f32 %v1854, %v1858
        %v1864 = vsub.f32 %v1855, %v1862
        %v1865 = vmul.f32 %v1863, 1.442695
        %v1866 = vpow.pop %v1865
        %v1867 = vmul.f32 %v1864, 1.442695
        %v1868 = vpow.pop %v1867
        %v1869 = vsel %vm1424, %v1866, 0.0
        %1870 = vadd.xlane.f32.xlu0 %v1869
        %v1871 = vpop.xlane.xlu0 %1870
        %v1872 = vsel %vm1859, %v1868, 0.0
        %1873 = vadd.xlane.f32.xlu0 %v1872
        %v1874 = vpop.xlane.xlu0 %1873
        %v1875 = vrcp.pop %v1871
        %v1876 = vrcp.pop %v1874
        %v1877 = vmul.f32 %v1866, %v1875
        %v1878 = vmul.f32 %v1868, %v1876
        %1879 = vst.msk [vmem:[%s1314] sm:$0xff] %vm1424, %v1877
        %1880 = vst.msk [vmem:[%s1314 + $0x8] sm:$0x1] %vm1859, %v1878
        %v1881 = vpack.c.bf16 %v1878, %v1877
        %v1883 = vsel %vm1424, %v1881, 0
        %1885 = vmatprep.subr.bf16.mxu0 0
        %1886 = vmatpush1.bf16.msra.mxu0 0
        %1887 = vmatprep.subr.bf16.mxu0 0
        %1888 = vmatpush1.bf16.msra.mxu0 0
        %1889 = vmatprep.subr.bf16.mxu0 0
        %1890 = vmatpush1.bf16.msra.mxu0 0
        %1891 = vmatprep.subr.bf16.mxu0 0
        %1892 = vmatpush1.bf16.msra.mxu0 0
        %1893 = vmatprep.subr.bf16.mxu0 0
        %1894 = vmatpush1.bf16.msra.mxu0 0
        %1895 = vmatprep.subr.bf16.mxu0 0
        %1896 = vmatpush1.bf16.msra.mxu0 0
        %1897 = vmatprep.subr.bf16.mxu0 0
        %1898 = vmatpush1.bf16.msra.mxu0 0
        %1899 = vmatprep.subr.bf16.mxu0 0
        %1900 = vmatpush1.bf16.msra.mxu0 %v1792
        %1901 = vmatprep.subr.bf16.mxu0 0
        %1902 = vmatpush2.bf16.msra.mxu0 0
        %1903 = vmatprep.subr.bf16.mxu0 0
        %1904 = vmatpush2.bf16.msra.mxu0 0
        %1905 = vmatprep.subr.bf16.mxu0 0
        %1906 = vmatpush2.bf16.msra.mxu0 0
        %1907 = vmatprep.subr.bf16.mxu0 0
        %1908 = vmatpush2.bf16.msra.mxu0 0
        %1909 = vmatprep.subr.bf16.mxu0 0
        %1910 = vmatpush2.bf16.msra.mxu0 0
        %1911 = vmatprep.subr.bf16.mxu0 0
        %1912 = vmatpush2.bf16.msra.mxu0 0
        %1913 = vmatprep.subr.bf16.mxu0 0
        %1914 = vmatpush2.bf16.msra.mxu0 0
        %1915 = vmatprep.subr.bf16.mxu0 0
        %1916 = vmatpush2.bf16.msra.mxu0 0
        %1917 = vmatprep.mubr.bf16.mxu0 0
        %1918 = vmatmul.mubr.bf16.gmra.mxu0 %v1883
        %v1919 = vpop.f32.mrf.mxu0
        %v1920 = vadd.f32 0.0, %v1919
        %v1921 = vpop.f32.mrf.mxu0
        %v1922 = vpop.f32.mrf.mxu0
        %v1923 = vadd.f32 0.0, %v1922
        %v1924 = vpop.f32.mrf.mxu0
        %1925 = vdwg.mxu0
        %v1926 = vld [vmem:[%s35] sm:$0xf]
        %v1927 = vld [vmem:[%s35 + $0x4] sm:$0xf]
        %v1928 = vld [vmem:[%s35 + $0x8] sm:$0xf]
        %v1929 = vld [vmem:[%s35 + $0xc] sm:$0xf]
        %v1930 = vld [vmem:[#allocation22] sm:$0xf]
        %v1931 = vld [vmem:[#allocation22 + $0x4] sm:$0xf]
        %v1932 = vld [vmem:[#allocation22 + $0x8] sm:$0xf]
        %v1933 = vld [vmem:[#allocation22 + $0xc] sm:$0xf]
        %v1934 = vpack.c.bf16 %v1923, %v1920
        %v1939 = vunpack.c.l.b16 %v1930
        %v1940 = vunpack.c.l.b16 %v1931
        %v1941 = vunpack.c.l.b16 %v1932
        %v1942 = vunpack.c.l.b16 %v1933
        %v1943 = vpack.c.b16 %v1940, %v1939
        %v1944 = vpack.c.b16 %v1942, %v1941
        %v1948 = vsel %vm1353, %v1934, 0
        %1950 = vmatprep.subr.bf16.mxu0 0
        %1951 = vmatpush1.bf16.msra.mxu0 0
        %1952 = vmatprep.subr.bf16.mxu0 0
        %1953 = vmatpush1.bf16.msra.mxu0 0
        %1954 = vmatprep.subr.bf16.mxu0 0
        %1955 = vmatpush1.bf16.msra.mxu0 0
        %1956 = vmatprep.subr.bf16.mxu0 0
        %1957 = vmatpush1.bf16.msra.mxu0 0
        %1958 = vmatprep.subr.bf16.mxu0 0
        %1959 = vmatpush1.bf16.msra.mxu0 0
        %1960 = vmatprep.subr.bf16.mxu0 0
        %1961 = vmatpush1.bf16.msra.mxu0 0
        %1962 = vmatprep.subr.bf16.mxu0 0
        %1963 = vmatpush1.bf16.msra.mxu0 %v1944
        %1964 = vmatprep.subr.bf16.mxu0 0
        %1965 = vmatpush1.bf16.msra.mxu0 %v1943
        %1966 = vmatprep.subr.bf16.mxu0 0
        %1967 = vmatpush2.bf16.msra.mxu0 0
        %1968 = vmatprep.subr.bf16.mxu0 0
        %1969 = vmatpush2.bf16.msra.mxu0 0
        %1970 = vmatprep.subr.bf16.mxu0 0
        %1971 = vmatpush2.bf16.msra.mxu0 0
        %1972 = vmatprep.subr.bf16.mxu0 0
        %1973 = vmatpush2.bf16.msra.mxu0 0
        %1974 = vmatprep.subr.bf16.mxu0 0
        %1975 = vmatpush2.bf16.msra.mxu0 0
        %1976 = vmatprep.subr.bf16.mxu0 0
        %1977 = vmatpush2.bf16.msra.mxu0 0
        %1978 = vmatprep.subr.bf16.mxu0 0
        %1979 = vmatpush2.bf16.msra.mxu0 0
        %1980 = vmatprep.subr.bf16.mxu0 0
        %1981 = vmatpush2.bf16.msra.mxu0 0
        %1982 = vmatprep.mubr.bf16.mxu0 0
        %1983 = vmatmul.mubr.bf16.gmra.mxu0 %v1948
        %v1984 = vpop.f32.mrf.mxu0
        %v1985 = vadd.f32 0.0, %v1984
        %v1986 = vpop.f32.mrf.mxu0
        %v1987 = vpop.f32.mrf.mxu0
        %v1988 = vadd.f32 0.0, %v1987
        %v1989 = vpop.f32.mrf.mxu0
        %1990 = vdwg.mxu0
        %v1995 = vunpack.c.l.b16 %v1926
        %v1996 = vunpack.c.l.b16 %v1927
        %v1997 = vunpack.c.l.b16 %v1928
        %v1998 = vunpack.c.l.b16 %v1929
        %v1999 = vpack.c.b16 %v1996, %v1995
        %v2000 = vpack.c.b16 %v1998, %v1997
        %2003 = vmatprep.subr.bf16.mxu0 0
        %2004 = vmatpush1.bf16.msra.mxu0 0
        %2005 = vmatprep.subr.bf16.mxu0 0
        %2006 = vmatpush1.bf16.msra.mxu0 0
        %2007 = vmatprep.subr.bf16.mxu0 0
        %2008 = vmatpush1.bf16.msra.mxu0 0
        %2009 = vmatprep.subr.bf16.mxu0 0
        %2010 = vmatpush1.bf16.msra.mxu0 0
        %2011 = vmatprep.subr.bf16.mxu0 0
        %2012 = vmatpush1.bf16.msra.mxu0 0
        %2013 = vmatprep.subr.bf16.mxu0 0
        %2014 = vmatpush1.bf16.msra.mxu0 0
        %2015 = vmatprep.subr.bf16.mxu0 0
        %2016 = vmatpush1.bf16.msra.mxu0 %v2000
        %2017 = vmatprep.subr.bf16.mxu0 0
        %2018 = vmatpush1.bf16.msra.mxu0 %v1999
        %2019 = vmatprep.subr.bf16.mxu0 0
        %2020 = vmatpush2.bf16.msra.mxu0 0
        %2021 = vmatprep.subr.bf16.mxu0 0
        %2022 = vmatpush2.bf16.msra.mxu0 0
        %2023 = vmatprep.subr.bf16.mxu0 0
        %2024 = vmatpush2.bf16.msra.mxu0 0
        %2025 = vmatprep.subr.bf16.mxu0 0
        %2026 = vmatpush2.bf16.msra.mxu0 0
        %2027 = vmatprep.subr.bf16.mxu0 0
        %2028 = vmatpush2.bf16.msra.mxu0 0
        %2029 = vmatprep.subr.bf16.mxu0 0
        %2030 = vmatpush2.bf16.msra.mxu0 0
        %2031 = vmatprep.subr.bf16.mxu0 0
        %2032 = vmatpush2.bf16.msra.mxu0 0
        %2033 = vmatprep.subr.bf16.mxu0 0
        %2034 = vmatpush2.bf16.msra.mxu0 0
        %2035 = vmatprep.mubr.bf16.mxu0 0
        %2036 = vmatmul.mubr.bf16.gmra.mxu0 %v1794
        %v2037 = vpop.f32.mrf.mxu0
        %v2038 = vadd.f32 %v1985, %v2037
        %v2039 = vpop.f32.mrf.mxu0
        %v2040 = vpop.f32.mrf.mxu0
        %v2041 = vadd.f32 %v1988, %v2040
        %v2042 = vpop.f32.mrf.mxu0
        %2043 = vdwg.mxu0
        %v2044 = vld [vmem:[#allocation23] sm:$0x1]
        %v2046 = vlaneseq
        %v2047 = vshrl.u32 %v2046, 7
        %v2048 = vsub.s32 0, %v2047
        %v2049 = vrot.slane %v2044, %v2048
        %v2051 = vadd.f32 %v2038, %v2049
        %v2052 = vadd.f32 %v2041, %v2049
        %v2053 = vtanh.pop %v2051
        %v2054 = vtanh.pop %v2052
        %2055 = vst.msk [vmem:[%s1304] sm:$0xff] %vm1353, %v2053
        %vm2056 = vcmask 253952
        %2057 = vst.msk [vmem:[%s1304 + $0x8] sm:$0x1] %vm2056, %v2054
        %v2058 = vld [vmem:[#allocation25] sm:$0xf]
        %v2059 = vld [vmem:[#allocation25 + $0x4] sm:$0xf]
        %v2060 = vld [vmem:[#allocation25 + $0x8] sm:$0xf]
        %v2061 = vld [vmem:[#allocation25 + $0xc] sm:$0xf]
        %v2062 = vpack.c.bf16 %v2054, %v2053
        %v2063 = vld [vmem:[#allocation26] sm:$0x1]
        %v2065 = vlaneseq
        %v2066 = vshrl.u32 %v2065, 7
        %v2067 = vsub.s32 0, %v2066
        %v2068 = vrot.slane %v2063, %v2067
        %v2074 = vunpack.c.l.b16 %v2058
        %v2075 = vunpack.c.l.b16 %v2059
        %v2076 = vunpack.c.l.b16 %v2060
        %v2077 = vunpack.c.l.b16 %v2061
        %v2078 = vpack.c.b16 %v2075, %v2074
        %v2079 = vpack.c.b16 %v2077, %v2076
        %v2083 = vsel %vm1353, %v2062, 0
        %2085 = vmatprep.subr.bf16.mxu0 0
        %2086 = vmatpush1.bf16.msra.mxu0 0
        %2087 = vmatprep.subr.bf16.mxu0 0
        %2088 = vmatpush1.bf16.msra.mxu0 0
        %2089 = vmatprep.subr.bf16.mxu0 0
        %2090 = vmatpush1.bf16.msra.mxu0 0
        %2091 = vmatprep.subr.bf16.mxu0 0
        %2092 = vmatpush1.bf16.msra.mxu0 0
        %2093 = vmatprep.subr.bf16.mxu0 0
        %2094 = vmatpush1.bf16.msra.mxu0 0
        %2095 = vmatprep.subr.bf16.mxu0 0
        %2096 = vmatpush1.bf16.msra.mxu0 0
        %2097 = vmatprep.subr.bf16.mxu0 0
        %2098 = vmatpush1.bf16.msra.mxu0 %v2079
        %2099 = vmatprep.subr.bf16.mxu0 0
        %2100 = vmatpush1.bf16.msra.mxu0 %v2078
        %2101 = vmatprep.subr.bf16.mxu0 0
        %2102 = vmatpush2.bf16.msra.mxu0 0
        %2103 = vmatprep.subr.bf16.mxu0 0
        %2104 = vmatpush2.bf16.msra.mxu0 0
        %2105 = vmatprep.subr.bf16.mxu0 0
        %2106 = vmatpush2.bf16.msra.mxu0 0
        %2107 = vmatprep.subr.bf16.mxu0 0
        %2108 = vmatpush2.bf16.msra.mxu0 0
        %2109 = vmatprep.subr.bf16.mxu0 0
        %2110 = vmatpush2.bf16.msra.mxu0 0
        %2111 = vmatprep.subr.bf16.mxu0 0
        %2112 = vmatpush2.bf16.msra.mxu0 0
        %2113 = vmatprep.subr.bf16.mxu0 0
        %2114 = vmatpush2.bf16.msra.mxu0 0
        %2115 = vmatprep.subr.bf16.mxu0 0
        %2116 = vmatpush2.bf16.msra.mxu0 0
        %2117 = vmatprep.mubr.bf16.mxu0 0
        %2118 = vmatmul.mubr.bf16.gmra.mxu0 %v2083
        %v2119 = vpop.f32.mrf.mxu0
        %v2120 = vadd.f32 %v2068, %v2119
        %v2121 = vpop.f32.mrf.mxu0
        %v2122 = vpop.f32.mrf.mxu0
        %v2123 = vadd.f32 %v2068, %v2122
        %v2124 = vpop.f32.mrf.mxu0
        %2125 = vdwg.mxu0
        %2126 = vst [vmem:[%s1309] sm:$0xff] %v2120
        %2127 = vst [vmem:[%s1309 + $0x8] sm:$0x1] %v2123
        %v2128 = vld [vmem:[#allocation28] sm:$0xf]
        %v2129 = vld [vmem:[#allocation28 + $0x4] sm:$0xf]
        %v2130 = vld [vmem:[#allocation28 + $0x8] sm:$0xf]
        %v2131 = vld [vmem:[#allocation28 + $0xc] sm:$0xf]
        %v2132 = vpack.c.bf16 %v1397, %v1397
        %v2133 = vld [vmem:[#allocation29] sm:$0x1]
        %v2135 = vlaneseq
        %v2136 = vshrl.u32 %v2135, 7
        %v2137 = vsub.s32 0, %v2136
        %v2138 = vrot.slane %v2133, %v2137
        %v2144 = vunpack.c.l.b16 %v2128
        %v2145 = vunpack.c.l.b16 %v2129
        %v2146 = vunpack.c.l.b16 %v2130
        %v2147 = vunpack.c.l.b16 %v2131
        %v2148 = vpack.c.b16 %v2145, %v2144
        %v2149 = vpack.c.b16 %v2147, %v2146
        %v2153 = vsel %vm1353, %v2132, 0
        %2155 = vmatprep.subr.bf16.mxu0 0
        %2156 = vmatpush1.bf16.msra.mxu0 0
        %2157 = vmatprep.subr.bf16.mxu0 0
        %2158 = vmatpush1.bf16.msra.mxu0 0
        %2159 = vmatprep.subr.bf16.mxu0 0
        %2160 = vmatpush1.bf16.msra.mxu0 0
        %2161 = vmatprep.subr.bf16.mxu0 0
        %2162 = vmatpush1.bf16.msra.mxu0 0
        %2163 = vmatprep.subr.bf16.mxu0 0
        %2164 = vmatpush1.bf16.msra.mxu0 0
        %2165 = vmatprep.subr.bf16.mxu0 0
        %2166 = vmatpush1.bf16.msra.mxu0 0
        %2167 = vmatprep.subr.bf16.mxu0 0
        %2168 = vmatpush1.bf16.msra.mxu0 %v2149
        %2169 = vmatprep.subr.bf16.mxu0 0
        %2170 = vmatpush1.bf16.msra.mxu0 %v2148
        %2171 = vmatprep.subr.bf16.mxu0 0
        %2172 = vmatpush2.bf16.msra.mxu0 0
        %2173 = vmatprep.subr.bf16.mxu0 0
        %2174 = vmatpush2.bf16.msra.mxu0 0
        %2175 = vmatprep.subr.bf16.mxu0 0
        %2176 = vmatpush2.bf16.msra.mxu0 0
        %2177 = vmatprep.subr.bf16.mxu0 0
        %2178 = vmatpush2.bf16.msra.mxu0 0
        %2179 = vmatprep.subr.bf16.mxu0 0
        %2180 = vmatpush2.bf16.msra.mxu0 0
        %2181 = vmatprep.subr.bf16.mxu0 0
        %2182 = vmatpush2.bf16.msra.mxu0 0
        %2183 = vmatprep.subr.bf16.mxu0 0
        %2184 = vmatpush2.bf16.msra.mxu0 0
        %2185 = vmatprep.subr.bf16.mxu0 0
        %2186 = vmatpush2.bf16.msra.mxu0 0
        %2187 = vmatprep.mubr.bf16.mxu0 0
        %2188 = vmatmul.mubr.bf16.gmra.mxu0 %v2153
        %v2189 = vpop.f32.mrf.mxu0
        %v2190 = vadd.f32 %v2138, %v2189
        %v2191 = vpop.f32.mrf.mxu0
        %v2192 = vpop.f32.mrf.mxu0
        %v2193 = vpop.f32.mrf.mxu0
        %2194 = vdwg.mxu0
        %v2195 = vtanh.pop %v2190
        %v2196 = vld [vmem:[%s49] sm:$0xf]
        %v2197 = vld [vmem:[%s49 + $0x4] sm:$0xf]
        %v2198 = vld [vmem:[%s49 + $0x8] sm:$0xf]
        %v2199 = vld [vmem:[%s49 + $0xc] sm:$0xf]
        %v2200 = vpack.c.bf16 %v2195, %v2195
        %v2201 = vld [vmem:[#allocation31] sm:$0xf]
        %v2202 = vld [vmem:[#allocation31 + $0x4] sm:$0xf]
        %v2203 = vpack.c.bf16 %v1660, %v1660
        %v2206 = vunpack.c.l.b16 %v2201
        %v2207 = vunpack.c.l.b16 %v2202
        %v2208 = vpack.c.b16 %v2207, %v2206
        %v2211 = vsel %vm1424, %v2203, 0
        %2213 = vmatprep.subr.bf16.mxu0 0
        %2214 = vmatpush1.bf16.msra.mxu0 0
        %2215 = vmatprep.subr.bf16.mxu0 0
        %2216 = vmatpush1.bf16.msra.mxu0 0
        %2217 = vmatprep.subr.bf16.mxu0 0
        %2218 = vmatpush1.bf16.msra.mxu0 0
        %2219 = vmatprep.subr.bf16.mxu0 0
        %2220 = vmatpush1.bf16.msra.mxu0 0
        %2221 = vmatprep.subr.bf16.mxu0 0
        %2222 = vmatpush1.bf16.msra.mxu0 0
        %2223 = vmatprep.subr.bf16.mxu0 0
        %2224 = vmatpush1.bf16.msra.mxu0 0
        %2225 = vmatprep.subr.bf16.mxu0 0
        %2226 = vmatpush1.bf16.msra.mxu0 0
        %2227 = vmatprep.subr.bf16.mxu0 0
        %2228 = vmatpush1.bf16.msra.mxu0 %v2208
        %2229 = vmatprep.subr.bf16.mxu0 0
        %2230 = vmatpush2.bf16.msra.mxu0 0
        %2231 = vmatprep.subr.bf16.mxu0 0
        %2232 = vmatpush2.bf16.msra.mxu0 0
        %2233 = vmatprep.subr.bf16.mxu0 0
        %2234 = vmatpush2.bf16.msra.mxu0 0
        %2235 = vmatprep.subr.bf16.mxu0 0
        %2236 = vmatpush2.bf16.msra.mxu0 0
        %2237 = vmatprep.subr.bf16.mxu0 0
        %2238 = vmatpush2.bf16.msra.mxu0 0
        %2239 = vmatprep.subr.bf16.mxu0 0
        %2240 = vmatpush2.bf16.msra.mxu0 0
        %2241 = vmatprep.subr.bf16.mxu0 0
        %2242 = vmatpush2.bf16.msra.mxu0 0
        %2243 = vmatprep.subr.bf16.mxu0 0
        %2244 = vmatpush2.bf16.msra.mxu0 0
        %2245 = vmatprep.mubr.bf16.mxu0 0
        %2246 = vmatmul.mubr.bf16.gmra.mxu0 %v2211
        %v2247 = vpop.f32.mrf.mxu0
        %v2248 = vadd.f32 0.0, %v2247
        %v2249 = vpop.f32.mrf.mxu0
        %v2250 = vpop.f32.mrf.mxu0
        %v2251 = vpop.f32.mrf.mxu0
        %2252 = vdwg.mxu0
        %v2253 = vlaneseq
        %v2254 = vshrl.u32 %v2253, 7
        %v2255 = vsub.s32 0, %v2254
        %v2256 = vrot.slane %v2248, %v2255
        %v2261 = vunpack.c.l.b16 %v2196
        %v2262 = vunpack.c.l.b16 %v2197
        %v2263 = vunpack.c.l.b16 %v2198
        %v2264 = vunpack.c.l.b16 %v2199
        %v2265 = vpack.c.b16 %v2262, %v2261
        %v2266 = vpack.c.b16 %v2264, %v2263
        %v2270 = vsel %vm1353, %v2200, 0
        %2272 = vmatprep.subr.bf16.mxu0 0
        %2273 = vmatpush1.bf16.msra.mxu0 0
        %2274 = vmatprep.subr.bf16.mxu0 0
        %2275 = vmatpush1.bf16.msra.mxu0 0
        %2276 = vmatprep.subr.bf16.mxu0 0
        %2277 = vmatpush1.bf16.msra.mxu0 0
        %2278 = vmatprep.subr.bf16.mxu0 0
        %2279 = vmatpush1.bf16.msra.mxu0 0
        %2280 = vmatprep.subr.bf16.mxu0 0
        %2281 = vmatpush1.bf16.msra.mxu0 0
        %2282 = vmatprep.subr.bf16.mxu0 0
        %2283 = vmatpush1.bf16.msra.mxu0 0
        %2284 = vmatprep.subr.bf16.mxu0 0
        %2285 = vmatpush1.bf16.msra.mxu0 %v2266
        %2286 = vmatprep.subr.bf16.mxu0 0
        %2287 = vmatpush1.bf16.msra.mxu0 %v2265
        %2288 = vmatprep.subr.bf16.mxu0 0
        %2289 = vmatpush2.bf16.msra.mxu0 0
        %2290 = vmatprep.subr.bf16.mxu0 0
        %2291 = vmatpush2.bf16.msra.mxu0 0
        %2292 = vmatprep.subr.bf16.mxu0 0
        %2293 = vmatpush2.bf16.msra.mxu0 0
        %2294 = vmatprep.subr.bf16.mxu0 0
        %2295 = vmatpush2.bf16.msra.mxu0 0
        %2296 = vmatprep.subr.bf16.mxu0 0
        %2297 = vmatpush2.bf16.msra.mxu0 0
        %2298 = vmatprep.subr.bf16.mxu0 0
        %2299 = vmatpush2.bf16.msra.mxu0 0
        %2300 = vmatprep.subr.bf16.mxu0 0
        %2301 = vmatpush2.bf16.msra.mxu0 0
        %2302 = vmatprep.subr.bf16.mxu0 0
        %2303 = vmatpush2.bf16.msra.mxu0 0
        %2304 = vmatprep.mubr.bf16.mxu0 0
        %2305 = vmatmul.mubr.bf16.gmra.mxu0 %v2270
        %v2306 = vpop.f32.mrf.mxu0
        %v2307 = vadd.f32 %v2256, %v2306
        %v2308 = vpop.f32.mrf.mxu0
        %v2309 = vpop.f32.mrf.mxu0
        %v2310 = vpop.f32.mrf.mxu0
        %2311 = vdwg.mxu0
        %v2312 = vld [vmem:[%s53] sm:$0x1]
        %v2314 = vlaneseq
        %v2315 = vshrl.u32 %v2314, 7
        %v2316 = vsub.s32 0, %v2315
        %v2317 = vrot.slane %v2312, %v2316
        %v2319 = vadd.f32 %v2307, %v2317
        %v2320 = vtanh.pop %v2319
        %2321 = vst.msk [vmem:[%s1286] sm:$0xff] %vm1353, %v2320
        %s2322 = sand.u32 %s688, 1
        %s2323 = scalar_lea.sflag [#allocation4], %s2322
        %s2324 = sand.u32 %s688, 1
        %s2325 = smul.addr %s2324, 8
        %s2326 = scalar_lea.vmem [#allocation32], %s2325
        %p2327 = scmp.lt.s32.totalorder %s93, 1
        %s2328 = scalar_select %p2327, %s93, 1
        %s2329 = smul.addr %s2328, 2
        %s2330 = smul.addr %s2329, 8
        %s2331 = scalar_lea.vmem %s57, %s2330
        %p2332 = scmp.lt.s32.totalorder %s93, 1
        %s2333 = scalar_select %p2332, %s93, 1
        %s2334 = smul.addr %s2333, 2
        %s2335 = smul.addr %s2334, 8
        %s2336 = scalar_lea.vmem %s59, %s2335
        %p2337 = scmp.lt.s32.totalorder %s93, 1
        %s2338 = scalar_select %p2337, %s93, 1
        %s2339 = smul.addr %s2338, 2
        %s2340 = smul.addr %s2339, 8
        %s2341 = scalar_lea.vmem %s61, %s2340
        %s2342 = sand.u32 %s792, 1
        %s2343 = scalar_lea.sflag [#allocation34], %s2342
        %s2344 = sand.u32 %s792, 1
        %s2345 = smul.addr %s2344, 8
        %s2346 = scalar_lea.vmem [#allocation33], %s2345
        // Predicated region
        $region205: #{tpu_custom_call.1} parent=127 // pred_check
          %p2347 = pneg %p698
        $region206: #{tpu_custom_call.1} parent=127 // pred_check_branch
          %2349 = sbr.rel (%p2347) target = $region208
        $region207: #{tpu_custom_call.1} parent=127 // pred_region
          %s2351 = ssub.s32 128, 128
          %2352 = vsyncadd %s2323, %s2351
          %s2353 = smul.addr %s93, 128
          %s2354 = scalar_lea.hbm %s55, %s2353
          %s2356 = sshll.u32 %s2326, 4
          %s2357 = int_to_ptr.vmem [resolvable:$true] %s2356
          %2359 = dma.vmem_to_hbm [thread:$0]  %s2357, 128, %s2354, %s2323
        $region208: #{tpu_custom_call.1} parent=127 // pred_fallthru
          _
        // Predicated region
        $region209: #{tpu_custom_call.1} parent=127 // pred_check
          %p2360 = pneg %p724
        $region210: #{tpu_custom_call.1} parent=127 // pred_check_branch
          %2362 = sbr.rel (%p2360) target = $region212
        $region211: #{tpu_custom_call.1} parent=127 // pred_region
          _
        $region212: #{tpu_custom_call.1} parent=127 // pred_fallthru
          _
        // Predicated region
        $region213: #{tpu_custom_call.1} parent=127 // pred_check
          %p2363 = pneg %p750
        $region214: #{tpu_custom_call.1} parent=127 // pred_check_branch
          %2365 = sbr.rel (%p2363) target = $region216
        $region215: #{tpu_custom_call.1} parent=127 // pred_region
          _
        $region216: #{tpu_custom_call.1} parent=127 // pred_fallthru
          _
        // Predicated region
        $region217: #{tpu_custom_call.1} parent=127 // pred_check
          %p2366 = pneg %p776
        $region218: #{tpu_custom_call.1} parent=127 // pred_check_branch
          %2368 = sbr.rel (%p2366) target = $region220
        $region219: #{tpu_custom_call.1} parent=127 // pred_region
          _
        $region220: #{tpu_custom_call.1} parent=127 // pred_fallthru
          _
        // Predicated region
        $region221: #{tpu_custom_call.1} parent=127 // pred_check
          %p2369 = pneg %p802
        $region222: #{tpu_custom_call.1} parent=127 // pred_check_branch
          %2371 = sbr.rel (%p2369) target = $region224
        $region223: #{tpu_custom_call.1} parent=127 // pred_region
          %s2373 = ssub.s32 128, 128
          %2374 = vsyncadd %s2343, %s2373
          %s2375 = smul.addr %s93, 128
          %s2376 = scalar_lea.hbm %s63, %s2375
          %s2378 = sshll.u32 %s2346, 4
          %s2379 = int_to_ptr.vmem [resolvable:$true] %s2378
          %2381 = dma.vmem_to_hbm [thread:$0]  %s2379, 128, %s2376, %s2343
        $region224: #{tpu_custom_call.1} parent=127 // pred_fallthru
          _
      $region128: #{tpu_custom_call.1} parent=5 // pred_fallthru
        _
      %p2382 = scmp.le.s32.totalorder 2, %s88
      // Predicated region
      $region225: #{tpu_custom_call.1} parent=5 // pred_check
        %p2383 = pneg %p2382
      $region226: #{tpu_custom_call.1} parent=5 // pred_check_branch
        %2385 = sbr.rel (%p2383) target = $region228
      $region227: #{tpu_custom_call.1} parent=5 // pred_region
        %s2386 = ssub.s32 %s88, 2
        // Predicated region
        $region229: #{tpu_custom_call.1} parent=227 // pred_check
          %p2387 = pneg %p704
        $region230: #{tpu_custom_call.1} parent=227 // pred_check_branch
          %2389 = sbr.rel (%p2387) target = $region232
        $region231: #{tpu_custom_call.1} parent=227 // pred_region
          %s2390 = sand.u32 %s689, 1
          %s2391 = scalar_lea.sflag [#allocation4], %s2390
          %s2392 = sand.u32 %s689, 1
          %s2393 = smul.addr %s2392, 8
          %s2394 = scalar_lea.vmem [#allocation32], %s2393
          %2395 = dma.done %s2391, 128
        $region232: #{tpu_custom_call.1} parent=227 // pred_fallthru
          _
        // Predicated region
        $region233: #{tpu_custom_call.1} parent=227 // pred_check
          %p2396 = pneg %p730
        $region234: #{tpu_custom_call.1} parent=227 // pred_check_branch
          %2398 = sbr.rel (%p2396) target = $region236
        $region235: #{tpu_custom_call.1} parent=227 // pred_region
          %p2399 = scmp.lt.s32.totalorder %s94, 1
          %s2400 = scalar_select %p2399, %s94, 1
          %s2401 = smul.addr %s2400, 2
          %s2402 = smul.addr %s2401, 8
          %s2403 = scalar_lea.vmem %s57, %s2402
        $region236: #{tpu_custom_call.1} parent=227 // pred_fallthru
          _
        // Predicated region
        $region237: #{tpu_custom_call.1} parent=227 // pred_check
          %p2404 = pneg %p756
        $region238: #{tpu_custom_call.1} parent=227 // pred_check_branch
          %2406 = sbr.rel (%p2404) target = $region240
        $region239: #{tpu_custom_call.1} parent=227 // pred_region
          %p2407 = scmp.lt.s32.totalorder %s94, 1
          %s2408 = scalar_select %p2407, %s94, 1
          %s2409 = smul.addr %s2408, 2
          %s2410 = smul.addr %s2409, 8
          %s2411 = scalar_lea.vmem %s59, %s2410
        $region240: #{tpu_custom_call.1} parent=227 // pred_fallthru
          _
        // Predicated region
        $region241: #{tpu_custom_call.1} parent=227 // pred_check
          %p2412 = pneg %p782
        $region242: #{tpu_custom_call.1} parent=227 // pred_check_branch
          %2414 = sbr.rel (%p2412) target = $region244
        $region243: #{tpu_custom_call.1} parent=227 // pred_region
          %p2415 = scmp.lt.s32.totalorder %s94, 1
          %s2416 = scalar_select %p2415, %s94, 1
          %s2417 = smul.addr %s2416, 2
          %s2418 = smul.addr %s2417, 8
          %s2419 = scalar_lea.vmem %s61, %s2418
        $region244: #{tpu_custom_call.1} parent=227 // pred_fallthru
          _
        // Predicated region
        $region245: #{tpu_custom_call.1} parent=227 // pred_check
          %p2420 = pneg %p808
        $region246: #{tpu_custom_call.1} parent=227 // pred_check_branch
          %2422 = sbr.rel (%p2420) target = $region248
        $region247: #{tpu_custom_call.1} parent=227 // pred_region
          %s2423 = sand.u32 %s793, 1
          %s2424 = scalar_lea.sflag [#allocation34], %s2423
          %s2425 = sand.u32 %s793, 1
          %s2426 = smul.addr %s2425, 8
          %s2427 = scalar_lea.vmem [#allocation33], %s2426
          %2428 = dma.done %s2424, 128
        $region248: #{tpu_custom_call.1} parent=227 // pred_fallthru
          _
      $region228: #{tpu_custom_call.1} parent=5 // pred_fallthru
        _
    $region6: #{tpu_custom_call.1} parent=1 // loop_footer
      %s92 = sadd.s32 1, %s88
    $region7: #{tpu_custom_call.1} parent=1 // loop_footer_branch
      %87 = sbr.rel target = $region3
    $region8: #{tpu_custom_call.1} parent=1 // loop_exit
      _
    %2429 = vsyncpa [#allocation3], 1
    %s2430 = scalar_lea.sflag [#allocation3], 1
    %2431 = vsyncpa %s2430, 1
    %2432 = vsyncpa [#allocation6], 1
    %2433 = vsyncpa [#allocation9], 1
    %2434 = vsyncpa [#allocation12], 1
    %2435 = vsyncpa [#allocation15], 1
    %2436 = vsyncpa [#allocation18], 1
    %2437 = vsyncpa [#allocation21], 1
    %2438 = vsyncpa [#allocation24], 1
    %2439 = vsyncpa [#allocation27], 1
    %2440 = vsyncpa [#allocation30], 1
    %2441 = vsyncpa [#allocation4], 1
    %s2442 = scalar_lea.sflag [#allocation4], 1
    %2443 = vsyncpa %s2442, 1
    %2444 = vsyncpa [#allocation34], 1
    %s2445 = scalar_lea.sflag [#allocation34], 1
    %2446 = vsyncpa %s2445, 1

</llo_original>
